<compile_context>
chip_gen: v5e
topology: v5e:2x2
jax: 0.10.0
libtpu: 0.0.40
codegen_flags: <defaults>
</compile_context>

<pallas_src>
import functools

import jax
import jax.numpy as jnp
from jax import lax
from jax.experimental import pallas as pl
from jax.experimental.pallas import tpu as pltpu


def _round_up(x, m):
    return ((x + m - 1) // m) * m


# ----------------------------------------------------------------------------- kernel
def _mha_kernel(q_ref, k_ref, v_ref,
                wq_ref, bq_ref, wk_ref, bk_ref, wv_ref, bv_ref,
                wo_ref, bo_ref,
                *refs,
                n_heads, compute_dtype, return_attn, unroll_heads):
    """One (batch, q_tile) grid point: all heads, KV projections cached across q tiles."""
    if return_attn:
        out_ref, attn_ref, k_cache, v_cache, out_acc = refs
    else:
        out_ref, k_cache, v_cache, out_acc = refs
        attn_ref = None

    qi = pl.program_id(1)

    # ---- K/V projections: once per batch (qi == 0), cached in VMEM scratch. ----
    @pl.when(qi == 0)
    def _project_kv():
        K = k_ref[0].astype(compute_dtype)                       # (seq_k, d_model)
        V = v_ref[0].astype(compute_dtype)                       # (seq_k, d_model)

        def fill(h, carry):
            k_h = jnp.dot(K, wk_ref[h], preferred_element_type=jnp.float32) + bk_ref[h]
            v_h = jnp.dot(V, wv_ref[h], preferred_element_type=jnp.float32) + bv_ref[h]
            k_cache[h] = k_h.astype(compute_dtype)                # (seq_k, d_kp)
            v_cache[h] = v_h.astype(compute_dtype)                # (seq_k, d_vp)
            return carry

        lax.fori_loop(0, n_heads, fill, 0, unroll=unroll_heads)

    # ---- Attention for this q tile, all heads. ----
    Q = q_ref[0].astype(compute_dtype)                            # (tq, d_model)
    out_acc[...] = jnp.zeros_like(out_acc)                        # (tq, d_model) f32

    def head(h, carry):
        # Softmax scale is pre-folded into wq / bq in the wrapper.
        q_h = (jnp.dot(Q, wq_ref[h], preferred_element_type=jnp.float32)
               + bq_ref[h]).astype(compute_dtype)                 # (tq, d_kp)

        # NT matmul: contract last dims directly -> no XLU transpose of K.
        scores = lax.dot_general(
            q_h, k_cache[h],
            dimension_numbers=(((1,), (1,)), ((), ())),
            preferred_element_type=jnp.float32)                   # (tq, seq_k) f32

        m = jnp.max(scores, axis=-1, keepdims=True)
        p = jnp.exp(scores - m)
        denom = jnp.sum(p, axis=-1, keepdims=True)
        if return_attn:
            # Exact reciprocal so returned attention weights sum to 1 (matches softmax).
            inv = pl.reciprocal(denom, approx=False)
        else:
            inv = pl.reciprocal(denom, approx=True)               # EUP slot, ~free
        attn = p * inv                                            # (tq, seq_k) f32

        if return_attn:
            attn_ref[0, h] = attn.astype(attn_ref.dtype)

        out_h = jnp.dot(attn.astype(compute_dtype), v_cache[h],
                        preferred_element_type=jnp.float32)       # (tq, d_vp)
        # Per-head output projection accumulated in f32 (replaces concat + big matmul;
        # same MXU pass count since d_vp is 128-aligned).
        out_acc[...] += jnp.dot(out_h.astype(compute_dtype), wo_ref[h],
                                preferred_element_type=jnp.float32)
        return carry

    lax.fori_loop(0, n_heads, head, 0, unroll=unroll_heads)

    out_ref[0] = (out_acc[...] + bo_ref[...]).astype(out_ref.dtype)


# ----------------------------------------------------------------------------- wrapper
def _vmem_capacity_bytes():
    try:
        return int(pltpu.get_tpu_info().vmem_capacity_bytes)
    except Exception:
        return 64 * 1024 * 1024                                   # conservative (v7x)


def _vmem_estimate(q_block, *, seq_k, d_model, n_heads, d_kp, d_vp,
                   cdt_bytes, attn_bytes, return_attn):
    f32 = 4
    qin = 2 * q_block * d_model * f32                             # Q tile (double buf)
    kvin = 2 * 2 * seq_k * d_model * f32                          # K, V (double buf)
    wts = n_heads * d_model * (2 * d_kp + 2 * d_vp) * cdt_bytes   # single-buffered weights
    cache = n_heads * seq_k * (d_kp + d_vp) * cdt_bytes           # projected K/V caches
    outb = 2 * q_block * d_model * f32                            # output tile
    attn = (2 * n_heads * q_block * seq_k * attn_bytes) if return_attn else 0
    work = 4 * q_block * max(seq_k, d_model) * f32                # scores/p temporaries
    return qin + kvin + wts + cache + outb + attn + work + (2 << 20)


def _pick_q_block(seq_q, est_fn, budget):
    cands = [c for c in (1024, 512, 256, 128, 64) if seq_q % c == 0]
    if not cands:
        return seq_q
    for c in cands:                                               # biggest first
        if est_fn(c) <= budget:
            return c
    return cands[-1]


def multihead_attention(Q, K, V, params, n_heads, d_k, d_v, *,
                        compute_dtype=jnp.float32, attn_dtype=jnp.float32,
                        return_attn=True, q_block=None):
    bs, seq_q, d_model = Q.shape
    seq_k = K.shape[1]
    scale = float((d_model // n_heads) ** -0.5)   # matches _ScaledDotProductAttention

    d_kp = _round_up(d_k, 128)
    d_vp = _round_up(d_v, 128)

    # ---- Weight prep (host side, once): head-major, zero-padded, scale folded in. ----
    def pad_proj(w, b, d, d_pad):
        w = w.reshape(d_model, n_heads, d).transpose(1, 0, 2)     # (H, d_model, d)
        b = b.reshape(n_heads, 1, d)
        if d_pad != d:
            w = jnp.pad(w, ((0, 0), (0, 0), (0, d_pad - d)))
            b = jnp.pad(b, ((0, 0), (0, 0), (0, d_pad - d)))
        return w, b

    wq, bq = pad_proj(params["W_Q"], params["b_Q"], d_k, d_kp)
    wk, bk = pad_proj(params["W_K"], params["b_K"], d_k, d_kp)
    wv, bv = pad_proj(params["W_V"], params["b_V"], d_v, d_vp)
    wq = wq * scale                                               # fold softmax scale
    bq = bq * scale
    wo = params["W_O"].reshape(n_heads, d_v, d_model)
    if d_vp != d_v:
        wo = jnp.pad(wo, ((0, 0), (0, d_vp - d_v), (0, 0)))
    bo = params["b_O"].reshape(1, d_model)

    # MXU operands pre-cast once (halves weight DMA bytes when bf16); biases stay f32.
    wq = wq.astype(compute_dtype)
    wk = wk.astype(compute_dtype)
    wv = wv.astype(compute_dtype)
    wo = wo.astype(compute_dtype)
    bq, bk, bv, bo = (x.astype(jnp.float32) for x in (bq, bk, bv, bo))

    # ---- VMEM budgeting: q_block sized from actual chip capacity. ----
    cdt_bytes = jnp.dtype(compute_dtype).itemsize
    attn_bytes = jnp.dtype(attn_dtype).itemsize
    cap = _vmem_capacity_bytes()
    vmem_limit = max(32 << 20, min(cap - (8 << 20), 104 << 20))   # v7x ~56 MiB, v6e ~104 MiB

    est = functools.partial(_vmem_estimate, seq_k=seq_k, d_model=d_model,
                            n_heads=n_heads, d_kp=d_kp, d_vp=d_vp,
                            cdt_bytes=cdt_bytes, attn_bytes=attn_bytes,
                            return_attn=return_attn)
    if q_block is None:
        q_block = _pick_q_block(seq_q, est, int(0.8 * vmem_limit))
    assert seq_q % q_block == 0
    q_tiles = seq_q // q_block

    grid = (bs, q_tiles)
    unroll_heads = n_heads <= 4

    kernel = functools.partial(_mha_kernel, n_heads=n_heads,
                               compute_dtype=compute_dtype,
                               return_attn=return_attn, unroll_heads=unroll_heads)

    def _const_spec(shape, pipeline_mode):
        idx = lambda b, qi, _n=len(shape): (0,) * _n
        if pipeline_mode is None:
            return pl.BlockSpec(shape, idx)
        return pl.BlockSpec(shape, idx, pipeline_mode=pipeline_mode)

    def _run(weight_mode):
        in_specs = [
            pl.BlockSpec((1, q_block, d_model), lambda b, qi: (b, qi, 0)),   # Q tile
            pl.BlockSpec((1, seq_k, d_model), lambda b, qi: (b, 0, 0)),      # K (full keys)
            pl.BlockSpec((1, seq_k, d_model), lambda b, qi: (b, 0, 0)),      # V (full keys)
            _const_spec((n_heads, d_model, d_kp), weight_mode),              # W_Q (scaled)
            _const_spec((n_heads, 1, d_kp), weight_mode),                    # b_Q (scaled)
            _const_spec((n_heads, d_model, d_kp), weight_mode),              # W_K
            _const_spec((n_heads, 1, d_kp), weight_mode),                    # b_K
            _const_spec((n_heads, d_model, d_vp), weight_mode),              # W_V
            _const_spec((n_heads, 1, d_vp), weight_mode),                    # b_V
            _const_spec((n_heads, d_vp, d_model), weight_mode),              # W_O
            _const_spec((1, d_model), weight_mode),                          # b_O
        ]
        out_spec = pl.BlockSpec((1, q_block, d_model), lambda b, qi: (b, qi, 0))
        out_sds = jax.ShapeDtypeStruct((bs, seq_q, d_model), Q.dtype)
        if return_attn:
            out_specs = [out_spec,
                         pl.BlockSpec((1, n_heads, q_block, seq_k),
                                      lambda b, qi: (b, 0, qi, 0))]
            out_shape = [out_sds,
                         jax.ShapeDtypeStruct((bs, n_heads, seq_q, seq_k), attn_dtype)]
        else:
            out_specs = out_spec
            out_shape = out_sds

        scratch = [
            pltpu.VMEM((n_heads, seq_k, d_kp), compute_dtype),    # projected K cache
            pltpu.VMEM((n_heads, seq_k, d_vp), compute_dtype),    # projected V cache
            pltpu.VMEM((q_block, d_model), jnp.float32),          # output accumulator
        ]
        res = pl.pallas_call(
            kernel,
            grid=grid,
            in_specs=in_specs,
            out_specs=out_specs,
            out_shape=out_shape,
            scratch_shapes=scratch,
            compiler_params=pltpu.CompilerParams(
                # qi must be "arbitrary": the KV cache is filled at qi == 0 and reused.
                dimension_semantics=("parallel", "arbitrary"),
                vmem_limit_bytes=int(vmem_limit)),
        )(Q, K, V, wq, bq, wk, bk, wv, bv, wo, bo)
        return jax.block_until_ready(res)

    try:
        # Constant-index weight/bias blocks don't need double buffering.
        res = _run(pl.Buffered(1))
    except Exception:
        res = _run(None)                                          # fallback: default buffering

    if return_attn:
        return res[0], res[1]
    return res


# ----------------------------------------------------------------------------- reference
def _reference(Q, K, V, params, n_heads, d_k, d_v):
    """Pure-JAX reference mirroring the PyTorch forward."""
    bs, seq_q, d_model = Q.shape
    scale = (d_model // n_heads) ** -0.5
    q_s = (Q @ params["W_Q"] + params["b_Q"]).reshape(bs, -1, n_heads, d_k).transpose(0, 2, 1, 3)
    k_s = (K @ params["W_K"] + params["b_K"]).reshape(bs, -1, n_heads, d_k).transpose(0, 2, 3, 1)
    v_s = (V @ params["W_V"] + params["b_V"]).reshape(bs, -1, n_heads, d_v).transpose(0, 2, 1, 3)
    scores = jnp.matmul(q_s, k_s) * scale
    attn = jax.nn.softmax(scores, axis=-1)
    out = jnp.matmul(attn, v_s)                                   # (bs, H, seq, d_v)
    out = out.transpose(0, 2, 1, 3).reshape(bs, -1, n_heads * d_v)
    out = out @ params["W_O"] + params["b_O"]
    return out, attn


def _make_params(key, d_model, n_heads, d_k, d_v):
    keys = jax.random.split(key, 9)
    params = {
        "W_Q": jax.random.normal(keys[0], (d_model, n_heads * d_k), jnp.float32) * 0.1,
        "b_Q": jax.random.normal(keys[1], (n_heads * d_k,), jnp.float32) * 0.1,
        "W_K": jax.random.normal(keys[2], (d_model, n_heads * d_k), jnp.float32) * 0.1,
        "b_K": jax.random.normal(keys[3], (n_heads * d_k,), jnp.float32) * 0.1,
        "W_V": jax.random.normal(keys[4], (d_model, n_heads * d_v), jnp.float32) * 0.1,
        "b_V": jax.random.normal(keys[5], (n_heads * d_v,), jnp.float32) * 0.1,
        "W_O": jax.random.normal(keys[6], (n_heads * d_v, d_model), jnp.float32) * 0.1,
        "b_O": jax.random.normal(keys[7], (d_model,), jnp.float32) * 0.1,
    }
    return params, keys[8]


if __name__ == "__main__":
    key = jax.random.PRNGKey(0)

    # --- Test 1: small self-attention, H=4 (unrolled head loop), f32, with attn. ---
    bs, seq, d_model, n_heads = 2, 8, 32, 4
    d_k = d_v = d_model // n_heads
    params, kq = _make_params(key, d_model, n_heads, d_k, d_v)
    Q = jax.random.normal(kq, (bs, seq, d_model), jnp.float32)
    K = Q
    V = Q
    out_ref, attn_ref = _reference(Q, K, V, params, n_heads, d_k, d_v)
    out, attn = multihead_attention(Q, K, V, params, n_heads, d_k, d_v)
    jax.block_until_ready((out, attn))
    assert jnp.allclose(out, out_ref, atol=1e-4, rtol=1e-4)
    assert jnp.allclose(attn, attn_ref, atol=1e-4, rtol=1e-4)

    # --- Test 1b: attn output disabled (approx reciprocal path). ---
    out_only = multihead_attention(Q, K, V, params, n_heads, d_k, d_v, return_attn=False)
    out_only = jax.block_until_ready(out_only)
    assert jnp.allclose(out_only, out_ref, atol=2e-3, rtol=2e-3)

    # --- Test 2: H=8 (fori head loop), q_tiles=2 (exercises the KV cache across q tiles
    #             and batch boundaries), f32. ---
    bs, seq, d_model, n_heads = 2, 128, 64, 8
    d_k = d_v = d_model // n_heads
    key2 = jax.random.PRNGKey(1)
    params2, kq2 = _make_params(key2, d_model, n_heads, d_k, d_v)
    Q2 = jax.random.normal(kq2, (bs, seq, d_model), jnp.float32)
    out_ref2, attn_ref2 = _reference(Q2, Q2, Q2, params2, n_heads, d_k, d_v)
    out2, attn2 = multihead_attention(Q2, Q2, Q2, params2, n_heads, d_k, d_v, q_block=64)
    jax.block_until_ready((out2, attn2))
    assert jnp.allclose(out2, out_ref2, atol=1e-4, rtol=1e-4)
    assert jnp.allclose(attn2, attn_ref2, atol=1e-4, rtol=1e-4)

    # --- Test 3: bf16 MXU operands / f32 accumulate, bf16 attn output (looser tolerance). ---
    out3, attn3 = multihead_attention(Q2, Q2, Q2, params2, n_heads, d_k, d_v, q_block=64,
                                      compute_dtype=jnp.bfloat16, attn_dtype=jnp.bfloat16)
    jax.block_until_ready((out3, attn3))
    assert jnp.allclose(out3, out_ref2, atol=1e-1, rtol=1e-1)
    assert jnp.allclose(attn3.astype(jnp.float32), attn_ref2, atol=5e-2, rtol=5e-2)

    print("KERNEL_OK")
</pallas_src>

<mosaic_0001>
module attributes {stable_mosaic.version = 11 : i64} {
  func.func @_mha_kernel(%arg0: i32, %arg1: i32, %arg2: memref<1x8x32xf32, #tpu.memory_space<vmem>>, %arg3: memref<1x8x32xf32, #tpu.memory_space<vmem>>, %arg4: memref<1x8x32xf32, #tpu.memory_space<vmem>>, %arg5: memref<4x32x128xf32, #tpu.memory_space<vmem>>, %arg6: memref<4x1x128xf32, #tpu.memory_space<vmem>>, %arg7: memref<4x32x128xf32, #tpu.memory_space<vmem>>, %arg8: memref<4x1x128xf32, #tpu.memory_space<vmem>>, %arg9: memref<4x32x128xf32, #tpu.memory_space<vmem>>, %arg10: memref<4x1x128xf32, #tpu.memory_space<vmem>>, %arg11: memref<4x128x32xf32, #tpu.memory_space<vmem>>, %arg12: memref<1x32xf32, #tpu.memory_space<vmem>>, %arg13: memref<1x8x32xf32, #tpu.memory_space<vmem>>, %arg14: memref<1x4x8x8xf32, #tpu.memory_space<vmem>>, %arg15: memref<4x8x128xf32, #tpu.memory_space<vmem>>, %arg16: memref<4x8x128xf32, #tpu.memory_space<vmem>>, %arg17: memref<8x32xf32, #tpu.memory_space<vmem>>) attributes {dimension_semantics = [#tpu.dimension_semantics<parallel>, #tpu.dimension_semantics<arbitrary>], iteration_bounds = array<i64: 2, 1>, scalar_prefetch = 0 : i64, scratch_operands = 3 : i64, tpu.core_type = #tpu.core_type<tc>, window_params = [{transform_indices = @transform_0, window_bounds = array<i64: 1, 8, 32>}, {transform_indices = @transform_1, window_bounds = array<i64: 1, 8, 32>}, {transform_indices = @transform_2, window_bounds = array<i64: 1, 8, 32>}, {pipeline_mode = #tpu.pipeline_mode<synchronous>, transform_indices = @transform_3, window_bounds = array<i64: 4, 32, 128>}, {pipeline_mode = #tpu.pipeline_mode<synchronous>, transform_indices = @transform_4, window_bounds = array<i64: 4, 1, 128>}, {pipeline_mode = #tpu.pipeline_mode<synchronous>, transform_indices = @transform_5, window_bounds = array<i64: 4, 32, 128>}, {pipeline_mode = #tpu.pipeline_mode<synchronous>, transform_indices = @transform_6, window_bounds = array<i64: 4, 1, 128>}, {pipeline_mode = #tpu.pipeline_mode<synchronous>, transform_indices = @transform_7, window_bounds = array<i64: 4, 32, 128>}, {pipeline_mode = #tpu.pipeline_mode<synchronous>, transform_indices = @transform_8, window_bounds = array<i64: 4, 1, 128>}, {pipeline_mode = #tpu.pipeline_mode<synchronous>, transform_indices = @transform_9, window_bounds = array<i64: 4, 128, 32>}, {pipeline_mode = #tpu.pipeline_mode<synchronous>, transform_indices = @transform_10, window_bounds = array<i64: 1, 32>}, {transform_indices = @transform_11, window_bounds = array<i64: 1, 8, 32>}, {transform_indices = @transform_12, window_bounds = array<i64: 1, 4, 8, 8>}]} {
    %c0_i32 = arith.constant 0 : i32
    %0 = arith.cmpi eq, %arg1, %c0_i32 : i32
    %1 = arith.extui %0 : i1 to i32
    %c0_i32_0 = arith.constant 0 : i32
    %2 = arith.cmpi ne, %1, %c0_i32_0 : i32
    scf.if %2 {
      %c0_105 = arith.constant 0 : index
      %c0_106 = arith.constant 0 : index
      %c0_107 = arith.constant 0 : index
      %166 = vector.load %arg3[%c0_105, %c0_106, %c0_107] : memref<1x8x32xf32, #tpu.memory_space<vmem>>, vector<1x8x32xf32>
      %167 = vector.shape_cast %166 : vector<1x8x32xf32> to vector<8x32xf32>
      %c0_108 = arith.constant 0 : index
      %c0_109 = arith.constant 0 : index
      %c0_110 = arith.constant 0 : index
      %168 = vector.load %arg4[%c0_108, %c0_109, %c0_110] : memref<1x8x32xf32, #tpu.memory_space<vmem>>, vector<1x8x32xf32>
      %169 = vector.shape_cast %168 : vector<1x8x32xf32> to vector<8x32xf32>
      %c0_i32_111 = arith.constant 0 : i32
      %170 = arith.index_cast %c0_i32_111 : i32 to index
      %c0_112 = arith.constant 0 : index
      %c0_113 = arith.constant 0 : index
      %171 = vector.load %arg7[%170, %c0_112, %c0_113] : memref<4x32x128xf32, #tpu.memory_space<vmem>>, vector<1x32x128xf32>
      %172 = vector.shape_cast %171 : vector<1x32x128xf32> to vector<32x128xf32>
      %cst_114 = arith.constant dense<0.000000e+00> : vector<8x128xf32>
      %173 = tpu.matmul %167, %172, %cst_114 {dimension_numbers = #tpu.dot_dimension_numbers<[1], [0], [0], [1], [0, 0, 1, 1], [], []>} : vector<8x32xf32>, vector<32x128xf32>, vector<8x128xf32> -> vector<8x128xf32>
      %174 = arith.index_cast %c0_i32_111 : i32 to index
      %c0_115 = arith.constant 0 : index
      %c0_116 = arith.constant 0 : index
      %175 = vector.load %arg8[%174, %c0_115, %c0_116] : memref<4x1x128xf32, #tpu.memory_space<vmem>>, vector<1x1x128xf32>
      %176 = vector.shape_cast %175 : vector<1x1x128xf32> to vector<1x128xf32>
      %177 = vector.broadcast %176 : vector<1x128xf32> to vector<8x128xf32>
      %178 = arith.addf %173, %177 : vector<8x128xf32>
      %179 = arith.index_cast %c0_i32_111 : i32 to index
      %c0_117 = arith.constant 0 : index
      %c0_118 = arith.constant 0 : index
      %180 = vector.load %arg9[%179, %c0_117, %c0_118] : memref<4x32x128xf32, #tpu.memory_space<vmem>>, vector<1x32x128xf32>
      %181 = vector.shape_cast %180 : vector<1x32x128xf32> to vector<32x128xf32>
      %cst_119 = arith.constant dense<0.000000e+00> : vector<8x128xf32>
      %182 = tpu.matmul %169, %181, %cst_119 {dimension_numbers = #tpu.dot_dimension_numbers<[1], [0], [0], [1], [0, 0, 1, 1], [], []>} : vector<8x32xf32>, vector<32x128xf32>, vector<8x128xf32> -> vector<8x128xf32>
      %183 = arith.index_cast %c0_i32_111 : i32 to index
      %c0_120 = arith.constant 0 : index
      %c0_121 = arith.constant 0 : index
      %184 = vector.load %arg10[%183, %c0_120, %c0_121] : memref<4x1x128xf32, #tpu.memory_space<vmem>>, vector<1x1x128xf32>
      %185 = vector.shape_cast %184 : vector<1x1x128xf32> to vector<1x128xf32>
      %186 = vector.broadcast %185 : vector<1x128xf32> to vector<8x128xf32>
      %187 = arith.addf %182, %186 : vector<8x128xf32>
      %188 = arith.index_cast %c0_i32_111 : i32 to index
      %c0_122 = arith.constant 0 : index
      %c0_123 = arith.constant 0 : index
      %189 = vector.load %arg15[%188, %c0_122, %c0_123] : memref<4x8x128xf32, #tpu.memory_space<vmem>>, vector<1x8x128xf32>
      %190 = vector.shape_cast %189 : vector<1x8x128xf32> to vector<8x128xf32>
      %191 = vector.shape_cast %178 : vector<8x128xf32> to vector<1x8x128xf32>
      tpu.vector_store %arg15[%188, %c0_122, %c0_123], %191 {strides = array<i32>} : memref<4x8x128xf32, #tpu.memory_space<vmem>>, vector<1x8x128xf32>,
      %192 = arith.index_cast %c0_i32_111 : i32 to index
      %c0_124 = arith.constant 0 : index
      %c0_125 = arith.constant 0 : index
      %193 = vector.load %arg16[%192, %c0_124, %c0_125] : memref<4x8x128xf32, #tpu.memory_space<vmem>>, vector<1x8x128xf32>
      %194 = vector.shape_cast %193 : vector<1x8x128xf32> to vector<8x128xf32>
      %195 = vector.shape_cast %187 : vector<8x128xf32> to vector<1x8x128xf32>
      tpu.vector_store %arg16[%192, %c0_124, %c0_125], %195 {strides = array<i32>} : memref<4x8x128xf32, #tpu.memory_space<vmem>>, vector<1x8x128xf32>,
      %c1_i32_126 = arith.constant 1 : i32
      %196 = arith.index_cast %c1_i32_126 : i32 to index
      %c0_127 = arith.constant 0 : index
      %c0_128 = arith.constant 0 : index
      %197 = vector.load %arg7[%196, %c0_127, %c0_128] : memref<4x32x128xf32, #tpu.memory_space<vmem>>, vector<1x32x128xf32>
      %198 = vector.shape_cast %197 : vector<1x32x128xf32> to vector<32x128xf32>
      %cst_129 = arith.constant dense<0.000000e+00> : vector<8x128xf32>
      %199 = tpu.matmul %167, %198, %cst_129 {dimension_numbers = #tpu.dot_dimension_numbers<[1], [0], [0], [1], [0, 0, 1, 1], [], []>} : vector<8x32xf32>, vector<32x128xf32>, vector<8x128xf32> -> vector<8x128xf32>
      %200 = arith.index_cast %c1_i32_126 : i32 to index
      %c0_130 = arith.constant 0 : index
      %c0_131 = arith.constant 0 : index
      %201 = vector.load %arg8[%200, %c0_130, %c0_131] : memref<4x1x128xf32, #tpu.memory_space<vmem>>, vector<1x1x128xf32>
      %202 = vector.shape_cast %201 : vector<1x1x128xf32> to vector<1x128xf32>
      %203 = vector.broadcast %202 : vector<1x128xf32> to vector<8x128xf32>
      %204 = arith.addf %199, %203 : vector<8x128xf32>
      %205 = arith.index_cast %c1_i32_126 : i32 to index
      %c0_132 = arith.constant 0 : index
      %c0_133 = arith.constant 0 : index
      %206 = vector.load %arg9[%205, %c0_132, %c0_133] : memref<4x32x128xf32, #tpu.memory_space<vmem>>, vector<1x32x128xf32>
      %207 = vector.shape_cast %206 : vector<1x32x128xf32> to vector<32x128xf32>
      %cst_134 = arith.constant dense<0.000000e+00> : vector<8x128xf32>
      %208 = tpu.matmul %169, %207, %cst_134 {dimension_numbers = #tpu.dot_dimension_numbers<[1], [0], [0], [1], [0, 0, 1, 1], [], []>} : vector<8x32xf32>, vector<32x128xf32>, vector<8x128xf32> -> vector<8x128xf32>
      %209 = arith.index_cast %c1_i32_126 : i32 to index
      %c0_135 = arith.constant 0 : index
      %c0_136 = arith.constant 0 : index
      %210 = vector.load %arg10[%209, %c0_135, %c0_136] : memref<4x1x128xf32, #tpu.memory_space<vmem>>, vector<1x1x128xf32>
      %211 = vector.shape_cast %210 : vector<1x1x128xf32> to vector<1x128xf32>
      %212 = vector.broadcast %211 : vector<1x128xf32> to vector<8x128xf32>
      %213 = arith.addf %208, %212 : vector<8x128xf32>
      %214 = arith.index_cast %c1_i32_126 : i32 to index
      %c0_137 = arith.constant 0 : index
      %c0_138 = arith.constant 0 : index
      %215 = vector.load %arg15[%214, %c0_137, %c0_138] : memref<4x8x128xf32, #tpu.memory_space<vmem>>, vector<1x8x128xf32>
      %216 = vector.shape_cast %215 : vector<1x8x128xf32> to vector<8x128xf32>
      %217 = vector.shape_cast %204 : vector<8x128xf32> to vector<1x8x128xf32>
      tpu.vector_store %arg15[%214, %c0_137, %c0_138], %217 {strides = array<i32>} : memref<4x8x128xf32, #tpu.memory_space<vmem>>, vector<1x8x128xf32>,
      %218 = arith.index_cast %c1_i32_126 : i32 to index
      %c0_139 = arith.constant 0 : index
      %c0_140 = arith.constant 0 : index
      %219 = vector.load %arg16[%218, %c0_139, %c0_140] : memref<4x8x128xf32, #tpu.memory_space<vmem>>, vector<1x8x128xf32>
      %220 = vector.shape_cast %219 : vector<1x8x128xf32> to vector<8x128xf32>
      %221 = vector.shape_cast %213 : vector<8x128xf32> to vector<1x8x128xf32>
      tpu.vector_store %arg16[%218, %c0_139, %c0_140], %221 {strides = array<i32>} : memref<4x8x128xf32, #tpu.memory_space<vmem>>, vector<1x8x128xf32>,
      %c2_i32_141 = arith.constant 2 : i32
      %222 = arith.index_cast %c2_i32_141 : i32 to index
      %c0_142 = arith.constant 0 : index
      %c0_143 = arith.constant 0 : index
      %223 = vector.load %arg7[%222, %c0_142, %c0_143] : memref<4x32x128xf32, #tpu.memory_space<vmem>>, vector<1x32x128xf32>
      %224 = vector.shape_cast %223 : vector<1x32x128xf32> to vector<32x128xf32>
      %cst_144 = arith.constant dense<0.000000e+00> : vector<8x128xf32>
      %225 = tpu.matmul %167, %224, %cst_144 {dimension_numbers = #tpu.dot_dimension_numbers<[1], [0], [0], [1], [0, 0, 1, 1], [], []>} : vector<8x32xf32>, vector<32x128xf32>, vector<8x128xf32> -> vector<8x128xf32>
      %226 = arith.index_cast %c2_i32_141 : i32 to index
      %c0_145 = arith.constant 0 : index
      %c0_146 = arith.constant 0 : index
      %227 = vector.load %arg8[%226, %c0_145, %c0_146] : memref<4x1x128xf32, #tpu.memory_space<vmem>>, vector<1x1x128xf32>
      %228 = vector.shape_cast %227 : vector<1x1x128xf32> to vector<1x128xf32>
      %229 = vector.broadcast %228 : vector<1x128xf32> to vector<8x128xf32>
      %230 = arith.addf %225, %229 : vector<8x128xf32>
      %231 = arith.index_cast %c2_i32_141 : i32 to index
      %c0_147 = arith.constant 0 : index
      %c0_148 = arith.constant 0 : index
      %232 = vector.load %arg9[%231, %c0_147, %c0_148] : memref<4x32x128xf32, #tpu.memory_space<vmem>>, vector<1x32x128xf32>
      %233 = vector.shape_cast %232 : vector<1x32x128xf32> to vector<32x128xf32>
      %cst_149 = arith.constant dense<0.000000e+00> : vector<8x128xf32>
      %234 = tpu.matmul %169, %233, %cst_149 {dimension_numbers = #tpu.dot_dimension_numbers<[1], [0], [0], [1], [0, 0, 1, 1], [], []>} : vector<8x32xf32>, vector<32x128xf32>, vector<8x128xf32> -> vector<8x128xf32>
      %235 = arith.index_cast %c2_i32_141 : i32 to index
      %c0_150 = arith.constant 0 : index
      %c0_151 = arith.constant 0 : index
      %236 = vector.load %arg10[%235, %c0_150, %c0_151] : memref<4x1x128xf32, #tpu.memory_space<vmem>>, vector<1x1x128xf32>
      %237 = vector.shape_cast %236 : vector<1x1x128xf32> to vector<1x128xf32>
      %238 = vector.broadcast %237 : vector<1x128xf32> to vector<8x128xf32>
      %239 = arith.addf %234, %238 : vector<8x128xf32>
      %240 = arith.index_cast %c2_i32_141 : i32 to index
      %c0_152 = arith.constant 0 : index
      %c0_153 = arith.constant 0 : index
      %241 = vector.load %arg15[%240, %c0_152, %c0_153] : memref<4x8x128xf32, #tpu.memory_space<vmem>>, vector<1x8x128xf32>
      %242 = vector.shape_cast %241 : vector<1x8x128xf32> to vector<8x128xf32>
      %243 = vector.shape_cast %230 : vector<8x128xf32> to vector<1x8x128xf32>
      tpu.vector_store %arg15[%240, %c0_152, %c0_153], %243 {strides = array<i32>} : memref<4x8x128xf32, #tpu.memory_space<vmem>>, vector<1x8x128xf32>,
      %244 = arith.index_cast %c2_i32_141 : i32 to index
      %c0_154 = arith.constant 0 : index
      %c0_155 = arith.constant 0 : index
      %245 = vector.load %arg16[%244, %c0_154, %c0_155] : memref<4x8x128xf32, #tpu.memory_space<vmem>>, vector<1x8x128xf32>
      %246 = vector.shape_cast %245 : vector<1x8x128xf32> to vector<8x128xf32>
      %247 = vector.shape_cast %239 : vector<8x128xf32> to vector<1x8x128xf32>
      tpu.vector_store %arg16[%244, %c0_154, %c0_155], %247 {strides = array<i32>} : memref<4x8x128xf32, #tpu.memory_space<vmem>>, vector<1x8x128xf32>,
      %c3_i32_156 = arith.constant 3 : i32
      %248 = arith.index_cast %c3_i32_156 : i32 to index
      %c0_157 = arith.constant 0 : index
      %c0_158 = arith.constant 0 : index
      %249 = vector.load %arg7[%248, %c0_157, %c0_158] : memref<4x32x128xf32, #tpu.memory_space<vmem>>, vector<1x32x128xf32>
      %250 = vector.shape_cast %249 : vector<1x32x128xf32> to vector<32x128xf32>
      %cst_159 = arith.constant dense<0.000000e+00> : vector<8x128xf32>
      %251 = tpu.matmul %167, %250, %cst_159 {dimension_numbers = #tpu.dot_dimension_numbers<[1], [0], [0], [1], [0, 0, 1, 1], [], []>} : vector<8x32xf32>, vector<32x128xf32>, vector<8x128xf32> -> vector<8x128xf32>
      %252 = arith.index_cast %c3_i32_156 : i32 to index
      %c0_160 = arith.constant 0 : index
      %c0_161 = arith.constant 0 : index
      %253 = vector.load %arg8[%252, %c0_160, %c0_161] : memref<4x1x128xf32, #tpu.memory_space<vmem>>, vector<1x1x128xf32>
      %254 = vector.shape_cast %253 : vector<1x1x128xf32> to vector<1x128xf32>
      %255 = vector.broadcast %254 : vector<1x128xf32> to vector<8x128xf32>
      %256 = arith.addf %251, %255 : vector<8x128xf32>
      %257 = arith.index_cast %c3_i32_156 : i32 to index
      %c0_162 = arith.constant 0 : index
      %c0_163 = arith.constant 0 : index
      %258 = vector.load %arg9[%257, %c0_162, %c0_163] : memref<4x32x128xf32, #tpu.memory_space<vmem>>, vector<1x32x128xf32>
      %259 = vector.shape_cast %258 : vector<1x32x128xf32> to vector<32x128xf32>
      %cst_164 = arith.constant dense<0.000000e+00> : vector<8x128xf32>
      %260 = tpu.matmul %169, %259, %cst_164 {dimension_numbers = #tpu.dot_dimension_numbers<[1], [0], [0], [1], [0, 0, 1, 1], [], []>} : vector<8x32xf32>, vector<32x128xf32>, vector<8x128xf32> -> vector<8x128xf32>
      %261 = arith.index_cast %c3_i32_156 : i32 to index
      %c0_165 = arith.constant 0 : index
      %c0_166 = arith.constant 0 : index
      %262 = vector.load %arg10[%261, %c0_165, %c0_166] : memref<4x1x128xf32, #tpu.memory_space<vmem>>, vector<1x1x128xf32>
      %263 = vector.shape_cast %262 : vector<1x1x128xf32> to vector<1x128xf32>
      %264 = vector.broadcast %263 : vector<1x128xf32> to vector<8x128xf32>
      %265 = arith.addf %260, %264 : vector<8x128xf32>
      %266 = arith.index_cast %c3_i32_156 : i32 to index
      %c0_167 = arith.constant 0 : index
      %c0_168 = arith.constant 0 : index
      %267 = vector.load %arg15[%266, %c0_167, %c0_168] : memref<4x8x128xf32, #tpu.memory_space<vmem>>, vector<1x8x128xf32>
      %268 = vector.shape_cast %267 : vector<1x8x128xf32> to vector<8x128xf32>
      %269 = vector.shape_cast %256 : vector<8x128xf32> to vector<1x8x128xf32>
      tpu.vector_store %arg15[%266, %c0_167, %c0_168], %269 {strides = array<i32>} : memref<4x8x128xf32, #tpu.memory_space<vmem>>, vector<1x8x128xf32>,
      %270 = arith.index_cast %c3_i32_156 : i32 to index
      %c0_169 = arith.constant 0 : index
      %c0_170 = arith.constant 0 : index
      %271 = vector.load %arg16[%270, %c0_169, %c0_170] : memref<4x8x128xf32, #tpu.memory_space<vmem>>, vector<1x8x128xf32>
      %272 = vector.shape_cast %271 : vector<1x8x128xf32> to vector<8x128xf32>
      %273 = vector.shape_cast %265 : vector<8x128xf32> to vector<1x8x128xf32>
      tpu.vector_store %arg16[%270, %c0_169, %c0_170], %273 {strides = array<i32>} : memref<4x8x128xf32, #tpu.memory_space<vmem>>, vector<1x8x128xf32>,
      %c4_i32_171 = arith.constant 4 : i32
    } else {
    }
    %c0 = arith.constant 0 : index
    %c0_1 = arith.constant 0 : index
    %c0_2 = arith.constant 0 : index
    %3 = vector.load %arg2[%c0, %c0_1, %c0_2] : memref<1x8x32xf32, #tpu.memory_space<vmem>>, vector<1x8x32xf32>
    %4 = vector.shape_cast %3 : vector<1x8x32xf32> to vector<8x32xf32>
    %cst = arith.constant 0.000000e+00 : f32
    %5 = vector.broadcast %cst : f32 to vector<8x32xf32>
    %c0_3 = arith.constant 0 : index
    %c0_4 = arith.constant 0 : index
    %6 = vector.load %arg17[%c0_3, %c0_4] : memref<8x32xf32, #tpu.memory_space<vmem>>, vector<8x32xf32>
    tpu.vector_store %arg17[%c0_3, %c0_4], %5 {strides = array<i32>} : memref<8x32xf32, #tpu.memory_space<vmem>>, vector<8x32xf32>,
    %c0_i32_5 = arith.constant 0 : i32
    %7 = arith.index_cast %c0_i32_5 : i32 to index
    %c0_6 = arith.constant 0 : index
    %c0_7 = arith.constant 0 : index
    %8 = vector.load %arg5[%7, %c0_6, %c0_7] : memref<4x32x128xf32, #tpu.memory_space<vmem>>, vector<1x32x128xf32>
    %9 = vector.shape_cast %8 : vector<1x32x128xf32> to vector<32x128xf32>
    %cst_8 = arith.constant dense<0.000000e+00> : vector<8x128xf32>
    %10 = tpu.matmul %4, %9, %cst_8 {dimension_numbers = #tpu.dot_dimension_numbers<[1], [0], [0], [1], [0, 0, 1, 1], [], []>} : vector<8x32xf32>, vector<32x128xf32>, vector<8x128xf32> -> vector<8x128xf32>
    %11 = arith.index_cast %c0_i32_5 : i32 to index
    %c0_9 = arith.constant 0 : index
    %c0_10 = arith.constant 0 : index
    %12 = vector.load %arg6[%11, %c0_9, %c0_10] : memref<4x1x128xf32, #tpu.memory_space<vmem>>, vector<1x1x128xf32>
    %13 = vector.shape_cast %12 : vector<1x1x128xf32> to vector<1x128xf32>
    %14 = vector.broadcast %13 : vector<1x128xf32> to vector<8x128xf32>
    %15 = arith.addf %10, %14 : vector<8x128xf32>
    %16 = arith.index_cast %c0_i32_5 : i32 to index
    %c0_11 = arith.constant 0 : index
    %c0_12 = arith.constant 0 : index
    %17 = vector.load %arg15[%16, %c0_11, %c0_12] : memref<4x8x128xf32, #tpu.memory_space<vmem>>, vector<1x8x128xf32>
    %18 = vector.shape_cast %17 : vector<1x8x128xf32> to vector<8x128xf32>
    %cst_13 = arith.constant dense<0.000000e+00> : vector<8x8xf32>
    %19 = tpu.matmul %15, %18, %cst_13 {dimension_numbers = #tpu.dot_dimension_numbers<[1], [1], [0], [0], [0, 0, 1, 0], [], []>} : vector<8x128xf32>, vector<8x128xf32>, vector<8x8xf32> -> vector<8x8xf32>
    %cst_14 = arith.constant dense<0xFF800000> : vector<8xf32>
    %20 = vector.multi_reduction <maximumf>, %19, %cst_14 [1] : vector<8x8xf32> to vector<8xf32>
    %21 = vector.shape_cast %20 : vector<8xf32> to vector<8x1xf32>
    %22 = vector.broadcast %21 : vector<8x1xf32> to vector<8x8xf32>
    %23 = arith.subf %19, %22 : vector<8x8xf32>
    %24 = math.exp %23 : vector<8x8xf32>
    %cst_15 = arith.constant dense<0.000000e+00> : vector<8xf32>
    %25 = vector.multi_reduction <add>, %24, %cst_15 [1] : vector<8x8xf32> to vector<8xf32>
    %26 = vector.shape_cast %25 : vector<8xf32> to vector<8x1xf32>
    %27 = tpu.reciprocal %26 : vector<8x1xf32> -> vector<8x1xf32>
    %28 = vector.broadcast %27 : vector<8x1xf32> to vector<8x8xf32>
    %29 = arith.mulf %24, %28 : vector<8x8xf32>
    %c0_16 = arith.constant 0 : index
    %30 = arith.index_cast %c0_i32_5 : i32 to index
    %c0_17 = arith.constant 0 : index
    %c0_18 = arith.constant 0 : index
    %31 = vector.load %arg14[%c0_16, %30, %c0_17, %c0_18] : memref<1x4x8x8xf32, #tpu.memory_space<vmem>>, vector<1x1x8x8xf32>
    %32 = vector.shape_cast %31 : vector<1x1x8x8xf32> to vector<8x8xf32>
    %33 = vector.shape_cast %29 : vector<8x8xf32> to vector<1x1x8x8xf32>
    tpu.vector_store %arg14[%c0_16, %30, %c0_17, %c0_18], %33 {strides = array<i32>} : memref<1x4x8x8xf32, #tpu.memory_space<vmem>>, vector<1x1x8x8xf32>,
    %34 = arith.index_cast %c0_i32_5 : i32 to index
    %c0_19 = arith.constant 0 : index
    %c0_20 = arith.constant 0 : index
    %35 = vector.load %arg16[%34, %c0_19, %c0_20] : memref<4x8x128xf32, #tpu.memory_space<vmem>>, vector<1x8x128xf32>
    %36 = vector.shape_cast %35 : vector<1x8x128xf32> to vector<8x128xf32>
    %cst_21 = arith.constant dense<0.000000e+00> : vector<8x128xf32>
    %37 = tpu.matmul %29, %36, %cst_21 {dimension_numbers = #tpu.dot_dimension_numbers<[1], [0], [0], [1], [0, 0, 1, 1], [], []>} : vector<8x8xf32>, vector<8x128xf32>, vector<8x128xf32> -> vector<8x128xf32>
    %c0_22 = arith.constant 0 : index
    %c0_23 = arith.constant 0 : index
    %38 = vector.load %arg17[%c0_22, %c0_23] : memref<8x32xf32, #tpu.memory_space<vmem>>, vector<8x32xf32>
    %39 = arith.index_cast %c0_i32_5 : i32 to index
    %c0_24 = arith.constant 0 : index
    %c0_25 = arith.constant 0 : index
    %40 = vector.load %arg11[%39, %c0_24, %c0_25] : memref<4x128x32xf32, #tpu.memory_space<vmem>>, vector<1x128x32xf32>
    %41 = vector.shape_cast %40 : vector<1x128x32xf32> to vector<128x32xf32>
    %cst_26 = arith.constant dense<0.000000e+00> : vector<8x32xf32>
    %42 = tpu.matmul %37, %41, %cst_26 {dimension_numbers = #tpu.dot_dimension_numbers<[1], [0], [0], [1], [0, 0, 1, 1], [], []>} : vector<8x128xf32>, vector<128x32xf32>, vector<8x32xf32> -> vector<8x32xf32>
    %43 = arith.addf %38, %42 : vector<8x32xf32>
    %c0_27 = arith.constant 0 : index
    %c0_28 = arith.constant 0 : index
    %44 = vector.load %arg17[%c0_27, %c0_28] : memref<8x32xf32, #tpu.memory_space<vmem>>, vector<8x32xf32>
    tpu.vector_store %arg17[%c0_27, %c0_28], %43 {strides = array<i32>} : memref<8x32xf32, #tpu.memory_space<vmem>>, vector<8x32xf32>,
    %c1_i32 = arith.constant 1 : i32
    %45 = arith.index_cast %c1_i32 : i32 to index
    %c0_29 = arith.constant 0 : index
    %c0_30 = arith.constant 0 : index
    %46 = vector.load %arg5[%45, %c0_29, %c0_30] : memref<4x32x128xf32, #tpu.memory_space<vmem>>, vector<1x32x128xf32>
    %47 = vector.shape_cast %46 : vector<1x32x128xf32> to vector<32x128xf32>
    %cst_31 = arith.constant dense<0.000000e+00> : vector<8x128xf32>
    %48 = tpu.matmul %4, %47, %cst_31 {dimension_numbers = #tpu.dot_dimension_numbers<[1], [0], [0], [1], [0, 0, 1, 1], [], []>} : vector<8x32xf32>, vector<32x128xf32>, vector<8x128xf32> -> vector<8x128xf32>
    %49 = arith.index_cast %c1_i32 : i32 to index
    %c0_32 = arith.constant 0 : index
    %c0_33 = arith.constant 0 : index
    %50 = vector.load %arg6[%49, %c0_32, %c0_33] : memref<4x1x128xf32, #tpu.memory_space<vmem>>, vector<1x1x128xf32>
    %51 = vector.shape_cast %50 : vector<1x1x128xf32> to vector<1x128xf32>
    %52 = vector.broadcast %51 : vector<1x128xf32> to vector<8x128xf32>
    %53 = arith.addf %48, %52 : vector<8x128xf32>
    %54 = arith.index_cast %c1_i32 : i32 to index
    %c0_34 = arith.constant 0 : index
    %c0_35 = arith.constant 0 : index
    %55 = vector.load %arg15[%54, %c0_34, %c0_35] : memref<4x8x128xf32, #tpu.memory_space<vmem>>, vector<1x8x128xf32>
    %56 = vector.shape_cast %55 : vector<1x8x128xf32> to vector<8x128xf32>
    %cst_36 = arith.constant dense<0.000000e+00> : vector<8x8xf32>
    %57 = tpu.matmul %53, %56, %cst_36 {dimension_numbers = #tpu.dot_dimension_numbers<[1], [1], [0], [0], [0, 0, 1, 0], [], []>} : vector<8x128xf32>, vector<8x128xf32>, vector<8x8xf32> -> vector<8x8xf32>
    %cst_37 = arith.constant dense<0xFF800000> : vector<8xf32>
    %58 = vector.multi_reduction <maximumf>, %57, %cst_37 [1] : vector<8x8xf32> to vector<8xf32>
    %59 = vector.shape_cast %58 : vector<8xf32> to vector<8x1xf32>
    %60 = vector.broadcast %59 : vector<8x1xf32> to vector<8x8xf32>
    %61 = arith.subf %57, %60 : vector<8x8xf32>
    %62 = math.exp %61 : vector<8x8xf32>
    %cst_38 = arith.constant dense<0.000000e+00> : vector<8xf32>
    %63 = vector.multi_reduction <add>, %62, %cst_38 [1] : vector<8x8xf32> to vector<8xf32>
    %64 = vector.shape_cast %63 : vector<8xf32> to vector<8x1xf32>
    %65 = tpu.reciprocal %64 : vector<8x1xf32> -> vector<8x1xf32>
    %66 = vector.broadcast %65 : vector<8x1xf32> to vector<8x8xf32>
    %67 = arith.mulf %62, %66 : vector<8x8xf32>
    %c0_39 = arith.constant 0 : index
    %68 = arith.index_cast %c1_i32 : i32 to index
    %c0_40 = arith.constant 0 : index
    %c0_41 = arith.constant 0 : index
    %69 = vector.load %arg14[%c0_39, %68, %c0_40, %c0_41] : memref<1x4x8x8xf32, #tpu.memory_space<vmem>>, vector<1x1x8x8xf32>
    %70 = vector.shape_cast %69 : vector<1x1x8x8xf32> to vector<8x8xf32>
    %71 = vector.shape_cast %67 : vector<8x8xf32> to vector<1x1x8x8xf32>
    tpu.vector_store %arg14[%c0_39, %68, %c0_40, %c0_41], %71 {strides = array<i32>} : memref<1x4x8x8xf32, #tpu.memory_space<vmem>>, vector<1x1x8x8xf32>,
    %72 = arith.index_cast %c1_i32 : i32 to index
    %c0_42 = arith.constant 0 : index
    %c0_43 = arith.constant 0 : index
    %73 = vector.load %arg16[%72, %c0_42, %c0_43] : memref<4x8x128xf32, #tpu.memory_space<vmem>>, vector<1x8x128xf32>
    %74 = vector.shape_cast %73 : vector<1x8x128xf32> to vector<8x128xf32>
    %cst_44 = arith.constant dense<0.000000e+00> : vector<8x128xf32>
    %75 = tpu.matmul %67, %74, %cst_44 {dimension_numbers = #tpu.dot_dimension_numbers<[1], [0], [0], [1], [0, 0, 1, 1], [], []>} : vector<8x8xf32>, vector<8x128xf32>, vector<8x128xf32> -> vector<8x128xf32>
    %c0_45 = arith.constant 0 : index
    %c0_46 = arith.constant 0 : index
    %76 = vector.load %arg17[%c0_45, %c0_46] : memref<8x32xf32, #tpu.memory_space<vmem>>, vector<8x32xf32>
    %77 = arith.index_cast %c1_i32 : i32 to index
    %c0_47 = arith.constant 0 : index
    %c0_48 = arith.constant 0 : index
    %78 = vector.load %arg11[%77, %c0_47, %c0_48] : memref<4x128x32xf32, #tpu.memory_space<vmem>>, vector<1x128x32xf32>
    %79 = vector.shape_cast %78 : vector<1x128x32xf32> to vector<128x32xf32>
    %cst_49 = arith.constant dense<0.000000e+00> : vector<8x32xf32>
    %80 = tpu.matmul %75, %79, %cst_49 {dimension_numbers = #tpu.dot_dimension_numbers<[1], [0], [0], [1], [0, 0, 1, 1], [], []>} : vector<8x128xf32>, vector<128x32xf32>, vector<8x32xf32> -> vector<8x32xf32>
    %81 = arith.addf %76, %80 : vector<8x32xf32>
    %c0_50 = arith.constant 0 : index
    %c0_51 = arith.constant 0 : index
    %82 = vector.load %arg17[%c0_50, %c0_51] : memref<8x32xf32, #tpu.memory_space<vmem>>, vector<8x32xf32>
    tpu.vector_store %arg17[%c0_50, %c0_51], %81 {strides = array<i32>} : memref<8x32xf32, #tpu.memory_space<vmem>>, vector<8x32xf32>,
    %c2_i32 = arith.constant 2 : i32
    %83 = arith.index_cast %c2_i32 : i32 to index
    %c0_52 = arith.constant 0 : index
    %c0_53 = arith.constant 0 : index
    %84 = vector.load %arg5[%83, %c0_52, %c0_53] : memref<4x32x128xf32, #tpu.memory_space<vmem>>, vector<1x32x128xf32>
    %85 = vector.shape_cast %84 : vector<1x32x128xf32> to vector<32x128xf32>
    %cst_54 = arith.constant dense<0.000000e+00> : vector<8x128xf32>
    %86 = tpu.matmul %4, %85, %cst_54 {dimension_numbers = #tpu.dot_dimension_numbers<[1], [0], [0], [1], [0, 0, 1, 1], [], []>} : vector<8x32xf32>, vector<32x128xf32>, vector<8x128xf32> -> vector<8x128xf32>
    %87 = arith.index_cast %c2_i32 : i32 to index
    %c0_55 = arith.constant 0 : index
    %c0_56 = arith.constant 0 : index
    %88 = vector.load %arg6[%87, %c0_55, %c0_56] : memref<4x1x128xf32, #tpu.memory_space<vmem>>, vector<1x1x128xf32>
    %89 = vector.shape_cast %88 : vector<1x1x128xf32> to vector<1x128xf32>
    %90 = vector.broadcast %89 : vector<1x128xf32> to vector<8x128xf32>
    %91 = arith.addf %86, %90 : vector<8x128xf32>
    %92 = arith.index_cast %c2_i32 : i32 to index
    %c0_57 = arith.constant 0 : index
    %c0_58 = arith.constant 0 : index
    %93 = vector.load %arg15[%92, %c0_57, %c0_58] : memref<4x8x128xf32, #tpu.memory_space<vmem>>, vector<1x8x128xf32>
    %94 = vector.shape_cast %93 : vector<1x8x128xf32> to vector<8x128xf32>
    %cst_59 = arith.constant dense<0.000000e+00> : vector<8x8xf32>
    %95 = tpu.matmul %91, %94, %cst_59 {dimension_numbers = #tpu.dot_dimension_numbers<[1], [1], [0], [0], [0, 0, 1, 0], [], []>} : vector<8x128xf32>, vector<8x128xf32>, vector<8x8xf32> -> vector<8x8xf32>
    %cst_60 = arith.constant dense<0xFF800000> : vector<8xf32>
    %96 = vector.multi_reduction <maximumf>, %95, %cst_60 [1] : vector<8x8xf32> to vector<8xf32>
    %97 = vector.shape_cast %96 : vector<8xf32> to vector<8x1xf32>
    %98 = vector.broadcast %97 : vector<8x1xf32> to vector<8x8xf32>
    %99 = arith.subf %95, %98 : vector<8x8xf32>
    %100 = math.exp %99 : vector<8x8xf32>
    %cst_61 = arith.constant dense<0.000000e+00> : vector<8xf32>
    %101 = vector.multi_reduction <add>, %100, %cst_61 [1] : vector<8x8xf32> to vector<8xf32>
    %102 = vector.shape_cast %101 : vector<8xf32> to vector<8x1xf32>
    %103 = tpu.reciprocal %102 : vector<8x1xf32> -> vector<8x1xf32>
    %104 = vector.broadcast %103 : vector<8x1xf32> to vector<8x8xf32>
    %105 = arith.mulf %100, %104 : vector<8x8xf32>
    %c0_62 = arith.constant 0 : index
    %106 = arith.index_cast %c2_i32 : i32 to index
    %c0_63 = arith.constant 0 : index
    %c0_64 = arith.constant 0 : index
    %107 = vector.load %arg14[%c0_62, %106, %c0_63, %c0_64] : memref<1x4x8x8xf32, #tpu.memory_space<vmem>>, vector<1x1x8x8xf32>
    %108 = vector.shape_cast %107 : vector<1x1x8x8xf32> to vector<8x8xf32>
    %109 = vector.shape_cast %105 : vector<8x8xf32> to vector<1x1x8x8xf32>
    tpu.vector_store %arg14[%c0_62, %106, %c0_63, %c0_64], %109 {strides = array<i32>} : memref<1x4x8x8xf32, #tpu.memory_space<vmem>>, vector<1x1x8x8xf32>,
    %110 = arith.index_cast %c2_i32 : i32 to index
    %c0_65 = arith.constant 0 : index
    %c0_66 = arith.constant 0 : index
    %111 = vector.load %arg16[%110, %c0_65, %c0_66] : memref<4x8x128xf32, #tpu.memory_space<vmem>>, vector<1x8x128xf32>
    %112 = vector.shape_cast %111 : vector<1x8x128xf32> to vector<8x128xf32>
    %cst_67 = arith.constant dense<0.000000e+00> : vector<8x128xf32>
    %113 = tpu.matmul %105, %112, %cst_67 {dimension_numbers = #tpu.dot_dimension_numbers<[1], [0], [0], [1], [0, 0, 1, 1], [], []>} : vector<8x8xf32>, vector<8x128xf32>, vector<8x128xf32> -> vector<8x128xf32>
    %c0_68 = arith.constant 0 : index
    %c0_69 = arith.constant 0 : index
    %114 = vector.load %arg17[%c0_68, %c0_69] : memref<8x32xf32, #tpu.memory_space<vmem>>, vector<8x32xf32>
    %115 = arith.index_cast %c2_i32 : i32 to index
    %c0_70 = arith.constant 0 : index
    %c0_71 = arith.constant 0 : index
    %116 = vector.load %arg11[%115, %c0_70, %c0_71] : memref<4x128x32xf32, #tpu.memory_space<vmem>>, vector<1x128x32xf32>
    %117 = vector.shape_cast %116 : vector<1x128x32xf32> to vector<128x32xf32>
    %cst_72 = arith.constant dense<0.000000e+00> : vector<8x32xf32>
    %118 = tpu.matmul %113, %117, %cst_72 {dimension_numbers = #tpu.dot_dimension_numbers<[1], [0], [0], [1], [0, 0, 1, 1], [], []>} : vector<8x128xf32>, vector<128x32xf32>, vector<8x32xf32> -> vector<8x32xf32>
    %119 = arith.addf %114, %118 : vector<8x32xf32>
    %c0_73 = arith.constant 0 : index
    %c0_74 = arith.constant 0 : index
    %120 = vector.load %arg17[%c0_73, %c0_74] : memref<8x32xf32, #tpu.memory_space<vmem>>, vector<8x32xf32>
    tpu.vector_store %arg17[%c0_73, %c0_74], %119 {strides = array<i32>} : memref<8x32xf32, #tpu.memory_space<vmem>>, vector<8x32xf32>,
    %c3_i32 = arith.constant 3 : i32
    %121 = arith.index_cast %c3_i32 : i32 to index
    %c0_75 = arith.constant 0 : index
    %c0_76 = arith.constant 0 : index
    %122 = vector.load %arg5[%121, %c0_75, %c0_76] : memref<4x32x128xf32, #tpu.memory_space<vmem>>, vector<1x32x128xf32>
    %123 = vector.shape_cast %122 : vector<1x32x128xf32> to vector<32x128xf32>
    %cst_77 = arith.constant dense<0.000000e+00> : vector<8x128xf32>
    %124 = tpu.matmul %4, %123, %cst_77 {dimension_numbers = #tpu.dot_dimension_numbers<[1], [0], [0], [1], [0, 0, 1, 1], [], []>} : vector<8x32xf32>, vector<32x128xf32>, vector<8x128xf32> -> vector<8x128xf32>
    %125 = arith.index_cast %c3_i32 : i32 to index
    %c0_78 = arith.constant 0 : index
    %c0_79 = arith.constant 0 : index
    %126 = vector.load %arg6[%125, %c0_78, %c0_79] : memref<4x1x128xf32, #tpu.memory_space<vmem>>, vector<1x1x128xf32>
    %127 = vector.shape_cast %126 : vector<1x1x128xf32> to vector<1x128xf32>
    %128 = vector.broadcast %127 : vector<1x128xf32> to vector<8x128xf32>
    %129 = arith.addf %124, %128 : vector<8x128xf32>
    %130 = arith.index_cast %c3_i32 : i32 to index
    %c0_80 = arith.constant 0 : index
    %c0_81 = arith.constant 0 : index
    %131 = vector.load %arg15[%130, %c0_80, %c0_81] : memref<4x8x128xf32, #tpu.memory_space<vmem>>, vector<1x8x128xf32>
    %132 = vector.shape_cast %131 : vector<1x8x128xf32> to vector<8x128xf32>
    %cst_82 = arith.constant dense<0.000000e+00> : vector<8x8xf32>
    %133 = tpu.matmul %129, %132, %cst_82 {dimension_numbers = #tpu.dot_dimension_numbers<[1], [1], [0], [0], [0, 0, 1, 0], [], []>} : vector<8x128xf32>, vector<8x128xf32>, vector<8x8xf32> -> vector<8x8xf32>
    %cst_83 = arith.constant dense<0xFF800000> : vector<8xf32>
    %134 = vector.multi_reduction <maximumf>, %133, %cst_83 [1] : vector<8x8xf32> to vector<8xf32>
    %135 = vector.shape_cast %134 : vector<8xf32> to vector<8x1xf32>
    %136 = vector.broadcast %135 : vector<8x1xf32> to vector<8x8xf32>
    %137 = arith.subf %133, %136 : vector<8x8xf32>
    %138 = math.exp %137 : vector<8x8xf32>
    %cst_84 = arith.constant dense<0.000000e+00> : vector<8xf32>
    %139 = vector.multi_reduction <add>, %138, %cst_84 [1] : vector<8x8xf32> to vector<8xf32>
    %140 = vector.shape_cast %139 : vector<8xf32> to vector<8x1xf32>
    %141 = tpu.reciprocal %140 : vector<8x1xf32> -> vector<8x1xf32>
    %142 = vector.broadcast %141 : vector<8x1xf32> to vector<8x8xf32>
    %143 = arith.mulf %138, %142 : vector<8x8xf32>
    %c0_85 = arith.constant 0 : index
    %144 = arith.index_cast %c3_i32 : i32 to index
    %c0_86 = arith.constant 0 : index
    %c0_87 = arith.constant 0 : index
    %145 = vector.load %arg14[%c0_85, %144, %c0_86, %c0_87] : memref<1x4x8x8xf32, #tpu.memory_space<vmem>>, vector<1x1x8x8xf32>
    %146 = vector.shape_cast %145 : vector<1x1x8x8xf32> to vector<8x8xf32>
    %147 = vector.shape_cast %143 : vector<8x8xf32> to vector<1x1x8x8xf32>
    tpu.vector_store %arg14[%c0_85, %144, %c0_86, %c0_87], %147 {strides = array<i32>} : memref<1x4x8x8xf32, #tpu.memory_space<vmem>>, vector<1x1x8x8xf32>,
    %148 = arith.index_cast %c3_i32 : i32 to index
    %c0_88 = arith.constant 0 : index
    %c0_89 = arith.constant 0 : index
    %149 = vector.load %arg16[%148, %c0_88, %c0_89] : memref<4x8x128xf32, #tpu.memory_space<vmem>>, vector<1x8x128xf32>
    %150 = vector.shape_cast %149 : vector<1x8x128xf32> to vector<8x128xf32>
    %cst_90 = arith.constant dense<0.000000e+00> : vector<8x128xf32>
    %151 = tpu.matmul %143, %150, %cst_90 {dimension_numbers = #tpu.dot_dimension_numbers<[1], [0], [0], [1], [0, 0, 1, 1], [], []>} : vector<8x8xf32>, vector<8x128xf32>, vector<8x128xf32> -> vector<8x128xf32>
    %c0_91 = arith.constant 0 : index
    %c0_92 = arith.constant 0 : index
    %152 = vector.load %arg17[%c0_91, %c0_92] : memref<8x32xf32, #tpu.memory_space<vmem>>, vector<8x32xf32>
    %153 = arith.index_cast %c3_i32 : i32 to index
    %c0_93 = arith.constant 0 : index
    %c0_94 = arith.constant 0 : index
    %154 = vector.load %arg11[%153, %c0_93, %c0_94] : memref<4x128x32xf32, #tpu.memory_space<vmem>>, vector<1x128x32xf32>
    %155 = vector.shape_cast %154 : vector<1x128x32xf32> to vector<128x32xf32>
    %cst_95 = arith.constant dense<0.000000e+00> : vector<8x32xf32>
    %156 = tpu.matmul %151, %155, %cst_95 {dimension_numbers = #tpu.dot_dimension_numbers<[1], [0], [0], [1], [0, 0, 1, 1], [], []>} : vector<8x128xf32>, vector<128x32xf32>, vector<8x32xf32> -> vector<8x32xf32>
    %157 = arith.addf %152, %156 : vector<8x32xf32>
    %c0_96 = arith.constant 0 : index
    %c0_97 = arith.constant 0 : index
    %158 = vector.load %arg17[%c0_96, %c0_97] : memref<8x32xf32, #tpu.memory_space<vmem>>, vector<8x32xf32>
    tpu.vector_store %arg17[%c0_96, %c0_97], %157 {strides = array<i32>} : memref<8x32xf32, #tpu.memory_space<vmem>>, vector<8x32xf32>,
    %c4_i32 = arith.constant 4 : i32
    %c0_98 = arith.constant 0 : index
    %c0_99 = arith.constant 0 : index
    %159 = vector.load %arg17[%c0_98, %c0_99] : memref<8x32xf32, #tpu.memory_space<vmem>>, vector<8x32xf32>
    %c0_100 = arith.constant 0 : index
    %c0_101 = arith.constant 0 : index
    %160 = vector.load %arg12[%c0_100, %c0_101] : memref<1x32xf32, #tpu.memory_space<vmem>>, vector<1x32xf32>
    %161 = vector.broadcast %160 : vector<1x32xf32> to vector<8x32xf32>
    %162 = arith.addf %159, %161 : vector<8x32xf32>
    %c0_102 = arith.constant 0 : index
    %c0_103 = arith.constant 0 : index
    %c0_104 = arith.constant 0 : index
    %163 = vector.load %arg13[%c0_102, %c0_103, %c0_104] : memref<1x8x32xf32, #tpu.memory_space<vmem>>, vector<1x8x32xf32>
    %164 = vector.shape_cast %163 : vector<1x8x32xf32> to vector<8x32xf32>
    %165 = vector.shape_cast %162 : vector<8x32xf32> to vector<1x8x32xf32>
    tpu.vector_store %arg13[%c0_102, %c0_103, %c0_104], %165 {strides = array<i32>} : memref<1x8x32xf32, #tpu.memory_space<vmem>>, vector<1x8x32xf32>,
    return
  }
  func.func @transform_0(%arg0: i32, %arg1: i32) -> (i32, i32, i32) {
    %c0_i32 = arith.constant 0 : i32
    %c0_i32_0 = arith.constant 0 : i32
    return %arg0, %arg1, %c0_i32 : i32, i32, i32
  }
  func.func @transform_1(%arg0: i32, %arg1: i32) -> (i32, i32, i32) {
    %c0_i32 = arith.constant 0 : i32
    %c0_i32_0 = arith.constant 0 : i32
    %c0_i32_1 = arith.constant 0 : i32
    return %arg0, %c0_i32, %c0_i32_0 : i32, i32, i32
  }
  func.func @transform_2(%arg0: i32, %arg1: i32) -> (i32, i32, i32) {
    %c0_i32 = arith.constant 0 : i32
    %c0_i32_0 = arith.constant 0 : i32
    %c0_i32_1 = arith.constant 0 : i32
    return %arg0, %c0_i32, %c0_i32_0 : i32, i32, i32
  }
  func.func @transform_3(%arg0: i32, %arg1: i32) -> (i32, i32, i32) {
    %c0_i32 = arith.constant 0 : i32
    %c0_i32_0 = arith.constant 0 : i32
    %c0_i32_1 = arith.constant 0 : i32
    %c0_i32_2 = arith.constant 0 : i32
    return %c0_i32, %c0_i32_0, %c0_i32_1 : i32, i32, i32
  }
  func.func @transform_4(%arg0: i32, %arg1: i32) -> (i32, i32, i32) {
    %c0_i32 = arith.constant 0 : i32
    %c0_i32_0 = arith.constant 0 : i32
    %c0_i32_1 = arith.constant 0 : i32
    %c0_i32_2 = arith.constant 0 : i32
    return %c0_i32, %c0_i32_0, %c0_i32_1 : i32, i32, i32
  }
  func.func @transform_5(%arg0: i32, %arg1: i32) -> (i32, i32, i32) {
    %c0_i32 = arith.constant 0 : i32
    %c0_i32_0 = arith.constant 0 : i32
    %c0_i32_1 = arith.constant 0 : i32
    %c0_i32_2 = arith.constant 0 : i32
    return %c0_i32, %c0_i32_0, %c0_i32_1 : i32, i32, i32
  }
  func.func @transform_6(%arg0: i32, %arg1: i32) -> (i32, i32, i32) {
    %c0_i32 = arith.constant 0 : i32
    %c0_i32_0 = arith.constant 0 : i32
    %c0_i32_1 = arith.constant 0 : i32
    %c0_i32_2 = arith.constant 0 : i32
    return %c0_i32, %c0_i32_0, %c0_i32_1 : i32, i32, i32
  }
  func.func @transform_7(%arg0: i32, %arg1: i32) -> (i32, i32, i32) {
    %c0_i32 = arith.constant 0 : i32
    %c0_i32_0 = arith.constant 0 : i32
    %c0_i32_1 = arith.constant 0 : i32
    %c0_i32_2 = arith.constant 0 : i32
    return %c0_i32, %c0_i32_0, %c0_i32_1 : i32, i32, i32
  }
  func.func @transform_8(%arg0: i32, %arg1: i32) -> (i32, i32, i32) {
    %c0_i32 = arith.constant 0 : i32
    %c0_i32_0 = arith.constant 0 : i32
    %c0_i32_1 = arith.constant 0 : i32
    %c0_i32_2 = arith.constant 0 : i32
    return %c0_i32, %c0_i32_0, %c0_i32_1 : i32, i32, i32
  }
  func.func @transform_9(%arg0: i32, %arg1: i32) -> (i32, i32, i32) {
    %c0_i32 = arith.constant 0 : i32
    %c0_i32_0 = arith.constant 0 : i32
    %c0_i32_1 = arith.constant 0 : i32
    %c0_i32_2 = arith.constant 0 : i32
    return %c0_i32, %c0_i32_0, %c0_i32_1 : i32, i32, i32
  }
  func.func @transform_10(%arg0: i32, %arg1: i32) -> (i32, i32) {
    %c0_i32 = arith.constant 0 : i32
    %c0_i32_0 = arith.constant 0 : i32
    %c0_i32_1 = arith.constant 0 : i32
    return %c0_i32, %c0_i32_0 : i32, i32
  }
  func.func @transform_11(%arg0: i32, %arg1: i32) -> (i32, i32, i32) {
    %c0_i32 = arith.constant 0 : i32
    %c0_i32_0 = arith.constant 0 : i32
    return %arg0, %arg1, %c0_i32 : i32, i32, i32
  }
  func.func @transform_12(%arg0: i32, %arg1: i32) -> (i32, i32, i32, i32) {
    %c0_i32 = arith.constant 0 : i32
    %c0_i32_0 = arith.constant 0 : i32
    %c0_i32_1 = arith.constant 0 : i32
    return %arg0, %c0_i32, %arg1, %c0_i32_0 : i32, i32, i32, i32
  }
}

module attributes {stable_mosaic.version = 11 : i64} {
  func.func @_mha_kernel(%arg0: i32, %arg1: i32, %arg2: memref<1x8x32xf32, #tpu.memory_space<vmem>>, %arg3: memref<1x8x32xf32, #tpu.memory_space<vmem>>, %arg4: memref<1x8x32xf32, #tpu.memory_space<vmem>>, %arg5: memref<4x32x128xf32, #tpu.memory_space<vmem>>, %arg6: memref<4x1x128xf32, #tpu.memory_space<vmem>>, %arg7: memref<4x32x128xf32, #tpu.memory_space<vmem>>, %arg8: memref<4x1x128xf32, #tpu.memory_space<vmem>>, %arg9: memref<4x32x128xf32, #tpu.memory_space<vmem>>, %arg10: memref<4x1x128xf32, #tpu.memory_space<vmem>>, %arg11: memref<4x128x32xf32, #tpu.memory_space<vmem>>, %arg12: memref<1x32xf32, #tpu.memory_space<vmem>>, %arg13: memref<1x8x32xf32, #tpu.memory_space<vmem>>, %arg14: memref<1x4x8x8xf32, #tpu.memory_space<vmem>>, %arg15: memref<4x8x128xf32, #tpu.memory_space<vmem>>, %arg16: memref<4x8x128xf32, #tpu.memory_space<vmem>>, %arg17: memref<8x32xf32, #tpu.memory_space<vmem>>) attributes {dimension_semantics = [#tpu.dimension_semantics<parallel>, #tpu.dimension_semantics<arbitrary>], iteration_bounds = array<i64: 2, 1>, scalar_prefetch = 0 : i64, scratch_operands = 3 : i64, tpu.core_type = #tpu.core_type<tc>, window_params = [{transform_indices = @transform_0, window_bounds = array<i64: 1, 8, 32>}, {transform_indices = @transform_1, window_bounds = array<i64: 1, 8, 32>}, {transform_indices = @transform_2, window_bounds = array<i64: 1, 8, 32>}, {pipeline_mode = #tpu.pipeline_mode<synchronous>, transform_indices = @transform_3, window_bounds = array<i64: 4, 32, 128>}, {pipeline_mode = #tpu.pipeline_mode<synchronous>, transform_indices = @transform_4, window_bounds = array<i64: 4, 1, 128>}, {pipeline_mode = #tpu.pipeline_mode<synchronous>, transform_indices = @transform_5, window_bounds = array<i64: 4, 32, 128>}, {pipeline_mode = #tpu.pipeline_mode<synchronous>, transform_indices = @transform_6, window_bounds = array<i64: 4, 1, 128>}, {pipeline_mode = #tpu.pipeline_mode<synchronous>, transform_indices = @transform_7, window_bounds = array<i64: 4, 32, 128>}, {pipeline_mode = #tpu.pipeline_mode<synchronous>, transform_indices = @transform_8, window_bounds = array<i64: 4, 1, 128>}, {pipeline_mode = #tpu.pipeline_mode<synchronous>, transform_indices = @transform_9, window_bounds = array<i64: 4, 128, 32>}, {pipeline_mode = #tpu.pipeline_mode<synchronous>, transform_indices = @transform_10, window_bounds = array<i64: 1, 32>}, {transform_indices = @transform_11, window_bounds = array<i64: 1, 8, 32>}, {transform_indices = @transform_12, window_bounds = array<i64: 1, 4, 8, 8>}]} {
    %c0_i32 = arith.constant 0 : i32
    %0 = arith.cmpi eq, %arg1, %c0_i32 : i32
    %1 = arith.extui %0 : i1 to i32
    %c0_i32_0 = arith.constant 0 : i32
    %2 = arith.cmpi ne, %1, %c0_i32_0 : i32
    scf.if %2 {
      %c0_105 = arith.constant 0 : index
      %c0_106 = arith.constant 0 : index
      %c0_107 = arith.constant 0 : index
      %166 = vector.load %arg3[%c0_105, %c0_106, %c0_107] : memref<1x8x32xf32, #tpu.memory_space<vmem>>, vector<1x8x32xf32>
      %167 = vector.shape_cast %166 : vector<1x8x32xf32> to vector<8x32xf32>
      %c0_108 = arith.constant 0 : index
      %c0_109 = arith.constant 0 : index
      %c0_110 = arith.constant 0 : index
      %168 = vector.load %arg4[%c0_108, %c0_109, %c0_110] : memref<1x8x32xf32, #tpu.memory_space<vmem>>, vector<1x8x32xf32>
      %169 = vector.shape_cast %168 : vector<1x8x32xf32> to vector<8x32xf32>
      %c0_i32_111 = arith.constant 0 : i32
      %170 = arith.index_cast %c0_i32_111 : i32 to index
      %c0_112 = arith.constant 0 : index
      %c0_113 = arith.constant 0 : index
      %171 = vector.load %arg7[%170, %c0_112, %c0_113] : memref<4x32x128xf32, #tpu.memory_space<vmem>>, vector<1x32x128xf32>
      %172 = vector.shape_cast %171 : vector<1x32x128xf32> to vector<32x128xf32>
      %cst_114 = arith.constant dense<0.000000e+00> : vector<8x128xf32>
      %173 = tpu.matmul %167, %172, %cst_114 {dimension_numbers = #tpu.dot_dimension_numbers<[1], [0], [0], [1], [0, 0, 1, 1], [], []>} : vector<8x32xf32>, vector<32x128xf32>, vector<8x128xf32> -> vector<8x128xf32>
      %174 = arith.index_cast %c0_i32_111 : i32 to index
      %c0_115 = arith.constant 0 : index
      %c0_116 = arith.constant 0 : index
      %175 = vector.load %arg8[%174, %c0_115, %c0_116] : memref<4x1x128xf32, #tpu.memory_space<vmem>>, vector<1x1x128xf32>
      %176 = vector.shape_cast %175 : vector<1x1x128xf32> to vector<1x128xf32>
      %177 = vector.broadcast %176 : vector<1x128xf32> to vector<8x128xf32>
      %178 = arith.addf %173, %177 : vector<8x128xf32>
      %179 = arith.index_cast %c0_i32_111 : i32 to index
      %c0_117 = arith.constant 0 : index
      %c0_118 = arith.constant 0 : index
      %180 = vector.load %arg9[%179, %c0_117, %c0_118] : memref<4x32x128xf32, #tpu.memory_space<vmem>>, vector<1x32x128xf32>
      %181 = vector.shape_cast %180 : vector<1x32x128xf32> to vector<32x128xf32>
      %cst_119 = arith.constant dense<0.000000e+00> : vector<8x128xf32>
      %182 = tpu.matmul %169, %181, %cst_119 {dimension_numbers = #tpu.dot_dimension_numbers<[1], [0], [0], [1], [0, 0, 1, 1], [], []>} : vector<8x32xf32>, vector<32x128xf32>, vector<8x128xf32> -> vector<8x128xf32>
      %183 = arith.index_cast %c0_i32_111 : i32 to index
      %c0_120 = arith.constant 0 : index
      %c0_121 = arith.constant 0 : index
      %184 = vector.load %arg10[%183, %c0_120, %c0_121] : memref<4x1x128xf32, #tpu.memory_space<vmem>>, vector<1x1x128xf32>
      %185 = vector.shape_cast %184 : vector<1x1x128xf32> to vector<1x128xf32>
      %186 = vector.broadcast %185 : vector<1x128xf32> to vector<8x128xf32>
      %187 = arith.addf %182, %186 : vector<8x128xf32>
      %188 = arith.index_cast %c0_i32_111 : i32 to index
      %c0_122 = arith.constant 0 : index
      %c0_123 = arith.constant 0 : index
      %189 = vector.load %arg15[%188, %c0_122, %c0_123] : memref<4x8x128xf32, #tpu.memory_space<vmem>>, vector<1x8x128xf32>
      %190 = vector.shape_cast %189 : vector<1x8x128xf32> to vector<8x128xf32>
      %191 = vector.shape_cast %178 : vector<8x128xf32> to vector<1x8x128xf32>
      tpu.vector_store %arg15[%188, %c0_122, %c0_123], %191 {strides = array<i32>} : memref<4x8x128xf32, #tpu.memory_space<vmem>>, vector<1x8x128xf32>,
      %192 = arith.index_cast %c0_i32_111 : i32 to index
      %c0_124 = arith.constant 0 : index
      %c0_125 = arith.constant 0 : index
      %193 = vector.load %arg16[%192, %c0_124, %c0_125] : memref<4x8x128xf32, #tpu.memory_space<vmem>>, vector<1x8x128xf32>
      %194 = vector.shape_cast %193 : vector<1x8x128xf32> to vector<8x128xf32>
      %195 = vector.shape_cast %187 : vector<8x128xf32> to vector<1x8x128xf32>
      tpu.vector_store %arg16[%192, %c0_124, %c0_125], %195 {strides = array<i32>} : memref<4x8x128xf32, #tpu.memory_space<vmem>>, vector<1x8x128xf32>,
      %c1_i32_126 = arith.constant 1 : i32
      %196 = arith.index_cast %c1_i32_126 : i32 to index
      %c0_127 = arith.constant 0 : index
      %c0_128 = arith.constant 0 : index
      %197 = vector.load %arg7[%196, %c0_127, %c0_128] : memref<4x32x128xf32, #tpu.memory_space<vmem>>, vector<1x32x128xf32>
      %198 = vector.shape_cast %197 : vector<1x32x128xf32> to vector<32x128xf32>
      %cst_129 = arith.constant dense<0.000000e+00> : vector<8x128xf32>
      %199 = tpu.matmul %167, %198, %cst_129 {dimension_numbers = #tpu.dot_dimension_numbers<[1], [0], [0], [1], [0, 0, 1, 1], [], []>} : vector<8x32xf32>, vector<32x128xf32>, vector<8x128xf32> -> vector<8x128xf32>
      %200 = arith.index_cast %c1_i32_126 : i32 to index
      %c0_130 = arith.constant 0 : index
      %c0_131 = arith.constant 0 : index
      %201 = vector.load %arg8[%200, %c0_130, %c0_131] : memref<4x1x128xf32, #tpu.memory_space<vmem>>, vector<1x1x128xf32>
      %202 = vector.shape_cast %201 : vector<1x1x128xf32> to vector<1x128xf32>
      %203 = vector.broadcast %202 : vector<1x128xf32> to vector<8x128xf32>
      %204 = arith.addf %199, %203 : vector<8x128xf32>
      %205 = arith.index_cast %c1_i32_126 : i32 to index
      %c0_132 = arith.constant 0 : index
      %c0_133 = arith.constant 0 : index
      %206 = vector.load %arg9[%205, %c0_132, %c0_133] : memref<4x32x128xf32, #tpu.memory_space<vmem>>, vector<1x32x128xf32>
      %207 = vector.shape_cast %206 : vector<1x32x128xf32> to vector<32x128xf32>
      %cst_134 = arith.constant dense<0.000000e+00> : vector<8x128xf32>
      %208 = tpu.matmul %169, %207, %cst_134 {dimension_numbers = #tpu.dot_dimension_numbers<[1], [0], [0], [1], [0, 0, 1, 1], [], []>} : vector<8x32xf32>, vector<32x128xf32>, vector<8x128xf32> -> vector<8x128xf32>
      %209 = arith.index_cast %c1_i32_126 : i32 to index
      %c0_135 = arith.constant 0 : index
      %c0_136 = arith.constant 0 : index
      %210 = vector.load %arg10[%209, %c0_135, %c0_136] : memref<4x1x128xf32, #tpu.memory_space<vmem>>, vector<1x1x128xf32>
      %211 = vector.shape_cast %210 : vector<1x1x128xf32> to vector<1x128xf32>
      %212 = vector.broadcast %211 : vector<1x128xf32> to vector<8x128xf32>
      %213 = arith.addf %208, %212 : vector<8x128xf32>
      %214 = arith.index_cast %c1_i32_126 : i32 to index
      %c0_137 = arith.constant 0 : index
      %c0_138 = arith.constant 0 : index
      %215 = vector.load %arg15[%214, %c0_137, %c0_138] : memref<4x8x128xf32, #tpu.memory_space<vmem>>, vector<1x8x128xf32>
      %216 = vector.shape_cast %215 : vector<1x8x128xf32> to vector<8x128xf32>
      %217 = vector.shape_cast %204 : vector<8x128xf32> to vector<1x8x128xf32>
      tpu.vector_store %arg15[%214, %c0_137, %c0_138], %217 {strides = array<i32>} : memref<4x8x128xf32, #tpu.memory_space<vmem>>, vector<1x8x128xf32>,
      %218 = arith.index_cast %c1_i32_126 : i32 to index
      %c0_139 = arith.constant 0 : index
      %c0_140 = arith.constant 0 : index
      %219 = vector.load %arg16[%218, %c0_139, %c0_140] : memref<4x8x128xf32, #tpu.memory_space<vmem>>, vector<1x8x128xf32>
      %220 = vector.shape_cast %219 : vector<1x8x128xf32> to vector<8x128xf32>
      %221 = vector.shape_cast %213 : vector<8x128xf32> to vector<1x8x128xf32>
      tpu.vector_store %arg16[%218, %c0_139, %c0_140], %221 {strides = array<i32>} : memref<4x8x128xf32, #tpu.memory_space<vmem>>, vector<1x8x128xf32>,
      %c2_i32_141 = arith.constant 2 : i32
      %222 = arith.index_cast %c2_i32_141 : i32 to index
      %c0_142 = arith.constant 0 : index
      %c0_143 = arith.constant 0 : index
      %223 = vector.load %arg7[%222, %c0_142, %c0_143] : memref<4x32x128xf32, #tpu.memory_space<vmem>>, vector<1x32x128xf32>
      %224 = vector.shape_cast %223 : vector<1x32x128xf32> to vector<32x128xf32>
      %cst_144 = arith.constant dense<0.000000e+00> : vector<8x128xf32>
      %225 = tpu.matmul %167, %224, %cst_144 {dimension_numbers = #tpu.dot_dimension_numbers<[1], [0], [0], [1], [0, 0, 1, 1], [], []>} : vector<8x32xf32>, vector<32x128xf32>, vector<8x128xf32> -> vector<8x128xf32>
      %226 = arith.index_cast %c2_i32_141 : i32 to index
      %c0_145 = arith.constant 0 : index
      %c0_146 = arith.constant 0 : index
      %227 = vector.load %arg8[%226, %c0_145, %c0_146] : memref<4x1x128xf32, #tpu.memory_space<vmem>>, vector<1x1x128xf32>
      %228 = vector.shape_cast %227 : vector<1x1x128xf32> to vector<1x128xf32>
      %229 = vector.broadcast %228 : vector<1x128xf32> to vector<8x128xf32>
      %230 = arith.addf %225, %229 : vector<8x128xf32>
      %231 = arith.index_cast %c2_i32_141 : i32 to index
      %c0_147 = arith.constant 0 : index
      %c0_148 = arith.constant 0 : index
      %232 = vector.load %arg9[%231, %c0_147, %c0_148] : memref<4x32x128xf32, #tpu.memory_space<vmem>>, vector<1x32x128xf32>
      %233 = vector.shape_cast %232 : vector<1x32x128xf32> to vector<32x128xf32>
      %cst_149 = arith.constant dense<0.000000e+00> : vector<8x128xf32>
      %234 = tpu.matmul %169, %233, %cst_149 {dimension_numbers = #tpu.dot_dimension_numbers<[1], [0], [0], [1], [0, 0, 1, 1], [], []>} : vector<8x32xf32>, vector<32x128xf32>, vector<8x128xf32> -> vector<8x128xf32>
      %235 = arith.index_cast %c2_i32_141 : i32 to index
      %c0_150 = arith.constant 0 : index
      %c0_151 = arith.constant 0 : index
      %236 = vector.load %arg10[%235, %c0_150, %c0_151] : memref<4x1x128xf32, #tpu.memory_space<vmem>>, vector<1x1x128xf32>
      %237 = vector.shape_cast %236 : vector<1x1x128xf32> to vector<1x128xf32>
      %238 = vector.broadcast %237 : vector<1x128xf32> to vector<8x128xf32>
      %239 = arith.addf %234, %238 : vector<8x128xf32>
      %240 = arith.index_cast %c2_i32_141 : i32 to index
      %c0_152 = arith.constant 0 : index
      %c0_153 = arith.constant 0 : index
      %241 = vector.load %arg15[%240, %c0_152, %c0_153] : memref<4x8x128xf32, #tpu.memory_space<vmem>>, vector<1x8x128xf32>
      %242 = vector.shape_cast %241 : vector<1x8x128xf32> to vector<8x128xf32>
      %243 = vector.shape_cast %230 : vector<8x128xf32> to vector<1x8x128xf32>
      tpu.vector_store %arg15[%240, %c0_152, %c0_153], %243 {strides = array<i32>} : memref<4x8x128xf32, #tpu.memory_space<vmem>>, vector<1x8x128xf32>,
      %244 = arith.index_cast %c2_i32_141 : i32 to index
      %c0_154 = arith.constant 0 : index
      %c0_155 = arith.constant 0 : index
      %245 = vector.load %arg16[%244, %c0_154, %c0_155] : memref<4x8x128xf32, #tpu.memory_space<vmem>>, vector<1x8x128xf32>
      %246 = vector.shape_cast %245 : vector<1x8x128xf32> to vector<8x128xf32>
      %247 = vector.shape_cast %239 : vector<8x128xf32> to vector<1x8x128xf32>
      tpu.vector_store %arg16[%244, %c0_154, %c0_155], %247 {strides = array<i32>} : memref<4x8x128xf32, #tpu.memory_space<vmem>>, vector<1x8x128xf32>,
      %c3_i32_156 = arith.constant 3 : i32
      %248 = arith.index_cast %c3_i32_156 : i32 to index
      %c0_157 = arith.constant 0 : index
      %c0_158 = arith.constant 0 : index
      %249 = vector.load %arg7[%248, %c0_157, %c0_158] : memref<4x32x128xf32, #tpu.memory_space<vmem>>, vector<1x32x128xf32>
      %250 = vector.shape_cast %249 : vector<1x32x128xf32> to vector<32x128xf32>
      %cst_159 = arith.constant dense<0.000000e+00> : vector<8x128xf32>
      %251 = tpu.matmul %167, %250, %cst_159 {dimension_numbers = #tpu.dot_dimension_numbers<[1], [0], [0], [1], [0, 0, 1, 1], [], []>} : vector<8x32xf32>, vector<32x128xf32>, vector<8x128xf32> -> vector<8x128xf32>
      %252 = arith.index_cast %c3_i32_156 : i32 to index
      %c0_160 = arith.constant 0 : index
      %c0_161 = arith.constant 0 : index
      %253 = vector.load %arg8[%252, %c0_160, %c0_161] : memref<4x1x128xf32, #tpu.memory_space<vmem>>, vector<1x1x128xf32>
      %254 = vector.shape_cast %253 : vector<1x1x128xf32> to vector<1x128xf32>
      %255 = vector.broadcast %254 : vector<1x128xf32> to vector<8x128xf32>
      %256 = arith.addf %251, %255 : vector<8x128xf32>
      %257 = arith.index_cast %c3_i32_156 : i32 to index
      %c0_162 = arith.constant 0 : index
      %c0_163 = arith.constant 0 : index
      %258 = vector.load %arg9[%257, %c0_162, %c0_163] : memref<4x32x128xf32, #tpu.memory_space<vmem>>, vector<1x32x128xf32>
      %259 = vector.shape_cast %258 : vector<1x32x128xf32> to vector<32x128xf32>
      %cst_164 = arith.constant dense<0.000000e+00> : vector<8x128xf32>
      %260 = tpu.matmul %169, %259, %cst_164 {dimension_numbers = #tpu.dot_dimension_numbers<[1], [0], [0], [1], [0, 0, 1, 1], [], []>} : vector<8x32xf32>, vector<32x128xf32>, vector<8x128xf32> -> vector<8x128xf32>
      %261 = arith.index_cast %c3_i32_156 : i32 to index
      %c0_165 = arith.constant 0 : index
      %c0_166 = arith.constant 0 : index
      %262 = vector.load %arg10[%261, %c0_165, %c0_166] : memref<4x1x128xf32, #tpu.memory_space<vmem>>, vector<1x1x128xf32>
      %263 = vector.shape_cast %262 : vector<1x1x128xf32> to vector<1x128xf32>
      %264 = vector.broadcast %263 : vector<1x128xf32> to vector<8x128xf32>
      %265 = arith.addf %260, %264 : vector<8x128xf32>
      %266 = arith.index_cast %c3_i32_156 : i32 to index
      %c0_167 = arith.constant 0 : index
      %c0_168 = arith.constant 0 : index
      %267 = vector.load %arg15[%266, %c0_167, %c0_168] : memref<4x8x128xf32, #tpu.memory_space<vmem>>, vector<1x8x128xf32>
      %268 = vector.shape_cast %267 : vector<1x8x128xf32> to vector<8x128xf32>
      %269 = vector.shape_cast %256 : vector<8x128xf32> to vector<1x8x128xf32>
      tpu.vector_store %arg15[%266, %c0_167, %c0_168], %269 {strides = array<i32>} : memref<4x8x128xf32, #tpu.memory_space<vmem>>, vector<1x8x128xf32>,
      %270 = arith.index_cast %c3_i32_156 : i32 to index
      %c0_169 = arith.constant 0 : index
      %c0_170 = arith.constant 0 : index
      %271 = vector.load %arg16[%270, %c0_169, %c0_170] : memref<4x8x128xf32, #tpu.memory_space<vmem>>, vector<1x8x128xf32>
      %272 = vector.shape_cast %271 : vector<1x8x128xf32> to vector<8x128xf32>
      %273 = vector.shape_cast %265 : vector<8x128xf32> to vector<1x8x128xf32>
      tpu.vector_store %arg16[%270, %c0_169, %c0_170], %273 {strides = array<i32>} : memref<4x8x128xf32, #tpu.memory_space<vmem>>, vector<1x8x128xf32>,
      %c4_i32_171 = arith.constant 4 : i32
    } else {
    }
    %c0 = arith.constant 0 : index
    %c0_1 = arith.constant 0 : index
    %c0_2 = arith.constant 0 : index
    %3 = vector.load %arg2[%c0, %c0_1, %c0_2] : memref<1x8x32xf32, #tpu.memory_space<vmem>>, vector<1x8x32xf32>
    %4 = vector.shape_cast %3 : vector<1x8x32xf32> to vector<8x32xf32>
    %cst = arith.constant 0.000000e+00 : f32
    %5 = vector.broadcast %cst : f32 to vector<8x32xf32>
    %c0_3 = arith.constant 0 : index
    %c0_4 = arith.constant 0 : index
    %6 = vector.load %arg17[%c0_3, %c0_4] : memref<8x32xf32, #tpu.memory_space<vmem>>, vector<8x32xf32>
    tpu.vector_store %arg17[%c0_3, %c0_4], %5 {strides = array<i32>} : memref<8x32xf32, #tpu.memory_space<vmem>>, vector<8x32xf32>,
    %c0_i32_5 = arith.constant 0 : i32
    %7 = arith.index_cast %c0_i32_5 : i32 to index
    %c0_6 = arith.constant 0 : index
    %c0_7 = arith.constant 0 : index
    %8 = vector.load %arg5[%7, %c0_6, %c0_7] : memref<4x32x128xf32, #tpu.memory_space<vmem>>, vector<1x32x128xf32>
    %9 = vector.shape_cast %8 : vector<1x32x128xf32> to vector<32x128xf32>
    %cst_8 = arith.constant dense<0.000000e+00> : vector<8x128xf32>
    %10 = tpu.matmul %4, %9, %cst_8 {dimension_numbers = #tpu.dot_dimension_numbers<[1], [0], [0], [1], [0, 0, 1, 1], [], []>} : vector<8x32xf32>, vector<32x128xf32>, vector<8x128xf32> -> vector<8x128xf32>
    %11 = arith.index_cast %c0_i32_5 : i32 to index
    %c0_9 = arith.constant 0 : index
    %c0_10 = arith.constant 0 : index
    %12 = vector.load %arg6[%11, %c0_9, %c0_10] : memref<4x1x128xf32, #tpu.memory_space<vmem>>, vector<1x1x128xf32>
    %13 = vector.shape_cast %12 : vector<1x1x128xf32> to vector<1x128xf32>
    %14 = vector.broadcast %13 : vector<1x128xf32> to vector<8x128xf32>
    %15 = arith.addf %10, %14 : vector<8x128xf32>
    %16 = arith.index_cast %c0_i32_5 : i32 to index
    %c0_11 = arith.constant 0 : index
    %c0_12 = arith.constant 0 : index
    %17 = vector.load %arg15[%16, %c0_11, %c0_12] : memref<4x8x128xf32, #tpu.memory_space<vmem>>, vector<1x8x128xf32>
    %18 = vector.shape_cast %17 : vector<1x8x128xf32> to vector<8x128xf32>
    %cst_13 = arith.constant dense<0.000000e+00> : vector<8x8xf32>
    %19 = tpu.matmul %15, %18, %cst_13 {dimension_numbers = #tpu.dot_dimension_numbers<[1], [1], [0], [0], [0, 0, 1, 0], [], []>} : vector<8x128xf32>, vector<8x128xf32>, vector<8x8xf32> -> vector<8x8xf32>
    %cst_14 = arith.constant dense<0xFF800000> : vector<8xf32>
    %20 = vector.multi_reduction <maximumf>, %19, %cst_14 [1] : vector<8x8xf32> to vector<8xf32>
    %21 = vector.shape_cast %20 : vector<8xf32> to vector<8x1xf32>
    %22 = vector.broadcast %21 : vector<8x1xf32> to vector<8x8xf32>
    %23 = arith.subf %19, %22 : vector<8x8xf32>
    %24 = math.exp %23 : vector<8x8xf32>
    %cst_15 = arith.constant dense<0.000000e+00> : vector<8xf32>
    %25 = vector.multi_reduction <add>, %24, %cst_15 [1] : vector<8x8xf32> to vector<8xf32>
    %26 = vector.shape_cast %25 : vector<8xf32> to vector<8x1xf32>
    %27 = tpu.reciprocal %26 : vector<8x1xf32> -> vector<8x1xf32>
    %28 = vector.broadcast %27 : vector<8x1xf32> to vector<8x8xf32>
    %29 = arith.mulf %24, %28 : vector<8x8xf32>
    %c0_16 = arith.constant 0 : index
    %30 = arith.index_cast %c0_i32_5 : i32 to index
    %c0_17 = arith.constant 0 : index
    %c0_18 = arith.constant 0 : index
    %31 = vector.load %arg14[%c0_16, %30, %c0_17, %c0_18] : memref<1x4x8x8xf32, #tpu.memory_space<vmem>>, vector<1x1x8x8xf32>
    %32 = vector.shape_cast %31 : vector<1x1x8x8xf32> to vector<8x8xf32>
    %33 = vector.shape_cast %29 : vector<8x8xf32> to vector<1x1x8x8xf32>
    tpu.vector_store %arg14[%c0_16, %30, %c0_17, %c0_18], %33 {strides = array<i32>} : memref<1x4x8x8xf32, #tpu.memory_space<vmem>>, vector<1x1x8x8xf32>,
    %34 = arith.index_cast %c0_i32_5 : i32 to index
    %c0_19 = arith.constant 0 : index
    %c0_20 = arith.constant 0 : index
    %35 = vector.load %arg16[%34, %c0_19, %c0_20] : memref<4x8x128xf32, #tpu.memory_space<vmem>>, vector<1x8x128xf32>
    %36 = vector.shape_cast %35 : vector<1x8x128xf32> to vector<8x128xf32>
    %cst_21 = arith.constant dense<0.000000e+00> : vector<8x128xf32>
    %37 = tpu.matmul %29, %36, %cst_21 {dimension_numbers = #tpu.dot_dimension_numbers<[1], [0], [0], [1], [0, 0, 1, 1], [], []>} : vector<8x8xf32>, vector<8x128xf32>, vector<8x128xf32> -> vector<8x128xf32>
    %c0_22 = arith.constant 0 : index
    %c0_23 = arith.constant 0 : index
    %38 = vector.load %arg17[%c0_22, %c0_23] : memref<8x32xf32, #tpu.memory_space<vmem>>, vector<8x32xf32>
    %39 = arith.index_cast %c0_i32_5 : i32 to index
    %c0_24 = arith.constant 0 : index
    %c0_25 = arith.constant 0 : index
    %40 = vector.load %arg11[%39, %c0_24, %c0_25] : memref<4x128x32xf32, #tpu.memory_space<vmem>>, vector<1x128x32xf32>
    %41 = vector.shape_cast %40 : vector<1x128x32xf32> to vector<128x32xf32>
    %cst_26 = arith.constant dense<0.000000e+00> : vector<8x32xf32>
    %42 = tpu.matmul %37, %41, %cst_26 {dimension_numbers = #tpu.dot_dimension_numbers<[1], [0], [0], [1], [0, 0, 1, 1], [], []>} : vector<8x128xf32>, vector<128x32xf32>, vector<8x32xf32> -> vector<8x32xf32>
    %43 = arith.addf %38, %42 : vector<8x32xf32>
    %c0_27 = arith.constant 0 : index
    %c0_28 = arith.constant 0 : index
    %44 = vector.load %arg17[%c0_27, %c0_28] : memref<8x32xf32, #tpu.memory_space<vmem>>, vector<8x32xf32>
    tpu.vector_store %arg17[%c0_27, %c0_28], %43 {strides = array<i32>} : memref<8x32xf32, #tpu.memory_space<vmem>>, vector<8x32xf32>,
    %c1_i32 = arith.constant 1 : i32
    %45 = arith.index_cast %c1_i32 : i32 to index
    %c0_29 = arith.constant 0 : index
    %c0_30 = arith.constant 0 : index
    %46 = vector.load %arg5[%45, %c0_29, %c0_30] : memref<4x32x128xf32, #tpu.memory_space<vmem>>, vector<1x32x128xf32>
    %47 = vector.shape_cast %46 : vector<1x32x128xf32> to vector<32x128xf32>
    %cst_31 = arith.constant dense<0.000000e+00> : vector<8x128xf32>
    %48 = tpu.matmul %4, %47, %cst_31 {dimension_numbers = #tpu.dot_dimension_numbers<[1], [0], [0], [1], [0, 0, 1, 1], [], []>} : vector<8x32xf32>, vector<32x128xf32>, vector<8x128xf32> -> vector<8x128xf32>
    %49 = arith.index_cast %c1_i32 : i32 to index
    %c0_32 = arith.constant 0 : index
    %c0_33 = arith.constant 0 : index
    %50 = vector.load %arg6[%49, %c0_32, %c0_33] : memref<4x1x128xf32, #tpu.memory_space<vmem>>, vector<1x1x128xf32>
    %51 = vector.shape_cast %50 : vector<1x1x128xf32> to vector<1x128xf32>
    %52 = vector.broadcast %51 : vector<1x128xf32> to vector<8x128xf32>
    %53 = arith.addf %48, %52 : vector<8x128xf32>
    %54 = arith.index_cast %c1_i32 : i32 to index
    %c0_34 = arith.constant 0 : index
    %c0_35 = arith.constant 0 : index
    %55 = vector.load %arg15[%54, %c0_34, %c0_35] : memref<4x8x128xf32, #tpu.memory_space<vmem>>, vector<1x8x128xf32>
    %56 = vector.shape_cast %55 : vector<1x8x128xf32> to vector<8x128xf32>
    %cst_36 = arith.constant dense<0.000000e+00> : vector<8x8xf32>
    %57 = tpu.matmul %53, %56, %cst_36 {dimension_numbers = #tpu.dot_dimension_numbers<[1], [1], [0], [0], [0, 0, 1, 0], [], []>} : vector<8x128xf32>, vector<8x128xf32>, vector<8x8xf32> -> vector<8x8xf32>
    %cst_37 = arith.constant dense<0xFF800000> : vector<8xf32>
    %58 = vector.multi_reduction <maximumf>, %57, %cst_37 [1] : vector<8x8xf32> to vector<8xf32>
    %59 = vector.shape_cast %58 : vector<8xf32> to vector<8x1xf32>
    %60 = vector.broadcast %59 : vector<8x1xf32> to vector<8x8xf32>
    %61 = arith.subf %57, %60 : vector<8x8xf32>
    %62 = math.exp %61 : vector<8x8xf32>
    %cst_38 = arith.constant dense<0.000000e+00> : vector<8xf32>
    %63 = vector.multi_reduction <add>, %62, %cst_38 [1] : vector<8x8xf32> to vector<8xf32>
    %64 = vector.shape_cast %63 : vector<8xf32> to vector<8x1xf32>
    %65 = tpu.reciprocal %64 : vector<8x1xf32> -> vector<8x1xf32>
    %66 = vector.broadcast %65 : vector<8x1xf32> to vector<8x8xf32>
    %67 = arith.mulf %62, %66 : vector<8x8xf32>
    %c0_39 = arith.constant 0 : index
    %68 = arith.index_cast %c1_i32 : i32 to index
    %c0_40 = arith.constant 0 : index
    %c0_41 = arith.constant 0 : index
    %69 = vector.load %arg14[%c0_39, %68, %c0_40, %c0_41] : memref<1x4x8x8xf32, #tpu.memory_space<vmem>>, vector<1x1x8x8xf32>
    %70 = vector.shape_cast %69 : vector<1x1x8x8xf32> to vector<8x8xf32>
    %71 = vector.shape_cast %67 : vector<8x8xf32> to vector<1x1x8x8xf32>
    tpu.vector_store %arg14[%c0_39, %68, %c0_40, %c0_41], %71 {strides = array<i32>} : memref<1x4x8x8xf32, #tpu.memory_space<vmem>>, vector<1x1x8x8xf32>,
    %72 = arith.index_cast %c1_i32 : i32 to index
    %c0_42 = arith.constant 0 : index
    %c0_43 = arith.constant 0 : index
    %73 = vector.load %arg16[%72, %c0_42, %c0_43] : memref<4x8x128xf32, #tpu.memory_space<vmem>>, vector<1x8x128xf32>
    %74 = vector.shape_cast %73 : vector<1x8x128xf32> to vector<8x128xf32>
    %cst_44 = arith.constant dense<0.000000e+00> : vector<8x128xf32>
    %75 = tpu.matmul %67, %74, %cst_44 {dimension_numbers = #tpu.dot_dimension_numbers<[1], [0], [0], [1], [0, 0, 1, 1], [], []>} : vector<8x8xf32>, vector<8x128xf32>, vector<8x128xf32> -> vector<8x128xf32>
    %c0_45 = arith.constant 0 : index
    %c0_46 = arith.constant 0 : index
    %76 = vector.load %arg17[%c0_45, %c0_46] : memref<8x32xf32, #tpu.memory_space<vmem>>, vector<8x32xf32>
    %77 = arith.index_cast %c1_i32 : i32 to index
    %c0_47 = arith.constant 0 : index
    %c0_48 = arith.constant 0 : index
    %78 = vector.load %arg11[%77, %c0_47, %c0_48] : memref<4x128x32xf32, #tpu.memory_space<vmem>>, vector<1x128x32xf32>
    %79 = vector.shape_cast %78 : vector<1x128x32xf32> to vector<128x32xf32>
    %cst_49 = arith.constant dense<0.000000e+00> : vector<8x32xf32>
    %80 = tpu.matmul %75, %79, %cst_49 {dimension_numbers = #tpu.dot_dimension_numbers<[1], [0], [0], [1], [0, 0, 1, 1], [], []>} : vector<8x128xf32>, vector<128x32xf32>, vector<8x32xf32> -> vector<8x32xf32>
    %81 = arith.addf %76, %80 : vector<8x32xf32>
    %c0_50 = arith.constant 0 : index
    %c0_51 = arith.constant 0 : index
    %82 = vector.load %arg17[%c0_50, %c0_51] : memref<8x32xf32, #tpu.memory_space<vmem>>, vector<8x32xf32>
    tpu.vector_store %arg17[%c0_50, %c0_51], %81 {strides = array<i32>} : memref<8x32xf32, #tpu.memory_space<vmem>>, vector<8x32xf32>,
    %c2_i32 = arith.constant 2 : i32
    %83 = arith.index_cast %c2_i32 : i32 to index
    %c0_52 = arith.constant 0 : index
    %c0_53 = arith.constant 0 : index
    %84 = vector.load %arg5[%83, %c0_52, %c0_53] : memref<4x32x128xf32, #tpu.memory_space<vmem>>, vector<1x32x128xf32>
    %85 = vector.shape_cast %84 : vector<1x32x128xf32> to vector<32x128xf32>
    %cst_54 = arith.constant dense<0.000000e+00> : vector<8x128xf32>
    %86 = tpu.matmul %4, %85, %cst_54 {dimension_numbers = #tpu.dot_dimension_numbers<[1], [0], [0], [1], [0, 0, 1, 1], [], []>} : vector<8x32xf32>, vector<32x128xf32>, vector<8x128xf32> -> vector<8x128xf32>
    %87 = arith.index_cast %c2_i32 : i32 to index
    %c0_55 = arith.constant 0 : index
    %c0_56 = arith.constant 0 : index
    %88 = vector.load %arg6[%87, %c0_55, %c0_56] : memref<4x1x128xf32, #tpu.memory_space<vmem>>, vector<1x1x128xf32>
    %89 = vector.shape_cast %88 : vector<1x1x128xf32> to vector<1x128xf32>
    %90 = vector.broadcast %89 : vector<1x128xf32> to vector<8x128xf32>
    %91 = arith.addf %86, %90 : vector<8x128xf32>
    %92 = arith.index_cast %c2_i32 : i32 to index
    %c0_57 = arith.constant 0 : index
    %c0_58 = arith.constant 0 : index
    %93 = vector.load %arg15[%92, %c0_57, %c0_58] : memref<4x8x128xf32, #tpu.memory_space<vmem>>, vector<1x8x128xf32>
    %94 = vector.shape_cast %93 : vector<1x8x128xf32> to vector<8x128xf32>
    %cst_59 = arith.constant dense<0.000000e+00> : vector<8x8xf32>
    %95 = tpu.matmul %91, %94, %cst_59 {dimension_numbers = #tpu.dot_dimension_numbers<[1], [1], [0], [0], [0, 0, 1, 0], [], []>} : vector<8x128xf32>, vector<8x128xf32>, vector<8x8xf32> -> vector<8x8xf32>
    %cst_60 = arith.constant dense<0xFF800000> : vector<8xf32>
    %96 = vector.multi_reduction <maximumf>, %95, %cst_60 [1] : vector<8x8xf32> to vector<8xf32>
    %97 = vector.shape_cast %96 : vector<8xf32> to vector<8x1xf32>
    %98 = vector.broadcast %97 : vector<8x1xf32> to vector<8x8xf32>
    %99 = arith.subf %95, %98 : vector<8x8xf32>
    %100 = math.exp %99 : vector<8x8xf32>
    %cst_61 = arith.constant dense<0.000000e+00> : vector<8xf32>
    %101 = vector.multi_reduction <add>, %100, %cst_61 [1] : vector<8x8xf32> to vector<8xf32>
    %102 = vector.shape_cast %101 : vector<8xf32> to vector<8x1xf32>
    %103 = tpu.reciprocal %102 : vector<8x1xf32> -> vector<8x1xf32>
    %104 = vector.broadcast %103 : vector<8x1xf32> to vector<8x8xf32>
    %105 = arith.mulf %100, %104 : vector<8x8xf32>
    %c0_62 = arith.constant 0 : index
    %106 = arith.index_cast %c2_i32 : i32 to index
    %c0_63 = arith.constant 0 : index
    %c0_64 = arith.constant 0 : index
    %107 = vector.load %arg14[%c0_62, %106, %c0_63, %c0_64] : memref<1x4x8x8xf32, #tpu.memory_space<vmem>>, vector<1x1x8x8xf32>
    %108 = vector.shape_cast %107 : vector<1x1x8x8xf32> to vector<8x8xf32>
    %109 = vector.shape_cast %105 : vector<8x8xf32> to vector<1x1x8x8xf32>
    tpu.vector_store %arg14[%c0_62, %106, %c0_63, %c0_64], %109 {strides = array<i32>} : memref<1x4x8x8xf32, #tpu.memory_space<vmem>>, vector<1x1x8x8xf32>,
    %110 = arith.index_cast %c2_i32 : i32 to index
    %c0_65 = arith.constant 0 : index
    %c0_66 = arith.constant 0 : index
    %111 = vector.load %arg16[%110, %c0_65, %c0_66] : memref<4x8x128xf32, #tpu.memory_space<vmem>>, vector<1x8x128xf32>
    %112 = vector.shape_cast %111 : vector<1x8x128xf32> to vector<8x128xf32>
    %cst_67 = arith.constant dense<0.000000e+00> : vector<8x128xf32>
    %113 = tpu.matmul %105, %112, %cst_67 {dimension_numbers = #tpu.dot_dimension_numbers<[1], [0], [0], [1], [0, 0, 1, 1], [], []>} : vector<8x8xf32>, vector<8x128xf32>, vector<8x128xf32> -> vector<8x128xf32>
    %c0_68 = arith.constant 0 : index
    %c0_69 = arith.constant 0 : index
    %114 = vector.load %arg17[%c0_68, %c0_69] : memref<8x32xf32, #tpu.memory_space<vmem>>, vector<8x32xf32>
    %115 = arith.index_cast %c2_i32 : i32 to index
    %c0_70 = arith.constant 0 : index
    %c0_71 = arith.constant 0 : index
    %116 = vector.load %arg11[%115, %c0_70, %c0_71] : memref<4x128x32xf32, #tpu.memory_space<vmem>>, vector<1x128x32xf32>
    %117 = vector.shape_cast %116 : vector<1x128x32xf32> to vector<128x32xf32>
    %cst_72 = arith.constant dense<0.000000e+00> : vector<8x32xf32>
    %118 = tpu.matmul %113, %117, %cst_72 {dimension_numbers = #tpu.dot_dimension_numbers<[1], [0], [0], [1], [0, 0, 1, 1], [], []>} : vector<8x128xf32>, vector<128x32xf32>, vector<8x32xf32> -> vector<8x32xf32>
    %119 = arith.addf %114, %118 : vector<8x32xf32>
    %c0_73 = arith.constant 0 : index
    %c0_74 = arith.constant 0 : index
    %120 = vector.load %arg17[%c0_73, %c0_74] : memref<8x32xf32, #tpu.memory_space<vmem>>, vector<8x32xf32>
    tpu.vector_store %arg17[%c0_73, %c0_74], %119 {strides = array<i32>} : memref<8x32xf32, #tpu.memory_space<vmem>>, vector<8x32xf32>,
    %c3_i32 = arith.constant 3 : i32
    %121 = arith.index_cast %c3_i32 : i32 to index
    %c0_75 = arith.constant 0 : index
    %c0_76 = arith.constant 0 : index
    %122 = vector.load %arg5[%121, %c0_75, %c0_76] : memref<4x32x128xf32, #tpu.memory_space<vmem>>, vector<1x32x128xf32>
    %123 = vector.shape_cast %122 : vector<1x32x128xf32> to vector<32x128xf32>
    %cst_77 = arith.constant dense<0.000000e+00> : vector<8x128xf32>
    %124 = tpu.matmul %4, %123, %cst_77 {dimension_numbers = #tpu.dot_dimension_numbers<[1], [0], [0], [1], [0, 0, 1, 1], [], []>} : vector<8x32xf32>, vector<32x128xf32>, vector<8x128xf32> -> vector<8x128xf32>
    %125 = arith.index_cast %c3_i32 : i32 to index
    %c0_78 = arith.constant 0 : index
    %c0_79 = arith.constant 0 : index
    %126 = vector.load %arg6[%125, %c0_78, %c0_79] : memref<4x1x128xf32, #tpu.memory_space<vmem>>, vector<1x1x128xf32>
    %127 = vector.shape_cast %126 : vector<1x1x128xf32> to vector<1x128xf32>
    %128 = vector.broadcast %127 : vector<1x128xf32> to vector<8x128xf32>
    %129 = arith.addf %124, %128 : vector<8x128xf32>
    %130 = arith.index_cast %c3_i32 : i32 to index
    %c0_80 = arith.constant 0 : index
    %c0_81 = arith.constant 0 : index
    %131 = vector.load %arg15[%130, %c0_80, %c0_81] : memref<4x8x128xf32, #tpu.memory_space<vmem>>, vector<1x8x128xf32>
    %132 = vector.shape_cast %131 : vector<1x8x128xf32> to vector<8x128xf32>
    %cst_82 = arith.constant dense<0.000000e+00> : vector<8x8xf32>
    %133 = tpu.matmul %129, %132, %cst_82 {dimension_numbers = #tpu.dot_dimension_numbers<[1], [1], [0], [0], [0, 0, 1, 0], [], []>} : vector<8x128xf32>, vector<8x128xf32>, vector<8x8xf32> -> vector<8x8xf32>
    %cst_83 = arith.constant dense<0xFF800000> : vector<8xf32>
    %134 = vector.multi_reduction <maximumf>, %133, %cst_83 [1] : vector<8x8xf32> to vector<8xf32>
    %135 = vector.shape_cast %134 : vector<8xf32> to vector<8x1xf32>
    %136 = vector.broadcast %135 : vector<8x1xf32> to vector<8x8xf32>
    %137 = arith.subf %133, %136 : vector<8x8xf32>
    %138 = math.exp %137 : vector<8x8xf32>
    %cst_84 = arith.constant dense<0.000000e+00> : vector<8xf32>
    %139 = vector.multi_reduction <add>, %138, %cst_84 [1] : vector<8x8xf32> to vector<8xf32>
    %140 = vector.shape_cast %139 : vector<8xf32> to vector<8x1xf32>
    %141 = tpu.reciprocal %140 : vector<8x1xf32> -> vector<8x1xf32>
    %142 = vector.broadcast %141 : vector<8x1xf32> to vector<8x8xf32>
    %143 = arith.mulf %138, %142 : vector<8x8xf32>
    %c0_85 = arith.constant 0 : index
    %144 = arith.index_cast %c3_i32 : i32 to index
    %c0_86 = arith.constant 0 : index
    %c0_87 = arith.constant 0 : index
    %145 = vector.load %arg14[%c0_85, %144, %c0_86, %c0_87] : memref<1x4x8x8xf32, #tpu.memory_space<vmem>>, vector<1x1x8x8xf32>
    %146 = vector.shape_cast %145 : vector<1x1x8x8xf32> to vector<8x8xf32>
    %147 = vector.shape_cast %143 : vector<8x8xf32> to vector<1x1x8x8xf32>
    tpu.vector_store %arg14[%c0_85, %144, %c0_86, %c0_87], %147 {strides = array<i32>} : memref<1x4x8x8xf32, #tpu.memory_space<vmem>>, vector<1x1x8x8xf32>,
    %148 = arith.index_cast %c3_i32 : i32 to index
    %c0_88 = arith.constant 0 : index
    %c0_89 = arith.constant 0 : index
    %149 = vector.load %arg16[%148, %c0_88, %c0_89] : memref<4x8x128xf32, #tpu.memory_space<vmem>>, vector<1x8x128xf32>
    %150 = vector.shape_cast %149 : vector<1x8x128xf32> to vector<8x128xf32>
    %cst_90 = arith.constant dense<0.000000e+00> : vector<8x128xf32>
    %151 = tpu.matmul %143, %150, %cst_90 {dimension_numbers = #tpu.dot_dimension_numbers<[1], [0], [0], [1], [0, 0, 1, 1], [], []>} : vector<8x8xf32>, vector<8x128xf32>, vector<8x128xf32> -> vector<8x128xf32>
    %c0_91 = arith.constant 0 : index
    %c0_92 = arith.constant 0 : index
    %152 = vector.load %arg17[%c0_91, %c0_92] : memref<8x32xf32, #tpu.memory_space<vmem>>, vector<8x32xf32>
    %153 = arith.index_cast %c3_i32 : i32 to index
    %c0_93 = arith.constant 0 : index
    %c0_94 = arith.constant 0 : index
    %154 = vector.load %arg11[%153, %c0_93, %c0_94] : memref<4x128x32xf32, #tpu.memory_space<vmem>>, vector<1x128x32xf32>
    %155 = vector.shape_cast %154 : vector<1x128x32xf32> to vector<128x32xf32>
    %cst_95 = arith.constant dense<0.000000e+00> : vector<8x32xf32>
    %156 = tpu.matmul %151, %155, %cst_95 {dimension_numbers = #tpu.dot_dimension_numbers<[1], [0], [0], [1], [0, 0, 1, 1], [], []>} : vector<8x128xf32>, vector<128x32xf32>, vector<8x32xf32> -> vector<8x32xf32>
    %157 = arith.addf %152, %156 : vector<8x32xf32>
    %c0_96 = arith.constant 0 : index
    %c0_97 = arith.constant 0 : index
    %158 = vector.load %arg17[%c0_96, %c0_97] : memref<8x32xf32, #tpu.memory_space<vmem>>, vector<8x32xf32>
    tpu.vector_store %arg17[%c0_96, %c0_97], %157 {strides = array<i32>} : memref<8x32xf32, #tpu.memory_space<vmem>>, vector<8x32xf32>,
    %c4_i32 = arith.constant 4 : i32
    %c0_98 = arith.constant 0 : index
    %c0_99 = arith.constant 0 : index
    %159 = vector.load %arg17[%c0_98, %c0_99] : memref<8x32xf32, #tpu.memory_space<vmem>>, vector<8x32xf32>
    %c0_100 = arith.constant 0 : index
    %c0_101 = arith.constant 0 : index
    %160 = vector.load %arg12[%c0_100, %c0_101] : memref<1x32xf32, #tpu.memory_space<vmem>>, vector<1x32xf32>
    %161 = vector.broadcast %160 : vector<1x32xf32> to vector<8x32xf32>
    %162 = arith.addf %159, %161 : vector<8x32xf32>
    %c0_102 = arith.constant 0 : index
    %c0_103 = arith.constant 0 : index
    %c0_104 = arith.constant 0 : index
    %163 = vector.load %arg13[%c0_102, %c0_103, %c0_104] : memref<1x8x32xf32, #tpu.memory_space<vmem>>, vector<1x8x32xf32>
    %164 = vector.shape_cast %163 : vector<1x8x32xf32> to vector<8x32xf32>
    %165 = vector.shape_cast %162 : vector<8x32xf32> to vector<1x8x32xf32>
    tpu.vector_store %arg13[%c0_102, %c0_103, %c0_104], %165 {strides = array<i32>} : memref<1x8x32xf32, #tpu.memory_space<vmem>>, vector<1x8x32xf32>,
    return
  }
  func.func @transform_0(%arg0: i32, %arg1: i32) -> (i32, i32, i32) {
    %c0_i32 = arith.constant 0 : i32
    %c0_i32_0 = arith.constant 0 : i32
    return %arg0, %arg1, %c0_i32 : i32, i32, i32
  }
  func.func @transform_1(%arg0: i32, %arg1: i32) -> (i32, i32, i32) {
    %c0_i32 = arith.constant 0 : i32
    %c0_i32_0 = arith.constant 0 : i32
    %c0_i32_1 = arith.constant 0 : i32
    return %arg0, %c0_i32, %c0_i32_0 : i32, i32, i32
  }
  func.func @transform_2(%arg0: i32, %arg1: i32) -> (i32, i32, i32) {
    %c0_i32 = arith.constant 0 : i32
    %c0_i32_0 = arith.constant 0 : i32
    %c0_i32_1 = arith.constant 0 : i32
    return %arg0, %c0_i32, %c0_i32_0 : i32, i32, i32
  }
  func.func @transform_3(%arg0: i32, %arg1: i32) -> (i32, i32, i32) {
    %c0_i32 = arith.constant 0 : i32
    %c0_i32_0 = arith.constant 0 : i32
    %c0_i32_1 = arith.constant 0 : i32
    %c0_i32_2 = arith.constant 0 : i32
    return %c0_i32, %c0_i32_0, %c0_i32_1 : i32, i32, i32
  }
  func.func @transform_4(%arg0: i32, %arg1: i32) -> (i32, i32, i32) {
    %c0_i32 = arith.constant 0 : i32
    %c0_i32_0 = arith.constant 0 : i32
    %c0_i32_1 = arith.constant 0 : i32
    %c0_i32_2 = arith.constant 0 : i32
    return %c0_i32, %c0_i32_0, %c0_i32_1 : i32, i32, i32
  }
  func.func @transform_5(%arg0: i32, %arg1: i32) -> (i32, i32, i32) {
    %c0_i32 = arith.constant 0 : i32
    %c0_i32_0 = arith.constant 0 : i32
    %c0_i32_1 = arith.constant 0 : i32
    %c0_i32_2 = arith.constant 0 : i32
    return %c0_i32, %c0_i32_0, %c0_i32_1 : i32, i32, i32
  }
  func.func @transform_6(%arg0: i32, %arg1: i32) -> (i32, i32, i32) {
    %c0_i32 = arith.constant 0 : i32
    %c0_i32_0 = arith.constant 0 : i32
    %c0_i32_1 = arith.constant 0 : i32
    %c0_i32_2 = arith.constant 0 : i32
    return %c0_i32, %c0_i32_0, %c0_i32_1 : i32, i32, i32
  }
  func.func @transform_7(%arg0: i32, %arg1: i32) -> (i32, i32, i32) {
    %c0_i32 = arith.constant 0 : i32
    %c0_i32_0 = arith.constant 0 : i32
    %c0_i32_1 = arith.constant 0 : i32
    %c0_i32_2 = arith.constant 0 : i32
    return %c0_i32, %c0_i32_0, %c0_i32_1 : i32, i32, i32
  }
  func.func @transform_8(%arg0: i32, %arg1: i32) -> (i32, i32, i32) {
    %c0_i32 = arith.constant 0 : i32
    %c0_i32_0 = arith.constant 0 : i32
    %c0_i32_1 = arith.constant 0 : i32
    %c0_i32_2 = arith.constant 0 : i32
    return %c0_i32, %c0_i32_0, %c0_i32_1 : i32, i32, i32
  }
  func.func @transform_9(%arg0: i32, %arg1: i32) -> (i32, i32, i32) {
    %c0_i32 = arith.constant 0 : i32
    %c0_i32_0 = arith.constant 0 : i32
    %c0_i32_1 = arith.constant 0 : i32
    %c0_i32_2 = arith.constant 0 : i32
    return %c0_i32, %c0_i32_0, %c0_i32_1 : i32, i32, i32
  }
  func.func @transform_10(%arg0: i32, %arg1: i32) -> (i32, i32) {
    %c0_i32 = arith.constant 0 : i32
    %c0_i32_0 = arith.constant 0 : i32
    %c0_i32_1 = arith.constant 0 : i32
    return %c0_i32, %c0_i32_0 : i32, i32
  }
  func.func @transform_11(%arg0: i32, %arg1: i32) -> (i32, i32, i32) {
    %c0_i32 = arith.constant 0 : i32
    %c0_i32_0 = arith.constant 0 : i32
    return %arg0, %arg1, %c0_i32 : i32, i32, i32
  }
  func.func @transform_12(%arg0: i32, %arg1: i32) -> (i32, i32, i32, i32) {
    %c0_i32 = arith.constant 0 : i32
    %c0_i32_0 = arith.constant 0 : i32
    %c0_i32_1 = arith.constant 0 : i32
    return %arg0, %c0_i32, %arg1, %c0_i32_0 : i32, i32, i32, i32
  }
}

</mosaic_0001>

<llo_original>
// kernel: tpu_custom_call.1
$region0: #{tpu_custom_call.1}
  #allocation0 [shape = 'u32[]', space=smem, size = 0x4, offset = 0x4, fixed_abs, tag = 'smem constant byte address 0x4 - core index']
  #allocation1 [shape = 'u32[72,128]{1,0:T(1,128)}', space=vmem, size = 0x9000, scoped, tag = 'internal scratch']
  #allocation2 [shape = 'f32[4,8,128]{2,1,0:T(8,128)}', space=vmem, size = 0x4000, scoped, tag = 'scratch operand']
  #allocation3 [shape = 'f32[4,8,128]{2,1,0:T(8,128)}', space=vmem, size = 0x4000, scoped, tag = 'scratch operand']
  #allocation4 [shape = 'f32[8,32]{1,0:T(8,128)}', space=vmem, size = 0x1000, scoped, tag = 'scratch operand']
  %s0 = inlined_call_operand.vmem [shape: f32[2,8,32], index: 0, kind: input, shape index: {}]
  %s1 = inlined_call_operand.vmem [shape: f32[2,8,32], index: 1, kind: input, shape index: {}]
  %s2 = inlined_call_operand.vmem [shape: f32[2,8,32], index: 2, kind: input, shape index: {}]
  %s3 = inlined_call_operand.vmem [shape: f32[4,32,128], index: 3, kind: input, shape index: {}]
  %s4 = inlined_call_operand.vmem [shape: f32[4,1,128], index: 4, kind: input, shape index: {}]
  %s5 = inlined_call_operand.vmem [shape: f32[4,32,128], index: 5, kind: input, shape index: {}]
  %s6 = inlined_call_operand.vmem [shape: f32[4,1,128], index: 6, kind: input, shape index: {}]
  %s7 = inlined_call_operand.vmem [shape: f32[4,32,128], index: 7, kind: input, shape index: {}]
  %s8 = inlined_call_operand.vmem [shape: f32[4,1,128], index: 8, kind: input, shape index: {}]
  %s9 = inlined_call_operand.vmem [shape: f32[4,128,32], index: 9, kind: input, shape index: {}]
  %s10 = inlined_call_operand.vmem [shape: f32[1,32], index: 10, kind: input, shape index: {}]
  %s11 = inlined_call_operand.hbm [shape: f32[2,8,32], index: 11, kind: output, shape index: {0}]
  %s12 = inlined_call_operand.hbm [shape: f32[2,4,8,8], index: 12, kind: output, shape index: {1}]
  %13 = xla_tuple %s11, %s12
  %s14 = sld [smem:[#allocation0]]
  $region89: #{tpu_custom_call.1} parent=0
    _
  %s16 = ssub.s32 1, %s14
  %s17 = scalar_select 0, %s16, %s14
  $region1: #{tpu_custom_call.1} parent=0
    #allocation5 [shape = 'u8[8192]{0}', space=vmem, size = 0x2000, scoped, tag = 'output window, operand 0']
    #allocation6 [shape = 's32[2]{0}', space=sflag, size = 0x8, scoped, tag = 'scoped memory for tpu_custom_call.1']
    #allocation7 [shape = 'u8[32768]{0}', space=vmem, size = 0x8000, scoped, tag = 'output window, operand 1']
    #allocation8 [shape = 's32[2]{0}', space=sflag, size = 0x8, scoped, tag = 'scoped memory for tpu_custom_call.1']
    %18 = vsyncpa [#allocation6], 0
    %s19 = scalar_lea.sflag [#allocation6], 1
    %20 = vsyncpa %s19, 0
    %21 = vsyncpa [#allocation8], 0
    %s22 = scalar_lea.sflag [#allocation8], 1
    %23 = vsyncpa %s22, 0
    loop: start=0, step=1, limit=4
    $region2: #{tpu_custom_call.1} parent=1 // loop_pre_header
      _
    $region3: #{tpu_custom_call.1} parent=1 // loop_header
      %s25 = sphi 0, %s29
      %p26 = scmp.ge.s32.totalorder %s25, 4
      %s32 = sphi 0, %s44
      %s33 = sphi 0, %s40
      %s34 = sphi 0, %s32
      %s35 = sphi 0, %s33
      %s36 = sphi 0, %s34
      %s37 = sphi 0, %s35
      %s49 = sphi 0, %s51
      %s52 = sphi 0, %s49
      %s53 = sphi 0, %s52
      %s69 = sphi 0, %s53
      %s75 = sphi 0, %s77
      %s78 = sphi 0, %s75
      %s79 = sphi 0, %s78
      %s95 = sphi 0, %s79
      %s101 = sphi 0, %s103
      %s104 = sphi 0, %s101
      %s105 = sphi 0, %s104
      %s121 = sphi 0, %s105
      %s125 = sphi 0, %s125
      %s127 = sphi 0, %s125
      %s128 = sphi 0, %s127
      %s142 = sphi 0, %s128
      %s146 = sphi 0, %s146
      %s148 = sphi 0, %s146
      %s149 = sphi 0, %s148
      %s163 = sphi 0, %s149
      %s167 = sphi 0, %s167
      %s169 = sphi 0, %s167
      %s170 = sphi 0, %s169
      %s184 = sphi 0, %s170
      %s188 = sphi 0, %s188
      %s190 = sphi 0, %s188
      %s191 = sphi 0, %s190
      %s205 = sphi 0, %s191
      %s209 = sphi 0, %s209
      %s211 = sphi 0, %s209
      %s212 = sphi 0, %s211
      %s226 = sphi 0, %s212
      %s230 = sphi 0, %s230
      %s232 = sphi 0, %s230
      %s233 = sphi 0, %s232
      %s247 = sphi 0, %s233
      %s251 = sphi 0, %s251
      %s253 = sphi 0, %s251
      %s254 = sphi 0, %s253
      %s268 = sphi 0, %s254
      %s272 = sphi 0, %s272
      %s274 = sphi 0, %s272
      %s275 = sphi 0, %s274
      %s289 = sphi 0, %s275
      %s297 = sphi 0, %s299
      %s300 = sphi 0, %s297
      %s301 = sphi 0, %s300
      %s317 = sphi 0, %s301
      %s325 = sphi 0, %s327
      %s328 = sphi 0, %s325
      %s329 = sphi 0, %s328
      %s345 = sphi 0, %s329
    $region4: #{tpu_custom_call.1} parent=1 // loop_header_branch
      %28 = sbr.rel (%p26) target = $region8
    $region5: #{tpu_custom_call.1} parent=1 // loop_body
      %s30 = ssub.s32 %s25, 1
      %s31 = ssub.s32 %s25, 2
      %s38 = sadd.s32 1, %s33
      %p39 = scmp.ge.s32.totalorder %s38, 1
      %s40 = scalar_select %p39, 0, %s38
      %s41 = sadd.s32 1, %s32
      %s42 = scalar_select %p39, %s41, %s32
      %p43 = scmp.ge.s32.totalorder %s42, 2
      %s44 = scalar_select %p43, 0, %s42
      %s45 = ssub.s32 %s32, %s44
      %s46 = ssub.s32 %s33, %s40
      %s47 = sor.u32 %s45, %s46
      %p48 = scmp.eq.s32.totalorder %s47, 0
      %s50 = sadd.s32 %s49, 1
      %s51 = scalar_select %p48, %s49, %s50
      %p54 = pneg %p48
      %p55 = scmp.eq.s32.totalorder %s25, 1
      %p56 = por %p54, %p55
      %p57 = scmp.ne.s32.totalorder %s49, %s52
      %p58 = scmp.eq.s32.totalorder %s25, 0
      %p59 = por %p57, %p58
      %p60 = scmp.ne.s32.totalorder %s49, %s52
      %p61 = scmp.eq.s32.totalorder %s30, 1
      %p62 = por %p60, %p61
      %p63 = scmp.ne.s32.totalorder %s52, %s53
      %p64 = scmp.eq.s32.totalorder %s30, 0
      %p65 = por %p63, %p64
      %p66 = scmp.ne.s32.totalorder %s52, %s53
      %p67 = scmp.eq.s32.totalorder %s31, 1
      %p68 = por %p66, %p67
      %p70 = scmp.ne.s32.totalorder %s53, %s69
      %p71 = scmp.eq.s32.totalorder %s31, 0
      %p72 = por %p70, %p71
      %s73 = ssub.s32 %s32, %s44
      %p74 = scmp.eq.s32.totalorder %s73, 0
      %s76 = sadd.s32 %s75, 1
      %s77 = scalar_select %p74, %s75, %s76
      %p80 = pneg %p74
      %p81 = scmp.eq.s32.totalorder %s25, 1
      %p82 = por %p80, %p81
      %p83 = scmp.ne.s32.totalorder %s75, %s78
      %p84 = scmp.eq.s32.totalorder %s25, 0
      %p85 = por %p83, %p84
      %p86 = scmp.ne.s32.totalorder %s75, %s78
      %p87 = scmp.eq.s32.totalorder %s30, 1
      %p88 = por %p86, %p87
      %p89 = scmp.ne.s32.totalorder %s78, %s79
      %p90 = scmp.eq.s32.totalorder %s30, 0
      %p91 = por %p89, %p90
      %p92 = scmp.ne.s32.totalorder %s78, %s79
      %p93 = scmp.eq.s32.totalorder %s31, 1
      %p94 = por %p92, %p93
      %p96 = scmp.ne.s32.totalorder %s79, %s95
      %p97 = scmp.eq.s32.totalorder %s31, 0
      %p98 = por %p96, %p97
      %s99 = ssub.s32 %s32, %s44
      %p100 = scmp.eq.s32.totalorder %s99, 0
      %s102 = sadd.s32 %s101, 1
      %s103 = scalar_select %p100, %s101, %s102
      %p106 = pneg %p100
      %p107 = scmp.eq.s32.totalorder %s25, 1
      %p108 = por %p106, %p107
      %p109 = scmp.ne.s32.totalorder %s101, %s104
      %p110 = scmp.eq.s32.totalorder %s25, 0
      %p111 = por %p109, %p110
      %p112 = scmp.ne.s32.totalorder %s101, %s104
      %p113 = scmp.eq.s32.totalorder %s30, 1
      %p114 = por %p112, %p113
      %p115 = scmp.ne.s32.totalorder %s104, %s105
      %p116 = scmp.eq.s32.totalorder %s30, 0
      %p117 = por %p115, %p116
      %p118 = scmp.ne.s32.totalorder %s104, %s105
      %p119 = scmp.eq.s32.totalorder %s31, 1
      %p120 = por %p118, %p119
      %p122 = scmp.ne.s32.totalorder %s105, %s121
      %p123 = scmp.eq.s32.totalorder %s31, 0
      %p124 = por %p122, %p123
      %s126 = sadd.s32 %s125, 1
      %p129 = scmp.eq.s32.totalorder %s25, 1
      %p130 = scmp.ne.s32.totalorder %s125, %s127
      %p131 = scmp.eq.s32.totalorder %s25, 0
      %p132 = por %p130, %p131
      %p133 = scmp.ne.s32.totalorder %s125, %s127
      %p134 = scmp.eq.s32.totalorder %s30, 1
      %p135 = por %p133, %p134
      %p136 = scmp.ne.s32.totalorder %s127, %s128
      %p137 = scmp.eq.s32.totalorder %s30, 0
      %p138 = por %p136, %p137
      %p139 = scmp.ne.s32.totalorder %s127, %s128
      %p140 = scmp.eq.s32.totalorder %s31, 1
      %p141 = por %p139, %p140
      %p143 = scmp.ne.s32.totalorder %s128, %s142
      %p144 = scmp.eq.s32.totalorder %s31, 0
      %p145 = por %p143, %p144
      %s147 = sadd.s32 %s146, 1
      %p150 = scmp.eq.s32.totalorder %s25, 1
      %p151 = scmp.ne.s32.totalorder %s146, %s148
      %p152 = scmp.eq.s32.totalorder %s25, 0
      %p153 = por %p151, %p152
      %p154 = scmp.ne.s32.totalorder %s146, %s148
      %p155 = scmp.eq.s32.totalorder %s30, 1
      %p156 = por %p154, %p155
      %p157 = scmp.ne.s32.totalorder %s148, %s149
      %p158 = scmp.eq.s32.totalorder %s30, 0
      %p159 = por %p157, %p158
      %p160 = scmp.ne.s32.totalorder %s148, %s149
      %p161 = scmp.eq.s32.totalorder %s31, 1
      %p162 = por %p160, %p161
      %p164 = scmp.ne.s32.totalorder %s149, %s163
      %p165 = scmp.eq.s32.totalorder %s31, 0
      %p166 = por %p164, %p165
      %s168 = sadd.s32 %s167, 1
      %p171 = scmp.eq.s32.totalorder %s25, 1
      %p172 = scmp.ne.s32.totalorder %s167, %s169
      %p173 = scmp.eq.s32.totalorder %s25, 0
      %p174 = por %p172, %p173
      %p175 = scmp.ne.s32.totalorder %s167, %s169
      %p176 = scmp.eq.s32.totalorder %s30, 1
      %p177 = por %p175, %p176
      %p178 = scmp.ne.s32.totalorder %s169, %s170
      %p179 = scmp.eq.s32.totalorder %s30, 0
      %p180 = por %p178, %p179
      %p181 = scmp.ne.s32.totalorder %s169, %s170
      %p182 = scmp.eq.s32.totalorder %s31, 1
      %p183 = por %p181, %p182
      %p185 = scmp.ne.s32.totalorder %s170, %s184
      %p186 = scmp.eq.s32.totalorder %s31, 0
      %p187 = por %p185, %p186
      %s189 = sadd.s32 %s188, 1
      %p192 = scmp.eq.s32.totalorder %s25, 1
      %p193 = scmp.ne.s32.totalorder %s188, %s190
      %p194 = scmp.eq.s32.totalorder %s25, 0
      %p195 = por %p193, %p194
      %p196 = scmp.ne.s32.totalorder %s188, %s190
      %p197 = scmp.eq.s32.totalorder %s30, 1
      %p198 = por %p196, %p197
      %p199 = scmp.ne.s32.totalorder %s190, %s191
      %p200 = scmp.eq.s32.totalorder %s30, 0
      %p201 = por %p199, %p200
      %p202 = scmp.ne.s32.totalorder %s190, %s191
      %p203 = scmp.eq.s32.totalorder %s31, 1
      %p204 = por %p202, %p203
      %p206 = scmp.ne.s32.totalorder %s191, %s205
      %p207 = scmp.eq.s32.totalorder %s31, 0
      %p208 = por %p206, %p207
      %s210 = sadd.s32 %s209, 1
      %p213 = scmp.eq.s32.totalorder %s25, 1
      %p214 = scmp.ne.s32.totalorder %s209, %s211
      %p215 = scmp.eq.s32.totalorder %s25, 0
      %p216 = por %p214, %p215
      %p217 = scmp.ne.s32.totalorder %s209, %s211
      %p218 = scmp.eq.s32.totalorder %s30, 1
      %p219 = por %p217, %p218
      %p220 = scmp.ne.s32.totalorder %s211, %s212
      %p221 = scmp.eq.s32.totalorder %s30, 0
      %p222 = por %p220, %p221
      %p223 = scmp.ne.s32.totalorder %s211, %s212
      %p224 = scmp.eq.s32.totalorder %s31, 1
      %p225 = por %p223, %p224
      %p227 = scmp.ne.s32.totalorder %s212, %s226
      %p228 = scmp.eq.s32.totalorder %s31, 0
      %p229 = por %p227, %p228
      %s231 = sadd.s32 %s230, 1
      %p234 = scmp.eq.s32.totalorder %s25, 1
      %p235 = scmp.ne.s32.totalorder %s230, %s232
      %p236 = scmp.eq.s32.totalorder %s25, 0
      %p237 = por %p235, %p236
      %p238 = scmp.ne.s32.totalorder %s230, %s232
      %p239 = scmp.eq.s32.totalorder %s30, 1
      %p240 = por %p238, %p239
      %p241 = scmp.ne.s32.totalorder %s232, %s233
      %p242 = scmp.eq.s32.totalorder %s30, 0
      %p243 = por %p241, %p242
      %p244 = scmp.ne.s32.totalorder %s232, %s233
      %p245 = scmp.eq.s32.totalorder %s31, 1
      %p246 = por %p244, %p245
      %p248 = scmp.ne.s32.totalorder %s233, %s247
      %p249 = scmp.eq.s32.totalorder %s31, 0
      %p250 = por %p248, %p249
      %s252 = sadd.s32 %s251, 1
      %p255 = scmp.eq.s32.totalorder %s25, 1
      %p256 = scmp.ne.s32.totalorder %s251, %s253
      %p257 = scmp.eq.s32.totalorder %s25, 0
      %p258 = por %p256, %p257
      %p259 = scmp.ne.s32.totalorder %s251, %s253
      %p260 = scmp.eq.s32.totalorder %s30, 1
      %p261 = por %p259, %p260
      %p262 = scmp.ne.s32.totalorder %s253, %s254
      %p263 = scmp.eq.s32.totalorder %s30, 0
      %p264 = por %p262, %p263
      %p265 = scmp.ne.s32.totalorder %s253, %s254
      %p266 = scmp.eq.s32.totalorder %s31, 1
      %p267 = por %p265, %p266
      %p269 = scmp.ne.s32.totalorder %s254, %s268
      %p270 = scmp.eq.s32.totalorder %s31, 0
      %p271 = por %p269, %p270
      %s273 = sadd.s32 %s272, 1
      %p276 = scmp.eq.s32.totalorder %s25, 1
      %p277 = scmp.ne.s32.totalorder %s272, %s274
      %p278 = scmp.eq.s32.totalorder %s25, 0
      %p279 = por %p277, %p278
      %p280 = scmp.ne.s32.totalorder %s272, %s274
      %p281 = scmp.eq.s32.totalorder %s30, 1
      %p282 = por %p280, %p281
      %p283 = scmp.ne.s32.totalorder %s274, %s275
      %p284 = scmp.eq.s32.totalorder %s30, 0
      %p285 = por %p283, %p284
      %p286 = scmp.ne.s32.totalorder %s274, %s275
      %p287 = scmp.eq.s32.totalorder %s31, 1
      %p288 = por %p286, %p287
      %p290 = scmp.ne.s32.totalorder %s275, %s289
      %p291 = scmp.eq.s32.totalorder %s31, 0
      %p292 = por %p290, %p291
      %s293 = ssub.s32 %s32, %s44
      %s294 = ssub.s32 %s33, %s40
      %s295 = sor.u32 %s293, %s294
      %p296 = scmp.eq.s32.totalorder %s295, 0
      %s298 = sadd.s32 %s297, 1
      %s299 = scalar_select %p296, %s297, %s298
      %p302 = pneg %p296
      %p303 = scmp.eq.s32.totalorder %s25, 1
      %p304 = por %p302, %p303
      %p305 = scmp.ne.s32.totalorder %s297, %s300
      %p306 = scmp.eq.s32.totalorder %s25, 0
      %p307 = por %p305, %p306
      %p308 = scmp.ne.s32.totalorder %s297, %s300
      %p309 = scmp.eq.s32.totalorder %s30, 1
      %p310 = por %p308, %p309
      %p311 = scmp.ne.s32.totalorder %s300, %s301
      %p312 = scmp.eq.s32.totalorder %s30, 0
      %p313 = por %p311, %p312
      %p314 = scmp.ne.s32.totalorder %s300, %s301
      %p315 = scmp.eq.s32.totalorder %s31, 1
      %p316 = por %p314, %p315
      %p318 = scmp.ne.s32.totalorder %s301, %s317
      %p319 = scmp.eq.s32.totalorder %s31, 0
      %p320 = por %p318, %p319
      %s321 = ssub.s32 %s32, %s44
      %s322 = ssub.s32 %s33, %s40
      %s323 = sor.u32 %s321, %s322
      %p324 = scmp.eq.s32.totalorder %s323, 0
      %s326 = sadd.s32 %s325, 1
      %s327 = scalar_select %p324, %s325, %s326
      %p330 = pneg %p324
      %p331 = scmp.eq.s32.totalorder %s25, 1
      %p332 = por %p330, %p331
      %p333 = scmp.ne.s32.totalorder %s325, %s328
      %p334 = scmp.eq.s32.totalorder %s25, 0
      %p335 = por %p333, %p334
      %p336 = scmp.ne.s32.totalorder %s325, %s328
      %p337 = scmp.eq.s32.totalorder %s30, 1
      %p338 = por %p336, %p337
      %p339 = scmp.ne.s32.totalorder %s328, %s329
      %p340 = scmp.eq.s32.totalorder %s30, 0
      %p341 = por %p339, %p340
      %p342 = scmp.ne.s32.totalorder %s328, %s329
      %p343 = scmp.eq.s32.totalorder %s31, 1
      %p344 = por %p342, %p343
      %p346 = scmp.ne.s32.totalorder %s329, %s345
      %p347 = scmp.eq.s32.totalorder %s31, 0
      %p348 = por %p346, %p347
      %p349 = scmp.le.s32.totalorder 1, %s25
      %p350 = scmp.lt.s32.totalorder %s25, 3
      %p351 = pnand %p349, %p350
      %p352 = pneg %p351
      // Predicated region
      $region9: #{tpu_custom_call.1} parent=5 // pred_check
        _
      $region10: #{tpu_custom_call.1} parent=5 // pred_check_branch
        %354 = sbr.rel (%p351) target = $region12
      $region11: #{tpu_custom_call.1} parent=5 // pred_region
        %s355 = ssub.s32 %s25, 1
        // Predicated region
        $region13: #{tpu_custom_call.1} parent=11 // pred_check
          %p356 = pneg %p138
        $region14: #{tpu_custom_call.1} parent=11 // pred_check_branch
          %358 = sbr.rel (%p356) target = $region16
        $region15: #{tpu_custom_call.1} parent=11 // pred_region
          _
        $region16: #{tpu_custom_call.1} parent=11 // pred_fallthru
          _
        // Predicated region
        $region17: #{tpu_custom_call.1} parent=11 // pred_check
          %p359 = pneg %p159
        $region18: #{tpu_custom_call.1} parent=11 // pred_check_branch
          %361 = sbr.rel (%p359) target = $region20
        $region19: #{tpu_custom_call.1} parent=11 // pred_region
          _
        $region20: #{tpu_custom_call.1} parent=11 // pred_fallthru
          _
        // Predicated region
        $region21: #{tpu_custom_call.1} parent=11 // pred_check
          %p362 = pneg %p180
        $region22: #{tpu_custom_call.1} parent=11 // pred_check_branch
          %364 = sbr.rel (%p362) target = $region24
        $region23: #{tpu_custom_call.1} parent=11 // pred_region
          _
        $region24: #{tpu_custom_call.1} parent=11 // pred_fallthru
          _
        // Predicated region
        $region25: #{tpu_custom_call.1} parent=11 // pred_check
          %p365 = pneg %p201
        $region26: #{tpu_custom_call.1} parent=11 // pred_check_branch
          %367 = sbr.rel (%p365) target = $region28
        $region27: #{tpu_custom_call.1} parent=11 // pred_region
          _
        $region28: #{tpu_custom_call.1} parent=11 // pred_fallthru
          _
        // Predicated region
        $region29: #{tpu_custom_call.1} parent=11 // pred_check
          %p368 = pneg %p222
        $region30: #{tpu_custom_call.1} parent=11 // pred_check_branch
          %370 = sbr.rel (%p368) target = $region32
        $region31: #{tpu_custom_call.1} parent=11 // pred_region
          _
        $region32: #{tpu_custom_call.1} parent=11 // pred_fallthru
          _
        // Predicated region
        $region33: #{tpu_custom_call.1} parent=11 // pred_check
          %p371 = pneg %p243
        $region34: #{tpu_custom_call.1} parent=11 // pred_check_branch
          %373 = sbr.rel (%p371) target = $region36
        $region35: #{tpu_custom_call.1} parent=11 // pred_region
          _
        $region36: #{tpu_custom_call.1} parent=11 // pred_fallthru
          _
        // Predicated region
        $region37: #{tpu_custom_call.1} parent=11 // pred_check
          %p374 = pneg %p264
        $region38: #{tpu_custom_call.1} parent=11 // pred_check_branch
          %376 = sbr.rel (%p374) target = $region40
        $region39: #{tpu_custom_call.1} parent=11 // pred_region
          _
        $region40: #{tpu_custom_call.1} parent=11 // pred_fallthru
          _
        // Predicated region
        $region41: #{tpu_custom_call.1} parent=11 // pred_check
          %p377 = pneg %p285
        $region42: #{tpu_custom_call.1} parent=11 // pred_check_branch
          %379 = sbr.rel (%p377) target = $region44
        $region43: #{tpu_custom_call.1} parent=11 // pred_region
          _
        $region44: #{tpu_custom_call.1} parent=11 // pred_fallthru
          _
      $region12: #{tpu_custom_call.1} parent=5 // pred_fallthru
        _
      %p380 = scmp.lt.s32.totalorder %s25, 2
      // Predicated region
      $region45: #{tpu_custom_call.1} parent=5 // pred_check
        %p381 = pneg %p380
      $region46: #{tpu_custom_call.1} parent=5 // pred_check_branch
        %383 = sbr.rel (%p381) target = $region48
      $region47: #{tpu_custom_call.1} parent=5 // pred_region
        // Predicated region
        $region49: #{tpu_custom_call.1} parent=47 // pred_check
          %p384 = pneg %p59
        $region50: #{tpu_custom_call.1} parent=47 // pred_check_branch
          %386 = sbr.rel (%p384) target = $region52
        $region51: #{tpu_custom_call.1} parent=47 // pred_region
          %p387 = scmp.lt.s32.totalorder %s32, 1
          %s388 = scalar_select %p387, %s32, 1
          %p389 = scmp.lt.s32.totalorder %s33, 0
          %s390 = scalar_select %p389, %s33, 0
          %s391 = sadd.s32 %s390, %s388
          %s392 = smul.addr %s391, 8
          %s393 = scalar_lea.vmem %s0, %s392
        $region52: #{tpu_custom_call.1} parent=47 // pred_fallthru
          _
        // Predicated region
        $region53: #{tpu_custom_call.1} parent=47 // pred_check
          %p394 = pneg %p85
        $region54: #{tpu_custom_call.1} parent=47 // pred_check_branch
          %396 = sbr.rel (%p394) target = $region56
        $region55: #{tpu_custom_call.1} parent=47 // pred_region
          %p397 = scmp.lt.s32.totalorder %s32, 1
          %s398 = scalar_select %p397, %s32, 1
          %s399 = smul.addr %s398, 8
          %s400 = scalar_lea.vmem %s1, %s399
        $region56: #{tpu_custom_call.1} parent=47 // pred_fallthru
          _
        // Predicated region
        $region57: #{tpu_custom_call.1} parent=47 // pred_check
          %p401 = pneg %p111
        $region58: #{tpu_custom_call.1} parent=47 // pred_check_branch
          %403 = sbr.rel (%p401) target = $region60
        $region59: #{tpu_custom_call.1} parent=47 // pred_region
          %p404 = scmp.lt.s32.totalorder %s32, 1
          %s405 = scalar_select %p404, %s32, 1
          %s406 = smul.addr %s405, 8
          %s407 = scalar_lea.vmem %s2, %s406
        $region60: #{tpu_custom_call.1} parent=47 // pred_fallthru
          _
      $region48: #{tpu_custom_call.1} parent=5 // pred_fallthru
        _
      %p408 = scmp.le.s32.totalorder 1, %s25
      %p409 = scmp.lt.s32.totalorder %s25, 3
      %p410 = pnand %p408, %p409
      %p411 = pneg %p410
      // Predicated region
      $region61: #{tpu_custom_call.1} parent=5 // pred_check
        _
      $region62: #{tpu_custom_call.1} parent=5 // pred_check_branch
        %413 = sbr.rel (%p410) target = $region64
      $region63: #{tpu_custom_call.1} parent=5 // pred_region
        %s414 = ssub.s32 %s25, 1
        %p415 = scmp.lt.s32.totalorder %s34, 1
        %s416 = scalar_select %p415, %s34, 1
        %p417 = scmp.lt.s32.totalorder %s35, 0
        %s418 = scalar_select %p417, %s35, 0
        %s419 = sadd.s32 %s418, %s416
        %s420 = smul.addr %s419, 8
        %s421 = scalar_lea.vmem %s0, %s420
        %p422 = pneg %p65
        %p423 = pneg %p62
        %p424 = scmp.lt.s32.totalorder %s34, 1
        %s425 = scalar_select %p424, %s34, 1
        %s426 = smul.addr %s425, 8
        %s427 = scalar_lea.vmem %s1, %s426
        %p428 = pneg %p91
        %p429 = pneg %p88
        %p430 = scmp.lt.s32.totalorder %s34, 1
        %s431 = scalar_select %p430, %s34, 1
        %s432 = smul.addr %s431, 8
        %s433 = scalar_lea.vmem %s2, %s432
        %p434 = pneg %p117
        %p435 = pneg %p114
        %p436 = pneg %p138
        %p437 = pneg %p135
        %p438 = pneg %p159
        %p439 = pneg %p156
        %p440 = pneg %p180
        %p441 = pneg %p177
        %p442 = pneg %p201
        %p443 = pneg %p198
        %p444 = pneg %p222
        %p445 = pneg %p219
        %p446 = pneg %p243
        %p447 = pneg %p240
        %p448 = pneg %p264
        %p449 = pneg %p261
        %p450 = pneg %p285
        %p451 = pneg %p282
        %p452 = pneg %p313
        %p453 = pneg %p310
        %s454 = sand.u32 %s300, 1
        %s455 = scalar_lea.sflag [#allocation6], %s454
        %s456 = sand.u32 %s300, 1
        %s457 = smul.addr %s456, 8
        %s458 = scalar_lea.vmem [#allocation5], %s457
        %p459 = pneg %p341
        %p460 = pneg %p338
        %s461 = sand.u32 %s328, 1
        %s462 = scalar_lea.sflag [#allocation8], %s461
        %s463 = sand.u32 %s328, 1
        %s464 = smul.addr %s463, 32
        %s465 = scalar_lea.vmem [#allocation7], %s464
        %p466 = scmp.lt.s32.totalorder %s34, 1
        %s467 = scalar_select %p466, %s34, 1
        %p468 = scmp.lt.s32.totalorder %s35, 0
        %s469 = scalar_select %p468, %s35, 0
        %s470 = sadd.s32 %s469, %s467
        %s471 = smul.addr %s470, 8
        %s472 = scalar_lea.vmem %s0, %s471
        %p473 = scmp.lt.s32.totalorder %s34, 1
        %s474 = scalar_select %p473, %s34, 1
        %s475 = smul.addr %s474, 8
        %s476 = scalar_lea.vmem %s1, %s475
        %p477 = scmp.lt.s32.totalorder %s34, 1
        %s478 = scalar_select %p477, %s34, 1
        %s479 = smul.addr %s478, 8
        %s480 = scalar_lea.vmem %s2, %s479
        %p481 = scmp.eq.s32.totalorder %s35, 0
        // Predicated region
        $region65: #{tpu_custom_call.1} parent=63 // pred_check
          %p482 = pneg %p481
        $region66: #{tpu_custom_call.1} parent=63 // pred_check_branch
          %484 = sbr.rel (%p482) target = $region68
        $region67: #{tpu_custom_call.1} parent=63 // pred_region
          %v485 = vld [vmem:[%s476] sm:$0xff]
          %v486 = vld [vmem:[%s480] sm:$0xff]
          %v487 = vld [vmem:[%s5] sm:$0xff]
          %v488 = vld [vmem:[%s5 + $0x8] sm:$0xff]
          %v489 = vld [vmem:[%s5 + $0x10] sm:$0xff]
          %v490 = vld [vmem:[%s5 + $0x18] sm:$0xff]
          %v491 = vld [vmem:[%s6] sm:$0x1]
          %v493 = vperm.slane %v491, 0
          %vm495 = vcmask 261120
          %v497 = vsel %vm495, %v485, 0
          %499 = vmatpush.msra.mxu0 0.0
          %500 = vmatpush.msra.mxu0 0.0
          %501 = vmatpush.msra.mxu0 0.0
          %502 = vmatpush.msra.mxu0 0.0
          %503 = vmatpush.msra.mxu0 0.0
          %504 = vmatpush.msra.mxu0 0.0
          %505 = vmatpush.msra.mxu0 0.0
          %506 = vmatpush.msra.mxu0 0.0
          %507 = vmatpush.msra.mxu0 0.0
          %508 = vmatpush.msra.mxu0 0.0
          %509 = vmatpush.msra.mxu0 0.0
          %510 = vmatpush.msra.mxu0 0.0
          %511 = vmatpush.msra.mxu0 %v490
          %512 = vmatpush.msra.mxu0 %v489
          %513 = vmatpush.msra.mxu0 %v488
          %514 = vmatpush.msra.mxu0 %v487
          %515 = vmatmul.f32.gmra.mxu0 %v497
          %v516 = vpop.f32.mrf.mxu0
          %v517 = vadd.f32 %v493, %v516
          %518 = vdwg.mxu0
          %v519 = vld [vmem:[%s7] sm:$0xff]
          %v520 = vld [vmem:[%s7 + $0x8] sm:$0xff]
          %v521 = vld [vmem:[%s7 + $0x10] sm:$0xff]
          %v522 = vld [vmem:[%s7 + $0x18] sm:$0xff]
          %v523 = vld [vmem:[%s8] sm:$0x1]
          %v525 = vperm.slane %v523, 0
          %v528 = vsel %vm495, %v486, 0
          %530 = vmatpush.msra.mxu0 0.0
          %531 = vmatpush.msra.mxu0 0.0
          %532 = vmatpush.msra.mxu0 0.0
          %533 = vmatpush.msra.mxu0 0.0
          %534 = vmatpush.msra.mxu0 0.0
          %535 = vmatpush.msra.mxu0 0.0
          %536 = vmatpush.msra.mxu0 0.0
          %537 = vmatpush.msra.mxu0 0.0
          %538 = vmatpush.msra.mxu0 0.0
          %539 = vmatpush.msra.mxu0 0.0
          %540 = vmatpush.msra.mxu0 0.0
          %541 = vmatpush.msra.mxu0 0.0
          %542 = vmatpush.msra.mxu0 %v522
          %543 = vmatpush.msra.mxu0 %v521
          %544 = vmatpush.msra.mxu0 %v520
          %545 = vmatpush.msra.mxu0 %v519
          %546 = vmatmul.f32.gmra.mxu0 %v528
          %v547 = vpop.f32.mrf.mxu0
          %v548 = vadd.f32 %v525, %v547
          %549 = vdwg.mxu0
          %550 = vst [vmem:[#allocation2] sm:$0xff] %v517
          %551 = vst [vmem:[#allocation3] sm:$0xff] %v548
          %s552 = scalar_lea.vmem %s5, 32
          %v553 = vld [vmem:[%s552] sm:$0xff]
          %v554 = vld [vmem:[%s552 + $0x8] sm:$0xff]
          %v555 = vld [vmem:[%s552 + $0x10] sm:$0xff]
          %v556 = vld [vmem:[%s552 + $0x18] sm:$0xff]
          %s557 = scalar_lea.vmem %s6, 1
          %v558 = vld [vmem:[%s557] sm:$0x1]
          %v560 = vperm.slane %v558, 0
          %562 = vmatpush.msra.mxu0 0.0
          %563 = vmatpush.msra.mxu0 0.0
          %564 = vmatpush.msra.mxu0 0.0
          %565 = vmatpush.msra.mxu0 0.0
          %566 = vmatpush.msra.mxu0 0.0
          %567 = vmatpush.msra.mxu0 0.0
          %568 = vmatpush.msra.mxu0 0.0
          %569 = vmatpush.msra.mxu0 0.0
          %570 = vmatpush.msra.mxu0 0.0
          %571 = vmatpush.msra.mxu0 0.0
          %572 = vmatpush.msra.mxu0 0.0
          %573 = vmatpush.msra.mxu0 0.0
          %574 = vmatpush.msra.mxu0 %v556
          %575 = vmatpush.msra.mxu0 %v555
          %576 = vmatpush.msra.mxu0 %v554
          %577 = vmatpush.msra.mxu0 %v553
          %578 = vmatmul.f32.gmra.mxu0 %v497
          %v579 = vpop.f32.mrf.mxu0
          %v580 = vadd.f32 %v560, %v579
          %581 = vdwg.mxu0
          %s582 = scalar_lea.vmem %s7, 32
          %v583 = vld [vmem:[%s582] sm:$0xff]
          %v584 = vld [vmem:[%s582 + $0x8] sm:$0xff]
          %v585 = vld [vmem:[%s582 + $0x10] sm:$0xff]
          %v586 = vld [vmem:[%s582 + $0x18] sm:$0xff]
          %s587 = scalar_lea.vmem %s8, 1
          %v588 = vld [vmem:[%s587] sm:$0x1]
          %v590 = vperm.slane %v588, 0
          %592 = vmatpush.msra.mxu0 0.0
          %593 = vmatpush.msra.mxu0 0.0
          %594 = vmatpush.msra.mxu0 0.0
          %595 = vmatpush.msra.mxu0 0.0
          %596 = vmatpush.msra.mxu0 0.0
          %597 = vmatpush.msra.mxu0 0.0
          %598 = vmatpush.msra.mxu0 0.0
          %599 = vmatpush.msra.mxu0 0.0
          %600 = vmatpush.msra.mxu0 0.0
          %601 = vmatpush.msra.mxu0 0.0
          %602 = vmatpush.msra.mxu0 0.0
          %603 = vmatpush.msra.mxu0 0.0
          %604 = vmatpush.msra.mxu0 %v586
          %605 = vmatpush.msra.mxu0 %v585
          %606 = vmatpush.msra.mxu0 %v584
          %607 = vmatpush.msra.mxu0 %v583
          %608 = vmatmul.f32.gmra.mxu0 %v528
          %v609 = vpop.f32.mrf.mxu0
          %v610 = vadd.f32 %v590, %v609
          %611 = vdwg.mxu0
          %s612 = scalar_lea.vmem [#allocation2], 8
          %613 = vst [vmem:[%s612] sm:$0xff] %v580
          %s614 = scalar_lea.vmem [#allocation3], 8
          %615 = vst [vmem:[%s614] sm:$0xff] %v610
          %s616 = scalar_lea.vmem %s5, 64
          %v617 = vld [vmem:[%s616] sm:$0xff]
          %v618 = vld [vmem:[%s616 + $0x8] sm:$0xff]
          %v619 = vld [vmem:[%s616 + $0x10] sm:$0xff]
          %v620 = vld [vmem:[%s616 + $0x18] sm:$0xff]
          %s621 = scalar_lea.vmem %s6, 2
          %v622 = vld [vmem:[%s621] sm:$0x1]
          %v624 = vperm.slane %v622, 0
          %626 = vmatpush.msra.mxu0 0.0
          %627 = vmatpush.msra.mxu0 0.0
          %628 = vmatpush.msra.mxu0 0.0
          %629 = vmatpush.msra.mxu0 0.0
          %630 = vmatpush.msra.mxu0 0.0
          %631 = vmatpush.msra.mxu0 0.0
          %632 = vmatpush.msra.mxu0 0.0
          %633 = vmatpush.msra.mxu0 0.0
          %634 = vmatpush.msra.mxu0 0.0
          %635 = vmatpush.msra.mxu0 0.0
          %636 = vmatpush.msra.mxu0 0.0
          %637 = vmatpush.msra.mxu0 0.0
          %638 = vmatpush.msra.mxu0 %v620
          %639 = vmatpush.msra.mxu0 %v619
          %640 = vmatpush.msra.mxu0 %v618
          %641 = vmatpush.msra.mxu0 %v617
          %642 = vmatmul.f32.gmra.mxu0 %v497
          %v643 = vpop.f32.mrf.mxu0
          %v644 = vadd.f32 %v624, %v643
          %645 = vdwg.mxu0
          %s646 = scalar_lea.vmem %s7, 64
          %v647 = vld [vmem:[%s646] sm:$0xff]
          %v648 = vld [vmem:[%s646 + $0x8] sm:$0xff]
          %v649 = vld [vmem:[%s646 + $0x10] sm:$0xff]
          %v650 = vld [vmem:[%s646 + $0x18] sm:$0xff]
          %s651 = scalar_lea.vmem %s8, 2
          %v652 = vld [vmem:[%s651] sm:$0x1]
          %v654 = vperm.slane %v652, 0
          %656 = vmatpush.msra.mxu0 0.0
          %657 = vmatpush.msra.mxu0 0.0
          %658 = vmatpush.msra.mxu0 0.0
          %659 = vmatpush.msra.mxu0 0.0
          %660 = vmatpush.msra.mxu0 0.0
          %661 = vmatpush.msra.mxu0 0.0
          %662 = vmatpush.msra.mxu0 0.0
          %663 = vmatpush.msra.mxu0 0.0
          %664 = vmatpush.msra.mxu0 0.0
          %665 = vmatpush.msra.mxu0 0.0
          %666 = vmatpush.msra.mxu0 0.0
          %667 = vmatpush.msra.mxu0 0.0
          %668 = vmatpush.msra.mxu0 %v650
          %669 = vmatpush.msra.mxu0 %v649
          %670 = vmatpush.msra.mxu0 %v648
          %671 = vmatpush.msra.mxu0 %v647
          %672 = vmatmul.f32.gmra.mxu0 %v528
          %v673 = vpop.f32.mrf.mxu0
          %v674 = vadd.f32 %v654, %v673
          %675 = vdwg.mxu0
          %s676 = scalar_lea.vmem [#allocation2], 16
          %677 = vst [vmem:[%s676] sm:$0xff] %v644
          %s678 = scalar_lea.vmem [#allocation3], 16
          %679 = vst [vmem:[%s678] sm:$0xff] %v674
          %s680 = scalar_lea.vmem %s5, 96
          %v681 = vld [vmem:[%s680] sm:$0xff]
          %v682 = vld [vmem:[%s680 + $0x8] sm:$0xff]
          %v683 = vld [vmem:[%s680 + $0x10] sm:$0xff]
          %v684 = vld [vmem:[%s680 + $0x18] sm:$0xff]
          %s685 = scalar_lea.vmem %s6, 3
          %v686 = vld [vmem:[%s685] sm:$0x1]
          %v688 = vperm.slane %v686, 0
          %690 = vmatpush.msra.mxu0 0.0
          %691 = vmatpush.msra.mxu0 0.0
          %692 = vmatpush.msra.mxu0 0.0
          %693 = vmatpush.msra.mxu0 0.0
          %694 = vmatpush.msra.mxu0 0.0
          %695 = vmatpush.msra.mxu0 0.0
          %696 = vmatpush.msra.mxu0 0.0
          %697 = vmatpush.msra.mxu0 0.0
          %698 = vmatpush.msra.mxu0 0.0
          %699 = vmatpush.msra.mxu0 0.0
          %700 = vmatpush.msra.mxu0 0.0
          %701 = vmatpush.msra.mxu0 0.0
          %702 = vmatpush.msra.mxu0 %v684
          %703 = vmatpush.msra.mxu0 %v683
          %704 = vmatpush.msra.mxu0 %v682
          %705 = vmatpush.msra.mxu0 %v681
          %706 = vmatmul.f32.gmra.mxu0 %v497
          %v707 = vpop.f32.mrf.mxu0
          %v708 = vadd.f32 %v688, %v707
          %709 = vdwg.mxu0
          %s710 = scalar_lea.vmem %s7, 96
          %v711 = vld [vmem:[%s710] sm:$0xff]
          %v712 = vld [vmem:[%s710 + $0x8] sm:$0xff]
          %v713 = vld [vmem:[%s710 + $0x10] sm:$0xff]
          %v714 = vld [vmem:[%s710 + $0x18] sm:$0xff]
          %s715 = scalar_lea.vmem %s8, 3
          %v716 = vld [vmem:[%s715] sm:$0x1]
          %v718 = vperm.slane %v716, 0
          %720 = vmatpush.msra.mxu0 0.0
          %721 = vmatpush.msra.mxu0 0.0
          %722 = vmatpush.msra.mxu0 0.0
          %723 = vmatpush.msra.mxu0 0.0
          %724 = vmatpush.msra.mxu0 0.0
          %725 = vmatpush.msra.mxu0 0.0
          %726 = vmatpush.msra.mxu0 0.0
          %727 = vmatpush.msra.mxu0 0.0
          %728 = vmatpush.msra.mxu0 0.0
          %729 = vmatpush.msra.mxu0 0.0
          %730 = vmatpush.msra.mxu0 0.0
          %731 = vmatpush.msra.mxu0 0.0
          %732 = vmatpush.msra.mxu0 %v714
          %733 = vmatpush.msra.mxu0 %v713
          %734 = vmatpush.msra.mxu0 %v712
          %735 = vmatpush.msra.mxu0 %v711
          %736 = vmatmul.f32.gmra.mxu0 %v528
          %v737 = vpop.f32.mrf.mxu0
          %v738 = vadd.f32 %v718, %v737
          %739 = vdwg.mxu0
          %s740 = scalar_lea.vmem [#allocation2], 24
          %741 = vst [vmem:[%s740] sm:$0xff] %v708
          %s742 = scalar_lea.vmem [#allocation3], 24
          %743 = vst [vmem:[%s742] sm:$0xff] %v738
        $region68: #{tpu_custom_call.1} parent=63 // pred_fallthru
          _
        %v744 = vld [vmem:[%s472] sm:$0xff]
        %vm745 = vcmask 261120
        %746 = vst.msk [vmem:[#allocation4] sm:$0xff] %vm745, 0.0
        %v747 = vld [vmem:[%s3] sm:$0xff]
        %v748 = vld [vmem:[%s3 + $0x8] sm:$0xff]
        %v749 = vld [vmem:[%s3 + $0x10] sm:$0xff]
        %v750 = vld [vmem:[%s3 + $0x18] sm:$0xff]
        %v751 = vld [vmem:[%s4] sm:$0x1]
        %v753 = vperm.slane %v751, 0
        %v756 = vsel %vm745, %v744, 0
        %758 = vmatpush.msra.mxu0 0.0
        %759 = vmatpush.msra.mxu0 0.0
        %760 = vmatpush.msra.mxu0 0.0
        %761 = vmatpush.msra.mxu0 0.0
        %762 = vmatpush.msra.mxu0 0.0
        %763 = vmatpush.msra.mxu0 0.0
        %764 = vmatpush.msra.mxu0 0.0
        %765 = vmatpush.msra.mxu0 0.0
        %766 = vmatpush.msra.mxu0 0.0
        %767 = vmatpush.msra.mxu0 0.0
        %768 = vmatpush.msra.mxu0 0.0
        %769 = vmatpush.msra.mxu0 0.0
        %770 = vmatpush.msra.mxu0 %v750
        %771 = vmatpush.msra.mxu0 %v749
        %772 = vmatpush.msra.mxu0 %v748
        %773 = vmatpush.msra.mxu0 %v747
        %774 = vmatmul.f32.gmra.mxu0 %v756
        %v775 = vpop.f32.mrf.mxu0
        %v776 = vadd.f32 %v753, %v775
        %777 = vdwg.mxu0
        %v778 = vld [vmem:[#allocation2] sm:$0xff]
        %779 = vmatpush.xpose.msra.mxu0 0.0
        %780 = vmatpush.xpose.msra.mxu0 0.0
        %781 = vmatpush.xpose.msra.mxu0 0.0
        %782 = vmatpush.xpose.msra.mxu0 0.0
        %783 = vmatpush.xpose.msra.mxu0 0.0
        %784 = vmatpush.xpose.msra.mxu0 0.0
        %785 = vmatpush.xpose.msra.mxu0 0.0
        %786 = vmatpush.xpose.msra.mxu0 0.0
        %787 = vmatpush.xpose.msra.mxu0 0.0
        %788 = vmatpush.xpose.msra.mxu0 0.0
        %789 = vmatpush.xpose.msra.mxu0 0.0
        %790 = vmatpush.xpose.msra.mxu0 0.0
        %791 = vmatpush.xpose.msra.mxu0 0.0
        %792 = vmatpush.xpose.msra.mxu0 0.0
        %793 = vmatpush.xpose.msra.mxu0 0.0
        %794 = vmatpush.xpose.msra.mxu0 %v778
        %795 = vmatmul.f32.gmra.mxu0 %v776
        %v796 = vpop.f32.mrf.mxu0
        %v797 = vadd.f32 0.0, %v796
        %798 = vdwg.mxu0
        %vm799 = vcmask 64512
        %v800 = vsel %vm799, %v797, -inf
        %801 = vmax.xlane.f32.xlu0 %v800
        %v802 = vpop.xlane.xlu0 %801
        %v803 = vsub.f32 %v797, %v802
        %v804 = vmul.f32 %v803, 1.442695
        %v805 = vpow.pop %v804
        %v806 = vsel %vm799, %v805, 0.0
        %807 = vadd.xlane.f32.xlu0 %v806
        %v808 = vpop.xlane.xlu0 %807
        %v809 = vrcp.pop %v808
        %v810 = vmul.f32 %v808, %v809
        %v811 = vsub.f32 1.0, %v810
        %v812 = vmul.f32 %v809, %v811
        %v813 = vadd.f32 %v809, %v812
        %vm814 = vweird.f32 %v808
        %vm815 = vweird.f32 %v809
        %vm816 = vmor %vm814, %vm815
        %v817 = vsel %vm816, %v809, %v813
        %v818 = vand.u32 2147483647, %v808
        %vm819 = vcmp.eq.f32.partialorder %v818, 8.507059e+37
        %v820 = vand.u32 %v808, 2147483648
        %v821 = vor.u32 1.1754944e-38, %v820
        %v822 = vsel %vm819, %v821, %v817
        %v823 = vmul.f32 %v805, %v822
        %824 = vst.msk [vmem:[%s465] sm:$0xff] %vm799, %v823
        %v825 = vld [vmem:[#allocation3] sm:$0xff]
        %v827 = vsel %vm799, %v823, 0
        %829 = vmatpush.msra.mxu0 0.0
        %830 = vmatpush.msra.mxu0 0.0
        %831 = vmatpush.msra.mxu0 0.0
        %832 = vmatpush.msra.mxu0 0.0
        %833 = vmatpush.msra.mxu0 0.0
        %834 = vmatpush.msra.mxu0 0.0
        %835 = vmatpush.msra.mxu0 0.0
        %836 = vmatpush.msra.mxu0 0.0
        %837 = vmatpush.msra.mxu0 0.0
        %838 = vmatpush.msra.mxu0 0.0
        %839 = vmatpush.msra.mxu0 0.0
        %840 = vmatpush.msra.mxu0 0.0
        %841 = vmatpush.msra.mxu0 0.0
        %842 = vmatpush.msra.mxu0 0.0
        %843 = vmatpush.msra.mxu0 0.0
        %844 = vmatpush.msra.mxu0 %v825
        %845 = vmatmul.f32.gmra.mxu0 %v827
        %v846 = vpop.f32.mrf.mxu0
        %v847 = vadd.f32 0.0, %v846
        %848 = vdwg.mxu0
        %v849 = vld [vmem:[#allocation4] sm:$0xff]
        %v850 = vld [vmem:[%s9] sm:$0xff]
        %v851 = vld [vmem:[%s9 + $0x8] sm:$0xff]
        %v852 = vld [vmem:[%s9 + $0x10] sm:$0xff]
        %v853 = vld [vmem:[%s9 + $0x18] sm:$0xff]
        %v854 = vld [vmem:[%s9 + $0x20] sm:$0xff]
        %v855 = vld [vmem:[%s9 + $0x28] sm:$0xff]
        %v856 = vld [vmem:[%s9 + $0x30] sm:$0xff]
        %v857 = vld [vmem:[%s9 + $0x38] sm:$0xff]
        %v858 = vld [vmem:[%s9 + $0x40] sm:$0xff]
        %v859 = vld [vmem:[%s9 + $0x48] sm:$0xff]
        %v860 = vld [vmem:[%s9 + $0x50] sm:$0xff]
        %v861 = vld [vmem:[%s9 + $0x58] sm:$0xff]
        %v862 = vld [vmem:[%s9 + $0x60] sm:$0xff]
        %v863 = vld [vmem:[%s9 + $0x68] sm:$0xff]
        %v864 = vld [vmem:[%s9 + $0x70] sm:$0xff]
        %v865 = vld [vmem:[%s9 + $0x78] sm:$0xff]
        %866 = vmatpush.msra.mxu0 %v865
        %867 = vmatpush.msra.mxu0 %v864
        %868 = vmatpush.msra.mxu0 %v863
        %869 = vmatpush.msra.mxu0 %v862
        %870 = vmatpush.msra.mxu0 %v861
        %871 = vmatpush.msra.mxu0 %v860
        %872 = vmatpush.msra.mxu0 %v859
        %873 = vmatpush.msra.mxu0 %v858
        %874 = vmatpush.msra.mxu0 %v857
        %875 = vmatpush.msra.mxu0 %v856
        %876 = vmatpush.msra.mxu0 %v855
        %877 = vmatpush.msra.mxu0 %v854
        %878 = vmatpush.msra.mxu0 %v853
        %879 = vmatpush.msra.mxu0 %v852
        %880 = vmatpush.msra.mxu0 %v851
        %881 = vmatpush.msra.mxu0 %v850
        %882 = vmatmul.f32.gmra.mxu0 %v847
        %v883 = vpop.f32.mrf.mxu0
        %v884 = vadd.f32 0.0, %v883
        %885 = vdwg.mxu0
        %v886 = vadd.f32 %v849, %v884
        %887 = vst.msk [vmem:[#allocation4] sm:$0xff] %vm745, %v886
        %s888 = scalar_lea.vmem %s3, 32
        %v889 = vld [vmem:[%s888] sm:$0xff]
        %v890 = vld [vmem:[%s888 + $0x8] sm:$0xff]
        %v891 = vld [vmem:[%s888 + $0x10] sm:$0xff]
        %v892 = vld [vmem:[%s888 + $0x18] sm:$0xff]
        %s893 = scalar_lea.vmem %s4, 1
        %v894 = vld [vmem:[%s893] sm:$0x1]
        %v896 = vperm.slane %v894, 0
        %898 = vmatpush.msra.mxu0 0.0
        %899 = vmatpush.msra.mxu0 0.0
        %900 = vmatpush.msra.mxu0 0.0
        %901 = vmatpush.msra.mxu0 0.0
        %902 = vmatpush.msra.mxu0 0.0
        %903 = vmatpush.msra.mxu0 0.0
        %904 = vmatpush.msra.mxu0 0.0
        %905 = vmatpush.msra.mxu0 0.0
        %906 = vmatpush.msra.mxu0 0.0
        %907 = vmatpush.msra.mxu0 0.0
        %908 = vmatpush.msra.mxu0 0.0
        %909 = vmatpush.msra.mxu0 0.0
        %910 = vmatpush.msra.mxu0 %v892
        %911 = vmatpush.msra.mxu0 %v891
        %912 = vmatpush.msra.mxu0 %v890
        %913 = vmatpush.msra.mxu0 %v889
        %914 = vmatmul.f32.gmra.mxu0 %v756
        %v915 = vpop.f32.mrf.mxu0
        %v916 = vadd.f32 %v896, %v915
        %917 = vdwg.mxu0
        %s918 = scalar_lea.vmem [#allocation2], 8
        %v919 = vld [vmem:[%s918] sm:$0xff]
        %920 = vmatpush.xpose.msra.mxu0 0.0
        %921 = vmatpush.xpose.msra.mxu0 0.0
        %922 = vmatpush.xpose.msra.mxu0 0.0
        %923 = vmatpush.xpose.msra.mxu0 0.0
        %924 = vmatpush.xpose.msra.mxu0 0.0
        %925 = vmatpush.xpose.msra.mxu0 0.0
        %926 = vmatpush.xpose.msra.mxu0 0.0
        %927 = vmatpush.xpose.msra.mxu0 0.0
        %928 = vmatpush.xpose.msra.mxu0 0.0
        %929 = vmatpush.xpose.msra.mxu0 0.0
        %930 = vmatpush.xpose.msra.mxu0 0.0
        %931 = vmatpush.xpose.msra.mxu0 0.0
        %932 = vmatpush.xpose.msra.mxu0 0.0
        %933 = vmatpush.xpose.msra.mxu0 0.0
        %934 = vmatpush.xpose.msra.mxu0 0.0
        %935 = vmatpush.xpose.msra.mxu0 %v919
        %936 = vmatmul.f32.gmra.mxu0 %v916
        %v937 = vpop.f32.mrf.mxu0
        %v938 = vadd.f32 0.0, %v937
        %939 = vdwg.mxu0
        %v940 = vsel %vm799, %v938, -inf
        %941 = vmax.xlane.f32.xlu0 %v940
        %v942 = vpop.xlane.xlu0 %941
        %v943 = vsub.f32 %v938, %v942
        %v944 = vmul.f32 %v943, 1.442695
        %v945 = vpow.pop %v944
        %v946 = vsel %vm799, %v945, 0.0
        %947 = vadd.xlane.f32.xlu0 %v946
        %v948 = vpop.xlane.xlu0 %947
        %v949 = vrcp.pop %v948
        %v950 = vmul.f32 %v948, %v949
        %v951 = vsub.f32 1.0, %v950
        %v952 = vmul.f32 %v949, %v951
        %v953 = vadd.f32 %v949, %v952
        %vm954 = vweird.f32 %v948
        %vm955 = vweird.f32 %v949
        %vm956 = vmor %vm954, %vm955
        %v957 = vsel %vm956, %v949, %v953
        %v958 = vand.u32 2147483647, %v948
        %vm959 = vcmp.eq.f32.partialorder %v958, 8.507059e+37
        %v960 = vand.u32 %v948, 2147483648
        %v961 = vor.u32 1.1754944e-38, %v960
        %v962 = vsel %vm959, %v961, %v957
        %v963 = vmul.f32 %v945, %v962
        %s964 = scalar_lea.vmem %s465, 8 [#allocation7]
        %965 = vst.msk [vmem:[%s964] sm:$0xff] %vm799, %v963
        %s966 = scalar_lea.vmem [#allocation3], 8
        %v967 = vld [vmem:[%s966] sm:$0xff]
        %v969 = vsel %vm799, %v963, 0
        %971 = vmatpush.msra.mxu0 0.0
        %972 = vmatpush.msra.mxu0 0.0
        %973 = vmatpush.msra.mxu0 0.0
        %974 = vmatpush.msra.mxu0 0.0
        %975 = vmatpush.msra.mxu0 0.0
        %976 = vmatpush.msra.mxu0 0.0
        %977 = vmatpush.msra.mxu0 0.0
        %978 = vmatpush.msra.mxu0 0.0
        %979 = vmatpush.msra.mxu0 0.0
        %980 = vmatpush.msra.mxu0 0.0
        %981 = vmatpush.msra.mxu0 0.0
        %982 = vmatpush.msra.mxu0 0.0
        %983 = vmatpush.msra.mxu0 0.0
        %984 = vmatpush.msra.mxu0 0.0
        %985 = vmatpush.msra.mxu0 0.0
        %986 = vmatpush.msra.mxu0 %v967
        %987 = vmatmul.f32.gmra.mxu0 %v969
        %v988 = vpop.f32.mrf.mxu0
        %v989 = vadd.f32 0.0, %v988
        %990 = vdwg.mxu0
        %v991 = vld [vmem:[#allocation4] sm:$0xff]
        %s992 = scalar_lea.vmem %s9, 128
        %v993 = vld [vmem:[%s992] sm:$0xff]
        %v994 = vld [vmem:[%s992 + $0x8] sm:$0xff]
        %v995 = vld [vmem:[%s992 + $0x10] sm:$0xff]
        %v996 = vld [vmem:[%s992 + $0x18] sm:$0xff]
        %v997 = vld [vmem:[%s992 + $0x20] sm:$0xff]
        %v998 = vld [vmem:[%s992 + $0x28] sm:$0xff]
        %v999 = vld [vmem:[%s992 + $0x30] sm:$0xff]
        %v1000 = vld [vmem:[%s992 + $0x38] sm:$0xff]
        %v1001 = vld [vmem:[%s992 + $0x40] sm:$0xff]
        %v1002 = vld [vmem:[%s992 + $0x48] sm:$0xff]
        %v1003 = vld [vmem:[%s992 + $0x50] sm:$0xff]
        %v1004 = vld [vmem:[%s992 + $0x58] sm:$0xff]
        %v1005 = vld [vmem:[%s992 + $0x60] sm:$0xff]
        %v1006 = vld [vmem:[%s992 + $0x68] sm:$0xff]
        %v1007 = vld [vmem:[%s992 + $0x70] sm:$0xff]
        %v1008 = vld [vmem:[%s992 + $0x78] sm:$0xff]
        %1009 = vmatpush.msra.mxu0 %v1008
        %1010 = vmatpush.msra.mxu0 %v1007
        %1011 = vmatpush.msra.mxu0 %v1006
        %1012 = vmatpush.msra.mxu0 %v1005
        %1013 = vmatpush.msra.mxu0 %v1004
        %1014 = vmatpush.msra.mxu0 %v1003
        %1015 = vmatpush.msra.mxu0 %v1002
        %1016 = vmatpush.msra.mxu0 %v1001
        %1017 = vmatpush.msra.mxu0 %v1000
        %1018 = vmatpush.msra.mxu0 %v999
        %1019 = vmatpush.msra.mxu0 %v998
        %1020 = vmatpush.msra.mxu0 %v997
        %1021 = vmatpush.msra.mxu0 %v996
        %1022 = vmatpush.msra.mxu0 %v995
        %1023 = vmatpush.msra.mxu0 %v994
        %1024 = vmatpush.msra.mxu0 %v993
        %1025 = vmatmul.f32.gmra.mxu0 %v989
        %v1026 = vpop.f32.mrf.mxu0
        %v1027 = vadd.f32 0.0, %v1026
        %1028 = vdwg.mxu0
        %v1029 = vadd.f32 %v991, %v1027
        %1030 = vst.msk [vmem:[#allocation4] sm:$0xff] %vm745, %v1029
        %s1031 = scalar_lea.vmem %s3, 64
        %v1032 = vld [vmem:[%s1031] sm:$0xff]
        %v1033 = vld [vmem:[%s1031 + $0x8] sm:$0xff]
        %v1034 = vld [vmem:[%s1031 + $0x10] sm:$0xff]
        %v1035 = vld [vmem:[%s1031 + $0x18] sm:$0xff]
        %s1036 = scalar_lea.vmem %s4, 2
        %v1037 = vld [vmem:[%s1036] sm:$0x1]
        %v1039 = vperm.slane %v1037, 0
        %1041 = vmatpush.msra.mxu0 0.0
        %1042 = vmatpush.msra.mxu0 0.0
        %1043 = vmatpush.msra.mxu0 0.0
        %1044 = vmatpush.msra.mxu0 0.0
        %1045 = vmatpush.msra.mxu0 0.0
        %1046 = vmatpush.msra.mxu0 0.0
        %1047 = vmatpush.msra.mxu0 0.0
        %1048 = vmatpush.msra.mxu0 0.0
        %1049 = vmatpush.msra.mxu0 0.0
        %1050 = vmatpush.msra.mxu0 0.0
        %1051 = vmatpush.msra.mxu0 0.0
        %1052 = vmatpush.msra.mxu0 0.0
        %1053 = vmatpush.msra.mxu0 %v1035
        %1054 = vmatpush.msra.mxu0 %v1034
        %1055 = vmatpush.msra.mxu0 %v1033
        %1056 = vmatpush.msra.mxu0 %v1032
        %1057 = vmatmul.f32.gmra.mxu0 %v756
        %v1058 = vpop.f32.mrf.mxu0
        %v1059 = vadd.f32 %v1039, %v1058
        %1060 = vdwg.mxu0
        %s1061 = scalar_lea.vmem [#allocation2], 16
        %v1062 = vld [vmem:[%s1061] sm:$0xff]
        %1063 = vmatpush.xpose.msra.mxu0 0.0
        %1064 = vmatpush.xpose.msra.mxu0 0.0
        %1065 = vmatpush.xpose.msra.mxu0 0.0
        %1066 = vmatpush.xpose.msra.mxu0 0.0
        %1067 = vmatpush.xpose.msra.mxu0 0.0
        %1068 = vmatpush.xpose.msra.mxu0 0.0
        %1069 = vmatpush.xpose.msra.mxu0 0.0
        %1070 = vmatpush.xpose.msra.mxu0 0.0
        %1071 = vmatpush.xpose.msra.mxu0 0.0
        %1072 = vmatpush.xpose.msra.mxu0 0.0
        %1073 = vmatpush.xpose.msra.mxu0 0.0
        %1074 = vmatpush.xpose.msra.mxu0 0.0
        %1075 = vmatpush.xpose.msra.mxu0 0.0
        %1076 = vmatpush.xpose.msra.mxu0 0.0
        %1077 = vmatpush.xpose.msra.mxu0 0.0
        %1078 = vmatpush.xpose.msra.mxu0 %v1062
        %1079 = vmatmul.f32.gmra.mxu0 %v1059
        %v1080 = vpop.f32.mrf.mxu0
        %v1081 = vadd.f32 0.0, %v1080
        %1082 = vdwg.mxu0
        %v1083 = vsel %vm799, %v1081, -inf
        %1084 = vmax.xlane.f32.xlu0 %v1083
        %v1085 = vpop.xlane.xlu0 %1084
        %v1086 = vsub.f32 %v1081, %v1085
        %v1087 = vmul.f32 %v1086, 1.442695
        %v1088 = vpow.pop %v1087
        %v1089 = vsel %vm799, %v1088, 0.0
        %1090 = vadd.xlane.f32.xlu0 %v1089
        %v1091 = vpop.xlane.xlu0 %1090
        %v1092 = vrcp.pop %v1091
        %v1093 = vmul.f32 %v1091, %v1092
        %v1094 = vsub.f32 1.0, %v1093
        %v1095 = vmul.f32 %v1092, %v1094
        %v1096 = vadd.f32 %v1092, %v1095
        %vm1097 = vweird.f32 %v1091
        %vm1098 = vweird.f32 %v1092
        %vm1099 = vmor %vm1097, %vm1098
        %v1100 = vsel %vm1099, %v1092, %v1096
        %v1101 = vand.u32 2147483647, %v1091
        %vm1102 = vcmp.eq.f32.partialorder %v1101, 8.507059e+37
        %v1103 = vand.u32 %v1091, 2147483648
        %v1104 = vor.u32 1.1754944e-38, %v1103
        %v1105 = vsel %vm1102, %v1104, %v1100
        %v1106 = vmul.f32 %v1088, %v1105
        %s1107 = scalar_lea.vmem %s465, 16 [#allocation7]
        %1108 = vst.msk [vmem:[%s1107] sm:$0xff] %vm799, %v1106
        %s1109 = scalar_lea.vmem [#allocation3], 16
        %v1110 = vld [vmem:[%s1109] sm:$0xff]
        %v1112 = vsel %vm799, %v1106, 0
        %1114 = vmatpush.msra.mxu0 0.0
        %1115 = vmatpush.msra.mxu0 0.0
        %1116 = vmatpush.msra.mxu0 0.0
        %1117 = vmatpush.msra.mxu0 0.0
        %1118 = vmatpush.msra.mxu0 0.0
        %1119 = vmatpush.msra.mxu0 0.0
        %1120 = vmatpush.msra.mxu0 0.0
        %1121 = vmatpush.msra.mxu0 0.0
        %1122 = vmatpush.msra.mxu0 0.0
        %1123 = vmatpush.msra.mxu0 0.0
        %1124 = vmatpush.msra.mxu0 0.0
        %1125 = vmatpush.msra.mxu0 0.0
        %1126 = vmatpush.msra.mxu0 0.0
        %1127 = vmatpush.msra.mxu0 0.0
        %1128 = vmatpush.msra.mxu0 0.0
        %1129 = vmatpush.msra.mxu0 %v1110
        %1130 = vmatmul.f32.gmra.mxu0 %v1112
        %v1131 = vpop.f32.mrf.mxu0
        %v1132 = vadd.f32 0.0, %v1131
        %1133 = vdwg.mxu0
        %v1134 = vld [vmem:[#allocation4] sm:$0xff]
        %s1135 = scalar_lea.vmem %s9, 256
        %v1136 = vld [vmem:[%s1135] sm:$0xff]
        %v1137 = vld [vmem:[%s1135 + $0x8] sm:$0xff]
        %v1138 = vld [vmem:[%s1135 + $0x10] sm:$0xff]
        %v1139 = vld [vmem:[%s1135 + $0x18] sm:$0xff]
        %v1140 = vld [vmem:[%s1135 + $0x20] sm:$0xff]
        %v1141 = vld [vmem:[%s1135 + $0x28] sm:$0xff]
        %v1142 = vld [vmem:[%s1135 + $0x30] sm:$0xff]
        %v1143 = vld [vmem:[%s1135 + $0x38] sm:$0xff]
        %v1144 = vld [vmem:[%s1135 + $0x40] sm:$0xff]
        %v1145 = vld [vmem:[%s1135 + $0x48] sm:$0xff]
        %v1146 = vld [vmem:[%s1135 + $0x50] sm:$0xff]
        %v1147 = vld [vmem:[%s1135 + $0x58] sm:$0xff]
        %v1148 = vld [vmem:[%s1135 + $0x60] sm:$0xff]
        %v1149 = vld [vmem:[%s1135 + $0x68] sm:$0xff]
        %v1150 = vld [vmem:[%s1135 + $0x70] sm:$0xff]
        %v1151 = vld [vmem:[%s1135 + $0x78] sm:$0xff]
        %1152 = vmatpush.msra.mxu0 %v1151
        %1153 = vmatpush.msra.mxu0 %v1150
        %1154 = vmatpush.msra.mxu0 %v1149
        %1155 = vmatpush.msra.mxu0 %v1148
        %1156 = vmatpush.msra.mxu0 %v1147
        %1157 = vmatpush.msra.mxu0 %v1146
        %1158 = vmatpush.msra.mxu0 %v1145
        %1159 = vmatpush.msra.mxu0 %v1144
        %1160 = vmatpush.msra.mxu0 %v1143
        %1161 = vmatpush.msra.mxu0 %v1142
        %1162 = vmatpush.msra.mxu0 %v1141
        %1163 = vmatpush.msra.mxu0 %v1140
        %1164 = vmatpush.msra.mxu0 %v1139
        %1165 = vmatpush.msra.mxu0 %v1138
        %1166 = vmatpush.msra.mxu0 %v1137
        %1167 = vmatpush.msra.mxu0 %v1136
        %1168 = vmatmul.f32.gmra.mxu0 %v1132
        %v1169 = vpop.f32.mrf.mxu0
        %v1170 = vadd.f32 0.0, %v1169
        %1171 = vdwg.mxu0
        %v1172 = vadd.f32 %v1134, %v1170
        %1173 = vst.msk [vmem:[#allocation4] sm:$0xff] %vm745, %v1172
        %s1174 = scalar_lea.vmem %s3, 96
        %v1175 = vld [vmem:[%s1174] sm:$0xff]
        %v1176 = vld [vmem:[%s1174 + $0x8] sm:$0xff]
        %v1177 = vld [vmem:[%s1174 + $0x10] sm:$0xff]
        %v1178 = vld [vmem:[%s1174 + $0x18] sm:$0xff]
        %s1179 = scalar_lea.vmem %s4, 3
        %v1180 = vld [vmem:[%s1179] sm:$0x1]
        %v1182 = vperm.slane %v1180, 0
        %1184 = vmatpush.msra.mxu0 0.0
        %1185 = vmatpush.msra.mxu0 0.0
        %1186 = vmatpush.msra.mxu0 0.0
        %1187 = vmatpush.msra.mxu0 0.0
        %1188 = vmatpush.msra.mxu0 0.0
        %1189 = vmatpush.msra.mxu0 0.0
        %1190 = vmatpush.msra.mxu0 0.0
        %1191 = vmatpush.msra.mxu0 0.0
        %1192 = vmatpush.msra.mxu0 0.0
        %1193 = vmatpush.msra.mxu0 0.0
        %1194 = vmatpush.msra.mxu0 0.0
        %1195 = vmatpush.msra.mxu0 0.0
        %1196 = vmatpush.msra.mxu0 %v1178
        %1197 = vmatpush.msra.mxu0 %v1177
        %1198 = vmatpush.msra.mxu0 %v1176
        %1199 = vmatpush.msra.mxu0 %v1175
        %1200 = vmatmul.f32.gmra.mxu0 %v756
        %v1201 = vpop.f32.mrf.mxu0
        %v1202 = vadd.f32 %v1182, %v1201
        %1203 = vdwg.mxu0
        %s1204 = scalar_lea.vmem [#allocation2], 24
        %v1205 = vld [vmem:[%s1204] sm:$0xff]
        %1206 = vmatpush.xpose.msra.mxu0 0.0
        %1207 = vmatpush.xpose.msra.mxu0 0.0
        %1208 = vmatpush.xpose.msra.mxu0 0.0
        %1209 = vmatpush.xpose.msra.mxu0 0.0
        %1210 = vmatpush.xpose.msra.mxu0 0.0
        %1211 = vmatpush.xpose.msra.mxu0 0.0
        %1212 = vmatpush.xpose.msra.mxu0 0.0
        %1213 = vmatpush.xpose.msra.mxu0 0.0
        %1214 = vmatpush.xpose.msra.mxu0 0.0
        %1215 = vmatpush.xpose.msra.mxu0 0.0
        %1216 = vmatpush.xpose.msra.mxu0 0.0
        %1217 = vmatpush.xpose.msra.mxu0 0.0
        %1218 = vmatpush.xpose.msra.mxu0 0.0
        %1219 = vmatpush.xpose.msra.mxu0 0.0
        %1220 = vmatpush.xpose.msra.mxu0 0.0
        %1221 = vmatpush.xpose.msra.mxu0 %v1205
        %1222 = vmatmul.f32.gmra.mxu0 %v1202
        %v1223 = vpop.f32.mrf.mxu0
        %v1224 = vadd.f32 0.0, %v1223
        %1225 = vdwg.mxu0
        %v1226 = vsel %vm799, %v1224, -inf
        %1227 = vmax.xlane.f32.xlu0 %v1226
        %v1228 = vpop.xlane.xlu0 %1227
        %v1229 = vsub.f32 %v1224, %v1228
        %v1230 = vmul.f32 %v1229, 1.442695
        %v1231 = vpow.pop %v1230
        %v1232 = vsel %vm799, %v1231, 0.0
        %1233 = vadd.xlane.f32.xlu0 %v1232
        %v1234 = vpop.xlane.xlu0 %1233
        %v1235 = vrcp.pop %v1234
        %v1236 = vmul.f32 %v1234, %v1235
        %v1237 = vsub.f32 1.0, %v1236
        %v1238 = vmul.f32 %v1235, %v1237
        %v1239 = vadd.f32 %v1235, %v1238
        %vm1240 = vweird.f32 %v1234
        %vm1241 = vweird.f32 %v1235
        %vm1242 = vmor %vm1240, %vm1241
        %v1243 = vsel %vm1242, %v1235, %v1239
        %v1244 = vand.u32 2147483647, %v1234
        %vm1245 = vcmp.eq.f32.partialorder %v1244, 8.507059e+37
        %v1246 = vand.u32 %v1234, 2147483648
        %v1247 = vor.u32 1.1754944e-38, %v1246
        %v1248 = vsel %vm1245, %v1247, %v1243
        %v1249 = vmul.f32 %v1231, %v1248
        %s1250 = scalar_lea.vmem %s465, 24 [#allocation7]
        %1251 = vst.msk [vmem:[%s1250] sm:$0xff] %vm799, %v1249
        %s1252 = scalar_lea.vmem [#allocation3], 24
        %v1253 = vld [vmem:[%s1252] sm:$0xff]
        %v1255 = vsel %vm799, %v1249, 0
        %1257 = vmatpush.msra.mxu0 0.0
        %1258 = vmatpush.msra.mxu0 0.0
        %1259 = vmatpush.msra.mxu0 0.0
        %1260 = vmatpush.msra.mxu0 0.0
        %1261 = vmatpush.msra.mxu0 0.0
        %1262 = vmatpush.msra.mxu0 0.0
        %1263 = vmatpush.msra.mxu0 0.0
        %1264 = vmatpush.msra.mxu0 0.0
        %1265 = vmatpush.msra.mxu0 0.0
        %1266 = vmatpush.msra.mxu0 0.0
        %1267 = vmatpush.msra.mxu0 0.0
        %1268 = vmatpush.msra.mxu0 0.0
        %1269 = vmatpush.msra.mxu0 0.0
        %1270 = vmatpush.msra.mxu0 0.0
        %1271 = vmatpush.msra.mxu0 0.0
        %1272 = vmatpush.msra.mxu0 %v1253
        %1273 = vmatmul.f32.gmra.mxu0 %v1255
        %v1274 = vpop.f32.mrf.mxu0
        %v1275 = vadd.f32 0.0, %v1274
        %1276 = vdwg.mxu0
        %v1277 = vld [vmem:[#allocation4] sm:$0xff]
        %s1278 = scalar_lea.vmem %s9, 384
        %v1279 = vld [vmem:[%s1278] sm:$0xff]
        %v1280 = vld [vmem:[%s1278 + $0x8] sm:$0xff]
        %v1281 = vld [vmem:[%s1278 + $0x10] sm:$0xff]
        %v1282 = vld [vmem:[%s1278 + $0x18] sm:$0xff]
        %v1283 = vld [vmem:[%s1278 + $0x20] sm:$0xff]
        %v1284 = vld [vmem:[%s1278 + $0x28] sm:$0xff]
        %v1285 = vld [vmem:[%s1278 + $0x30] sm:$0xff]
        %v1286 = vld [vmem:[%s1278 + $0x38] sm:$0xff]
        %v1287 = vld [vmem:[%s1278 + $0x40] sm:$0xff]
        %v1288 = vld [vmem:[%s1278 + $0x48] sm:$0xff]
        %v1289 = vld [vmem:[%s1278 + $0x50] sm:$0xff]
        %v1290 = vld [vmem:[%s1278 + $0x58] sm:$0xff]
        %v1291 = vld [vmem:[%s1278 + $0x60] sm:$0xff]
        %v1292 = vld [vmem:[%s1278 + $0x68] sm:$0xff]
        %v1293 = vld [vmem:[%s1278 + $0x70] sm:$0xff]
        %v1294 = vld [vmem:[%s1278 + $0x78] sm:$0xff]
        %1295 = vmatpush.msra.mxu0 %v1294
        %1296 = vmatpush.msra.mxu0 %v1293
        %1297 = vmatpush.msra.mxu0 %v1292
        %1298 = vmatpush.msra.mxu0 %v1291
        %1299 = vmatpush.msra.mxu0 %v1290
        %1300 = vmatpush.msra.mxu0 %v1289
        %1301 = vmatpush.msra.mxu0 %v1288
        %1302 = vmatpush.msra.mxu0 %v1287
        %1303 = vmatpush.msra.mxu0 %v1286
        %1304 = vmatpush.msra.mxu0 %v1285
        %1305 = vmatpush.msra.mxu0 %v1284
        %1306 = vmatpush.msra.mxu0 %v1283
        %1307 = vmatpush.msra.mxu0 %v1282
        %1308 = vmatpush.msra.mxu0 %v1281
        %1309 = vmatpush.msra.mxu0 %v1280
        %1310 = vmatpush.msra.mxu0 %v1279
        %1311 = vmatmul.f32.gmra.mxu0 %v1275
        %v1312 = vpop.f32.mrf.mxu0
        %v1313 = vadd.f32 0.0, %v1312
        %1314 = vdwg.mxu0
        %v1315 = vadd.f32 %v1277, %v1313
        %1316 = vst.msk [vmem:[#allocation4] sm:$0xff] %vm745, %v1315
        %v1317 = vld [vmem:[#allocation4] sm:$0xff]
        %v1318 = vld [vmem:[%s10] sm:$0x1]
        %v1320 = vperm.slane %v1318, 0
        %v1322 = vadd.f32 %v1317, %v1320
        %1323 = vst.msk [vmem:[%s458] sm:$0xff] %vm745, %v1322
        %s1324 = sand.u32 %s300, 1
        %s1325 = scalar_lea.sflag [#allocation6], %s1324
        %s1326 = sand.u32 %s300, 1
        %s1327 = smul.addr %s1326, 8
        %s1328 = scalar_lea.vmem [#allocation5], %s1327
        %s1329 = sand.u32 %s328, 1
        %s1330 = scalar_lea.sflag [#allocation8], %s1329
        %s1331 = sand.u32 %s328, 1
        %s1332 = smul.addr %s1331, 32
        %s1333 = scalar_lea.vmem [#allocation7], %s1332
        // Predicated region
        $region69: #{tpu_custom_call.1} parent=63 // pred_check
          %p1334 = pneg %p310
        $region70: #{tpu_custom_call.1} parent=63 // pred_check_branch
          %1336 = sbr.rel (%p1334) target = $region72
        $region71: #{tpu_custom_call.1} parent=63 // pred_region
          %1338 = vsyncadd %s1325, 0
          %s1339 = sadd.s32 %s35, %s34
          %s1340 = smul.addr %s1339, 8
          %s1341 = scalar_lea.hbm %s11, %s1340
          %s1343 = sshll.u32 %s1328, 4
          %s1344 = int_to_ptr.vmem [resolvable:$true] %s1343
          %s1345 = sshll.u32 %s1341, 4
          %s1346 = int_to_ptr.hbm [resolvable:$true] %s1345
          %1348 = dma.vmem_to_hbm [thread:$0]  %s1344, 128, %s1346, %s1325
        $region72: #{tpu_custom_call.1} parent=63 // pred_fallthru
          _
        // Predicated region
        $region73: #{tpu_custom_call.1} parent=63 // pred_check
          %p1349 = pneg %p338
        $region74: #{tpu_custom_call.1} parent=63 // pred_check_branch
          %1351 = sbr.rel (%p1349) target = $region76
        $region75: #{tpu_custom_call.1} parent=63 // pred_region
          %1353 = vsyncadd %s1330, 0
          %s1354 = smul.addr %s34, 4
          %s1355 = sadd.s32 %s35, %s1354
          %s1356 = smul.addr %s1355, 8
          %s1357 = scalar_lea.hbm %s12, %s1356
          %s1358 = sshll.u32 %s1333, 4
          %s1359 = int_to_ptr.vmem [resolvable:$true] %s1358
          %s1360 = sshll.u32 %s1357, 4
          %s1361 = int_to_ptr.hbm [resolvable:$true] %s1360
          %1366 = dma.vmem_to_hbm [thread:$0]  %s1359, 512, %s1361, %s1330, 128, 128, 8
        $region76: #{tpu_custom_call.1} parent=63 // pred_fallthru
          _
      $region64: #{tpu_custom_call.1} parent=5 // pred_fallthru
        _
      %p1367 = scmp.le.s32.totalorder 2, %s25
      // Predicated region
      $region77: #{tpu_custom_call.1} parent=5 // pred_check
        %p1368 = pneg %p1367
      $region78: #{tpu_custom_call.1} parent=5 // pred_check_branch
        %1370 = sbr.rel (%p1368) target = $region80
      $region79: #{tpu_custom_call.1} parent=5 // pred_region
        %s1371 = ssub.s32 %s25, 2
        // Predicated region
        $region81: #{tpu_custom_call.1} parent=79 // pred_check
          %p1372 = pneg %p316
        $region82: #{tpu_custom_call.1} parent=79 // pred_check_branch
          %1374 = sbr.rel (%p1372) target = $region84
        $region83: #{tpu_custom_call.1} parent=79 // pred_region
          %s1375 = sand.u32 %s301, 1
          %s1376 = scalar_lea.sflag [#allocation6], %s1375
          %s1377 = sand.u32 %s301, 1
          %s1378 = smul.addr %s1377, 8
          %s1379 = scalar_lea.vmem [#allocation5], %s1378
          %1381 = dma.done %s1376, 128
        $region84: #{tpu_custom_call.1} parent=79 // pred_fallthru
          _
        // Predicated region
        $region85: #{tpu_custom_call.1} parent=79 // pred_check
          %p1382 = pneg %p344
        $region86: #{tpu_custom_call.1} parent=79 // pred_check_branch
          %1384 = sbr.rel (%p1382) target = $region88
        $region87: #{tpu_custom_call.1} parent=79 // pred_region
          %s1385 = sand.u32 %s329, 1
          %s1386 = scalar_lea.sflag [#allocation8], %s1385
          %s1387 = sand.u32 %s329, 1
          %s1388 = smul.addr %s1387, 32
          %s1389 = scalar_lea.vmem [#allocation7], %s1388
          %1391 = dma.done %s1386, 512
        $region88: #{tpu_custom_call.1} parent=79 // pred_fallthru
          _
      $region80: #{tpu_custom_call.1} parent=5 // pred_fallthru
        _
    $region6: #{tpu_custom_call.1} parent=1 // loop_footer
      %s29 = sadd.s32 1, %s25
    $region7: #{tpu_custom_call.1} parent=1 // loop_footer_branch
      %24 = sbr.rel target = $region3
    $region8: #{tpu_custom_call.1} parent=1 // loop_exit
      _
    %1392 = vsyncpa [#allocation6], 1
    %s1393 = scalar_lea.sflag [#allocation6], 1
    %1394 = vsyncpa %s1393, 1
    %1395 = vsyncpa [#allocation8], 1
    %s1396 = scalar_lea.sflag [#allocation8], 1
    %1397 = vsyncpa %s1396, 1

// kernel: tpu_custom_call.1
$region0: #{tpu_custom_call.1}
  #allocation0 [shape = 'u32[]', space=smem, size = 0x4, offset = 0x4, fixed_abs, tag = 'smem constant byte address 0x4 - core index']
  #allocation1 [shape = 'u32[72,128]{1,0:T(1,128)}', space=vmem, size = 0x9000, scoped, tag = 'internal scratch']
  #allocation2 [shape = 'f32[4,8,128]{2,1,0:T(8,128)}', space=vmem, size = 0x4000, scoped, tag = 'scratch operand']
  #allocation3 [shape = 'f32[4,8,128]{2,1,0:T(8,128)}', space=vmem, size = 0x4000, scoped, tag = 'scratch operand']
  #allocation4 [shape = 'f32[8,32]{1,0:T(8,128)}', space=vmem, size = 0x1000, scoped, tag = 'scratch operand']
  %s0 = inlined_call_operand.vmem [shape: f32[2,8,32], index: 0, kind: input, shape index: {}]
  %s1 = inlined_call_operand.vmem [shape: f32[2,8,32], index: 1, kind: input, shape index: {}]
  %s2 = inlined_call_operand.vmem [shape: f32[2,8,32], index: 2, kind: input, shape index: {}]
  %s3 = inlined_call_operand.vmem [shape: f32[4,32,128], index: 3, kind: input, shape index: {}]
  %s4 = inlined_call_operand.vmem [shape: f32[4,1,128], index: 4, kind: input, shape index: {}]
  %s5 = inlined_call_operand.vmem [shape: f32[4,32,128], index: 5, kind: input, shape index: {}]
  %s6 = inlined_call_operand.vmem [shape: f32[4,1,128], index: 6, kind: input, shape index: {}]
  %s7 = inlined_call_operand.vmem [shape: f32[4,32,128], index: 7, kind: input, shape index: {}]
  %s8 = inlined_call_operand.vmem [shape: f32[4,1,128], index: 8, kind: input, shape index: {}]
  %s9 = inlined_call_operand.vmem [shape: f32[4,128,32], index: 9, kind: input, shape index: {}]
  %s10 = inlined_call_operand.vmem [shape: f32[1,32], index: 10, kind: input, shape index: {}]
  %s11 = inlined_call_operand.hbm [shape: f32[2,8,32], index: 11, kind: output, shape index: {0}]
  %s12 = inlined_call_operand.hbm [shape: f32[2,4,8,8], index: 12, kind: output, shape index: {1}]
  %13 = xla_tuple %s11, %s12
  %s14 = sld [smem:[#allocation0]]
  $region89: #{tpu_custom_call.1} parent=0
    _
  %s16 = ssub.s32 1, %s14
  %s17 = scalar_select 0, %s16, %s14
  $region1: #{tpu_custom_call.1} parent=0
    #allocation5 [shape = 'u8[8192]{0}', space=vmem, size = 0x2000, scoped, tag = 'output window, operand 0']
    #allocation6 [shape = 's32[2]{0}', space=sflag, size = 0x8, scoped, tag = 'scoped memory for tpu_custom_call.1']
    #allocation7 [shape = 'u8[32768]{0}', space=vmem, size = 0x8000, scoped, tag = 'output window, operand 1']
    #allocation8 [shape = 's32[2]{0}', space=sflag, size = 0x8, scoped, tag = 'scoped memory for tpu_custom_call.1']
    %18 = vsyncpa [#allocation6], 0
    %s19 = scalar_lea.sflag [#allocation6], 1
    %20 = vsyncpa %s19, 0
    %21 = vsyncpa [#allocation8], 0
    %s22 = scalar_lea.sflag [#allocation8], 1
    %23 = vsyncpa %s22, 0
    loop: start=0, step=1, limit=4
    $region2: #{tpu_custom_call.1} parent=1 // loop_pre_header
      _
    $region3: #{tpu_custom_call.1} parent=1 // loop_header
      %s25 = sphi 0, %s29
      %p26 = scmp.ge.s32.totalorder %s25, 4
      %s32 = sphi 0, %s44
      %s33 = sphi 0, %s40
      %s34 = sphi 0, %s32
      %s35 = sphi 0, %s33
      %s36 = sphi 0, %s34
      %s37 = sphi 0, %s35
      %s49 = sphi 0, %s51
      %s52 = sphi 0, %s49
      %s53 = sphi 0, %s52
      %s69 = sphi 0, %s53
      %s75 = sphi 0, %s77
      %s78 = sphi 0, %s75
      %s79 = sphi 0, %s78
      %s95 = sphi 0, %s79
      %s101 = sphi 0, %s103
      %s104 = sphi 0, %s101
      %s105 = sphi 0, %s104
      %s121 = sphi 0, %s105
      %s125 = sphi 0, %s125
      %s127 = sphi 0, %s125
      %s128 = sphi 0, %s127
      %s142 = sphi 0, %s128
      %s146 = sphi 0, %s146
      %s148 = sphi 0, %s146
      %s149 = sphi 0, %s148
      %s163 = sphi 0, %s149
      %s167 = sphi 0, %s167
      %s169 = sphi 0, %s167
      %s170 = sphi 0, %s169
      %s184 = sphi 0, %s170
      %s188 = sphi 0, %s188
      %s190 = sphi 0, %s188
      %s191 = sphi 0, %s190
      %s205 = sphi 0, %s191
      %s209 = sphi 0, %s209
      %s211 = sphi 0, %s209
      %s212 = sphi 0, %s211
      %s226 = sphi 0, %s212
      %s230 = sphi 0, %s230
      %s232 = sphi 0, %s230
      %s233 = sphi 0, %s232
      %s247 = sphi 0, %s233
      %s251 = sphi 0, %s251
      %s253 = sphi 0, %s251
      %s254 = sphi 0, %s253
      %s268 = sphi 0, %s254
      %s272 = sphi 0, %s272
      %s274 = sphi 0, %s272
      %s275 = sphi 0, %s274
      %s289 = sphi 0, %s275
      %s297 = sphi 0, %s299
      %s300 = sphi 0, %s297
      %s301 = sphi 0, %s300
      %s317 = sphi 0, %s301
      %s325 = sphi 0, %s327
      %s328 = sphi 0, %s325
      %s329 = sphi 0, %s328
      %s345 = sphi 0, %s329
    $region4: #{tpu_custom_call.1} parent=1 // loop_header_branch
      %28 = sbr.rel (%p26) target = $region8
    $region5: #{tpu_custom_call.1} parent=1 // loop_body
      %s30 = ssub.s32 %s25, 1
      %s31 = ssub.s32 %s25, 2
      %s38 = sadd.s32 1, %s33
      %p39 = scmp.ge.s32.totalorder %s38, 1
      %s40 = scalar_select %p39, 0, %s38
      %s41 = sadd.s32 1, %s32
      %s42 = scalar_select %p39, %s41, %s32
      %p43 = scmp.ge.s32.totalorder %s42, 2
      %s44 = scalar_select %p43, 0, %s42
      %s45 = ssub.s32 %s32, %s44
      %s46 = ssub.s32 %s33, %s40
      %s47 = sor.u32 %s45, %s46
      %p48 = scmp.eq.s32.totalorder %s47, 0
      %s50 = sadd.s32 %s49, 1
      %s51 = scalar_select %p48, %s49, %s50
      %p54 = pneg %p48
      %p55 = scmp.eq.s32.totalorder %s25, 1
      %p56 = por %p54, %p55
      %p57 = scmp.ne.s32.totalorder %s49, %s52
      %p58 = scmp.eq.s32.totalorder %s25, 0
      %p59 = por %p57, %p58
      %p60 = scmp.ne.s32.totalorder %s49, %s52
      %p61 = scmp.eq.s32.totalorder %s30, 1
      %p62 = por %p60, %p61
      %p63 = scmp.ne.s32.totalorder %s52, %s53
      %p64 = scmp.eq.s32.totalorder %s30, 0
      %p65 = por %p63, %p64
      %p66 = scmp.ne.s32.totalorder %s52, %s53
      %p67 = scmp.eq.s32.totalorder %s31, 1
      %p68 = por %p66, %p67
      %p70 = scmp.ne.s32.totalorder %s53, %s69
      %p71 = scmp.eq.s32.totalorder %s31, 0
      %p72 = por %p70, %p71
      %s73 = ssub.s32 %s32, %s44
      %p74 = scmp.eq.s32.totalorder %s73, 0
      %s76 = sadd.s32 %s75, 1
      %s77 = scalar_select %p74, %s75, %s76
      %p80 = pneg %p74
      %p81 = scmp.eq.s32.totalorder %s25, 1
      %p82 = por %p80, %p81
      %p83 = scmp.ne.s32.totalorder %s75, %s78
      %p84 = scmp.eq.s32.totalorder %s25, 0
      %p85 = por %p83, %p84
      %p86 = scmp.ne.s32.totalorder %s75, %s78
      %p87 = scmp.eq.s32.totalorder %s30, 1
      %p88 = por %p86, %p87
      %p89 = scmp.ne.s32.totalorder %s78, %s79
      %p90 = scmp.eq.s32.totalorder %s30, 0
      %p91 = por %p89, %p90
      %p92 = scmp.ne.s32.totalorder %s78, %s79
      %p93 = scmp.eq.s32.totalorder %s31, 1
      %p94 = por %p92, %p93
      %p96 = scmp.ne.s32.totalorder %s79, %s95
      %p97 = scmp.eq.s32.totalorder %s31, 0
      %p98 = por %p96, %p97
      %s99 = ssub.s32 %s32, %s44
      %p100 = scmp.eq.s32.totalorder %s99, 0
      %s102 = sadd.s32 %s101, 1
      %s103 = scalar_select %p100, %s101, %s102
      %p106 = pneg %p100
      %p107 = scmp.eq.s32.totalorder %s25, 1
      %p108 = por %p106, %p107
      %p109 = scmp.ne.s32.totalorder %s101, %s104
      %p110 = scmp.eq.s32.totalorder %s25, 0
      %p111 = por %p109, %p110
      %p112 = scmp.ne.s32.totalorder %s101, %s104
      %p113 = scmp.eq.s32.totalorder %s30, 1
      %p114 = por %p112, %p113
      %p115 = scmp.ne.s32.totalorder %s104, %s105
      %p116 = scmp.eq.s32.totalorder %s30, 0
      %p117 = por %p115, %p116
      %p118 = scmp.ne.s32.totalorder %s104, %s105
      %p119 = scmp.eq.s32.totalorder %s31, 1
      %p120 = por %p118, %p119
      %p122 = scmp.ne.s32.totalorder %s105, %s121
      %p123 = scmp.eq.s32.totalorder %s31, 0
      %p124 = por %p122, %p123
      %s126 = sadd.s32 %s125, 1
      %p129 = scmp.eq.s32.totalorder %s25, 1
      %p130 = scmp.ne.s32.totalorder %s125, %s127
      %p131 = scmp.eq.s32.totalorder %s25, 0
      %p132 = por %p130, %p131
      %p133 = scmp.ne.s32.totalorder %s125, %s127
      %p134 = scmp.eq.s32.totalorder %s30, 1
      %p135 = por %p133, %p134
      %p136 = scmp.ne.s32.totalorder %s127, %s128
      %p137 = scmp.eq.s32.totalorder %s30, 0
      %p138 = por %p136, %p137
      %p139 = scmp.ne.s32.totalorder %s127, %s128
      %p140 = scmp.eq.s32.totalorder %s31, 1
      %p141 = por %p139, %p140
      %p143 = scmp.ne.s32.totalorder %s128, %s142
      %p144 = scmp.eq.s32.totalorder %s31, 0
      %p145 = por %p143, %p144
      %s147 = sadd.s32 %s146, 1
      %p150 = scmp.eq.s32.totalorder %s25, 1
      %p151 = scmp.ne.s32.totalorder %s146, %s148
      %p152 = scmp.eq.s32.totalorder %s25, 0
      %p153 = por %p151, %p152
      %p154 = scmp.ne.s32.totalorder %s146, %s148
      %p155 = scmp.eq.s32.totalorder %s30, 1
      %p156 = por %p154, %p155
      %p157 = scmp.ne.s32.totalorder %s148, %s149
      %p158 = scmp.eq.s32.totalorder %s30, 0
      %p159 = por %p157, %p158
      %p160 = scmp.ne.s32.totalorder %s148, %s149
      %p161 = scmp.eq.s32.totalorder %s31, 1
      %p162 = por %p160, %p161
      %p164 = scmp.ne.s32.totalorder %s149, %s163
      %p165 = scmp.eq.s32.totalorder %s31, 0
      %p166 = por %p164, %p165
      %s168 = sadd.s32 %s167, 1
      %p171 = scmp.eq.s32.totalorder %s25, 1
      %p172 = scmp.ne.s32.totalorder %s167, %s169
      %p173 = scmp.eq.s32.totalorder %s25, 0
      %p174 = por %p172, %p173
      %p175 = scmp.ne.s32.totalorder %s167, %s169
      %p176 = scmp.eq.s32.totalorder %s30, 1
      %p177 = por %p175, %p176
      %p178 = scmp.ne.s32.totalorder %s169, %s170
      %p179 = scmp.eq.s32.totalorder %s30, 0
      %p180 = por %p178, %p179
      %p181 = scmp.ne.s32.totalorder %s169, %s170
      %p182 = scmp.eq.s32.totalorder %s31, 1
      %p183 = por %p181, %p182
      %p185 = scmp.ne.s32.totalorder %s170, %s184
      %p186 = scmp.eq.s32.totalorder %s31, 0
      %p187 = por %p185, %p186
      %s189 = sadd.s32 %s188, 1
      %p192 = scmp.eq.s32.totalorder %s25, 1
      %p193 = scmp.ne.s32.totalorder %s188, %s190
      %p194 = scmp.eq.s32.totalorder %s25, 0
      %p195 = por %p193, %p194
      %p196 = scmp.ne.s32.totalorder %s188, %s190
      %p197 = scmp.eq.s32.totalorder %s30, 1
      %p198 = por %p196, %p197
      %p199 = scmp.ne.s32.totalorder %s190, %s191
      %p200 = scmp.eq.s32.totalorder %s30, 0
      %p201 = por %p199, %p200
      %p202 = scmp.ne.s32.totalorder %s190, %s191
      %p203 = scmp.eq.s32.totalorder %s31, 1
      %p204 = por %p202, %p203
      %p206 = scmp.ne.s32.totalorder %s191, %s205
      %p207 = scmp.eq.s32.totalorder %s31, 0
      %p208 = por %p206, %p207
      %s210 = sadd.s32 %s209, 1
      %p213 = scmp.eq.s32.totalorder %s25, 1
      %p214 = scmp.ne.s32.totalorder %s209, %s211
      %p215 = scmp.eq.s32.totalorder %s25, 0
      %p216 = por %p214, %p215
      %p217 = scmp.ne.s32.totalorder %s209, %s211
      %p218 = scmp.eq.s32.totalorder %s30, 1
      %p219 = por %p217, %p218
      %p220 = scmp.ne.s32.totalorder %s211, %s212
      %p221 = scmp.eq.s32.totalorder %s30, 0
      %p222 = por %p220, %p221
      %p223 = scmp.ne.s32.totalorder %s211, %s212
      %p224 = scmp.eq.s32.totalorder %s31, 1
      %p225 = por %p223, %p224
      %p227 = scmp.ne.s32.totalorder %s212, %s226
      %p228 = scmp.eq.s32.totalorder %s31, 0
      %p229 = por %p227, %p228
      %s231 = sadd.s32 %s230, 1
      %p234 = scmp.eq.s32.totalorder %s25, 1
      %p235 = scmp.ne.s32.totalorder %s230, %s232
      %p236 = scmp.eq.s32.totalorder %s25, 0
      %p237 = por %p235, %p236
      %p238 = scmp.ne.s32.totalorder %s230, %s232
      %p239 = scmp.eq.s32.totalorder %s30, 1
      %p240 = por %p238, %p239
      %p241 = scmp.ne.s32.totalorder %s232, %s233
      %p242 = scmp.eq.s32.totalorder %s30, 0
      %p243 = por %p241, %p242
      %p244 = scmp.ne.s32.totalorder %s232, %s233
      %p245 = scmp.eq.s32.totalorder %s31, 1
      %p246 = por %p244, %p245
      %p248 = scmp.ne.s32.totalorder %s233, %s247
      %p249 = scmp.eq.s32.totalorder %s31, 0
      %p250 = por %p248, %p249
      %s252 = sadd.s32 %s251, 1
      %p255 = scmp.eq.s32.totalorder %s25, 1
      %p256 = scmp.ne.s32.totalorder %s251, %s253
      %p257 = scmp.eq.s32.totalorder %s25, 0
      %p258 = por %p256, %p257
      %p259 = scmp.ne.s32.totalorder %s251, %s253
      %p260 = scmp.eq.s32.totalorder %s30, 1
      %p261 = por %p259, %p260
      %p262 = scmp.ne.s32.totalorder %s253, %s254
      %p263 = scmp.eq.s32.totalorder %s30, 0
      %p264 = por %p262, %p263
      %p265 = scmp.ne.s32.totalorder %s253, %s254
      %p266 = scmp.eq.s32.totalorder %s31, 1
      %p267 = por %p265, %p266
      %p269 = scmp.ne.s32.totalorder %s254, %s268
      %p270 = scmp.eq.s32.totalorder %s31, 0
      %p271 = por %p269, %p270
      %s273 = sadd.s32 %s272, 1
      %p276 = scmp.eq.s32.totalorder %s25, 1
      %p277 = scmp.ne.s32.totalorder %s272, %s274
      %p278 = scmp.eq.s32.totalorder %s25, 0
      %p279 = por %p277, %p278
      %p280 = scmp.ne.s32.totalorder %s272, %s274
      %p281 = scmp.eq.s32.totalorder %s30, 1
      %p282 = por %p280, %p281
      %p283 = scmp.ne.s32.totalorder %s274, %s275
      %p284 = scmp.eq.s32.totalorder %s30, 0
      %p285 = por %p283, %p284
      %p286 = scmp.ne.s32.totalorder %s274, %s275
      %p287 = scmp.eq.s32.totalorder %s31, 1
      %p288 = por %p286, %p287
      %p290 = scmp.ne.s32.totalorder %s275, %s289
      %p291 = scmp.eq.s32.totalorder %s31, 0
      %p292 = por %p290, %p291
      %s293 = ssub.s32 %s32, %s44
      %s294 = ssub.s32 %s33, %s40
      %s295 = sor.u32 %s293, %s294
      %p296 = scmp.eq.s32.totalorder %s295, 0
      %s298 = sadd.s32 %s297, 1
      %s299 = scalar_select %p296, %s297, %s298
      %p302 = pneg %p296
      %p303 = scmp.eq.s32.totalorder %s25, 1
      %p304 = por %p302, %p303
      %p305 = scmp.ne.s32.totalorder %s297, %s300
      %p306 = scmp.eq.s32.totalorder %s25, 0
      %p307 = por %p305, %p306
      %p308 = scmp.ne.s32.totalorder %s297, %s300
      %p309 = scmp.eq.s32.totalorder %s30, 1
      %p310 = por %p308, %p309
      %p311 = scmp.ne.s32.totalorder %s300, %s301
      %p312 = scmp.eq.s32.totalorder %s30, 0
      %p313 = por %p311, %p312
      %p314 = scmp.ne.s32.totalorder %s300, %s301
      %p315 = scmp.eq.s32.totalorder %s31, 1
      %p316 = por %p314, %p315
      %p318 = scmp.ne.s32.totalorder %s301, %s317
      %p319 = scmp.eq.s32.totalorder %s31, 0
      %p320 = por %p318, %p319
      %s321 = ssub.s32 %s32, %s44
      %s322 = ssub.s32 %s33, %s40
      %s323 = sor.u32 %s321, %s322
      %p324 = scmp.eq.s32.totalorder %s323, 0
      %s326 = sadd.s32 %s325, 1
      %s327 = scalar_select %p324, %s325, %s326
      %p330 = pneg %p324
      %p331 = scmp.eq.s32.totalorder %s25, 1
      %p332 = por %p330, %p331
      %p333 = scmp.ne.s32.totalorder %s325, %s328
      %p334 = scmp.eq.s32.totalorder %s25, 0
      %p335 = por %p333, %p334
      %p336 = scmp.ne.s32.totalorder %s325, %s328
      %p337 = scmp.eq.s32.totalorder %s30, 1
      %p338 = por %p336, %p337
      %p339 = scmp.ne.s32.totalorder %s328, %s329
      %p340 = scmp.eq.s32.totalorder %s30, 0
      %p341 = por %p339, %p340
      %p342 = scmp.ne.s32.totalorder %s328, %s329
      %p343 = scmp.eq.s32.totalorder %s31, 1
      %p344 = por %p342, %p343
      %p346 = scmp.ne.s32.totalorder %s329, %s345
      %p347 = scmp.eq.s32.totalorder %s31, 0
      %p348 = por %p346, %p347
      %p349 = scmp.le.s32.totalorder 1, %s25
      %p350 = scmp.lt.s32.totalorder %s25, 3
      %p351 = pnand %p349, %p350
      %p352 = pneg %p351
      // Predicated region
      $region9: #{tpu_custom_call.1} parent=5 // pred_check
        _
      $region10: #{tpu_custom_call.1} parent=5 // pred_check_branch
        %354 = sbr.rel (%p351) target = $region12
      $region11: #{tpu_custom_call.1} parent=5 // pred_region
        %s355 = ssub.s32 %s25, 1
        // Predicated region
        $region13: #{tpu_custom_call.1} parent=11 // pred_check
          %p356 = pneg %p138
        $region14: #{tpu_custom_call.1} parent=11 // pred_check_branch
          %358 = sbr.rel (%p356) target = $region16
        $region15: #{tpu_custom_call.1} parent=11 // pred_region
          _
        $region16: #{tpu_custom_call.1} parent=11 // pred_fallthru
          _
        // Predicated region
        $region17: #{tpu_custom_call.1} parent=11 // pred_check
          %p359 = pneg %p159
        $region18: #{tpu_custom_call.1} parent=11 // pred_check_branch
          %361 = sbr.rel (%p359) target = $region20
        $region19: #{tpu_custom_call.1} parent=11 // pred_region
          _
        $region20: #{tpu_custom_call.1} parent=11 // pred_fallthru
          _
        // Predicated region
        $region21: #{tpu_custom_call.1} parent=11 // pred_check
          %p362 = pneg %p180
        $region22: #{tpu_custom_call.1} parent=11 // pred_check_branch
          %364 = sbr.rel (%p362) target = $region24
        $region23: #{tpu_custom_call.1} parent=11 // pred_region
          _
        $region24: #{tpu_custom_call.1} parent=11 // pred_fallthru
          _
        // Predicated region
        $region25: #{tpu_custom_call.1} parent=11 // pred_check
          %p365 = pneg %p201
        $region26: #{tpu_custom_call.1} parent=11 // pred_check_branch
          %367 = sbr.rel (%p365) target = $region28
        $region27: #{tpu_custom_call.1} parent=11 // pred_region
          _
        $region28: #{tpu_custom_call.1} parent=11 // pred_fallthru
          _
        // Predicated region
        $region29: #{tpu_custom_call.1} parent=11 // pred_check
          %p368 = pneg %p222
        $region30: #{tpu_custom_call.1} parent=11 // pred_check_branch
          %370 = sbr.rel (%p368) target = $region32
        $region31: #{tpu_custom_call.1} parent=11 // pred_region
          _
        $region32: #{tpu_custom_call.1} parent=11 // pred_fallthru
          _
        // Predicated region
        $region33: #{tpu_custom_call.1} parent=11 // pred_check
          %p371 = pneg %p243
        $region34: #{tpu_custom_call.1} parent=11 // pred_check_branch
          %373 = sbr.rel (%p371) target = $region36
        $region35: #{tpu_custom_call.1} parent=11 // pred_region
          _
        $region36: #{tpu_custom_call.1} parent=11 // pred_fallthru
          _
        // Predicated region
        $region37: #{tpu_custom_call.1} parent=11 // pred_check
          %p374 = pneg %p264
        $region38: #{tpu_custom_call.1} parent=11 // pred_check_branch
          %376 = sbr.rel (%p374) target = $region40
        $region39: #{tpu_custom_call.1} parent=11 // pred_region
          _
        $region40: #{tpu_custom_call.1} parent=11 // pred_fallthru
          _
        // Predicated region
        $region41: #{tpu_custom_call.1} parent=11 // pred_check
          %p377 = pneg %p285
        $region42: #{tpu_custom_call.1} parent=11 // pred_check_branch
          %379 = sbr.rel (%p377) target = $region44
        $region43: #{tpu_custom_call.1} parent=11 // pred_region
          _
        $region44: #{tpu_custom_call.1} parent=11 // pred_fallthru
          _
      $region12: #{tpu_custom_call.1} parent=5 // pred_fallthru
        _
      %p380 = scmp.lt.s32.totalorder %s25, 2
      // Predicated region
      $region45: #{tpu_custom_call.1} parent=5 // pred_check
        %p381 = pneg %p380
      $region46: #{tpu_custom_call.1} parent=5 // pred_check_branch
        %383 = sbr.rel (%p381) target = $region48
      $region47: #{tpu_custom_call.1} parent=5 // pred_region
        // Predicated region
        $region49: #{tpu_custom_call.1} parent=47 // pred_check
          %p384 = pneg %p59
        $region50: #{tpu_custom_call.1} parent=47 // pred_check_branch
          %386 = sbr.rel (%p384) target = $region52
        $region51: #{tpu_custom_call.1} parent=47 // pred_region
          %p387 = scmp.lt.s32.totalorder %s32, 1
          %s388 = scalar_select %p387, %s32, 1
          %p389 = scmp.lt.s32.totalorder %s33, 0
          %s390 = scalar_select %p389, %s33, 0
          %s391 = sadd.s32 %s390, %s388
          %s392 = smul.addr %s391, 8
          %s393 = scalar_lea.vmem %s0, %s392
        $region52: #{tpu_custom_call.1} parent=47 // pred_fallthru
          _
        // Predicated region
        $region53: #{tpu_custom_call.1} parent=47 // pred_check
          %p394 = pneg %p85
        $region54: #{tpu_custom_call.1} parent=47 // pred_check_branch
          %396 = sbr.rel (%p394) target = $region56
        $region55: #{tpu_custom_call.1} parent=47 // pred_region
          %p397 = scmp.lt.s32.totalorder %s32, 1
          %s398 = scalar_select %p397, %s32, 1
          %s399 = smul.addr %s398, 8
          %s400 = scalar_lea.vmem %s1, %s399
        $region56: #{tpu_custom_call.1} parent=47 // pred_fallthru
          _
        // Predicated region
        $region57: #{tpu_custom_call.1} parent=47 // pred_check
          %p401 = pneg %p111
        $region58: #{tpu_custom_call.1} parent=47 // pred_check_branch
          %403 = sbr.rel (%p401) target = $region60
        $region59: #{tpu_custom_call.1} parent=47 // pred_region
          %p404 = scmp.lt.s32.totalorder %s32, 1
          %s405 = scalar_select %p404, %s32, 1
          %s406 = smul.addr %s405, 8
          %s407 = scalar_lea.vmem %s2, %s406
        $region60: #{tpu_custom_call.1} parent=47 // pred_fallthru
          _
      $region48: #{tpu_custom_call.1} parent=5 // pred_fallthru
        _
      %p408 = scmp.le.s32.totalorder 1, %s25
      %p409 = scmp.lt.s32.totalorder %s25, 3
      %p410 = pnand %p408, %p409
      %p411 = pneg %p410
      // Predicated region
      $region61: #{tpu_custom_call.1} parent=5 // pred_check
        _
      $region62: #{tpu_custom_call.1} parent=5 // pred_check_branch
        %413 = sbr.rel (%p410) target = $region64
      $region63: #{tpu_custom_call.1} parent=5 // pred_region
        %s414 = ssub.s32 %s25, 1
        %p415 = scmp.lt.s32.totalorder %s34, 1
        %s416 = scalar_select %p415, %s34, 1
        %p417 = scmp.lt.s32.totalorder %s35, 0
        %s418 = scalar_select %p417, %s35, 0
        %s419 = sadd.s32 %s418, %s416
        %s420 = smul.addr %s419, 8
        %s421 = scalar_lea.vmem %s0, %s420
        %p422 = pneg %p65
        %p423 = pneg %p62
        %p424 = scmp.lt.s32.totalorder %s34, 1
        %s425 = scalar_select %p424, %s34, 1
        %s426 = smul.addr %s425, 8
        %s427 = scalar_lea.vmem %s1, %s426
        %p428 = pneg %p91
        %p429 = pneg %p88
        %p430 = scmp.lt.s32.totalorder %s34, 1
        %s431 = scalar_select %p430, %s34, 1
        %s432 = smul.addr %s431, 8
        %s433 = scalar_lea.vmem %s2, %s432
        %p434 = pneg %p117
        %p435 = pneg %p114
        %p436 = pneg %p138
        %p437 = pneg %p135
        %p438 = pneg %p159
        %p439 = pneg %p156
        %p440 = pneg %p180
        %p441 = pneg %p177
        %p442 = pneg %p201
        %p443 = pneg %p198
        %p444 = pneg %p222
        %p445 = pneg %p219
        %p446 = pneg %p243
        %p447 = pneg %p240
        %p448 = pneg %p264
        %p449 = pneg %p261
        %p450 = pneg %p285
        %p451 = pneg %p282
        %p452 = pneg %p313
        %p453 = pneg %p310
        %s454 = sand.u32 %s300, 1
        %s455 = scalar_lea.sflag [#allocation6], %s454
        %s456 = sand.u32 %s300, 1
        %s457 = smul.addr %s456, 8
        %s458 = scalar_lea.vmem [#allocation5], %s457
        %p459 = pneg %p341
        %p460 = pneg %p338
        %s461 = sand.u32 %s328, 1
        %s462 = scalar_lea.sflag [#allocation8], %s461
        %s463 = sand.u32 %s328, 1
        %s464 = smul.addr %s463, 32
        %s465 = scalar_lea.vmem [#allocation7], %s464
        %p466 = scmp.lt.s32.totalorder %s34, 1
        %s467 = scalar_select %p466, %s34, 1
        %p468 = scmp.lt.s32.totalorder %s35, 0
        %s469 = scalar_select %p468, %s35, 0
        %s470 = sadd.s32 %s469, %s467
        %s471 = smul.addr %s470, 8
        %s472 = scalar_lea.vmem %s0, %s471
        %p473 = scmp.lt.s32.totalorder %s34, 1
        %s474 = scalar_select %p473, %s34, 1
        %s475 = smul.addr %s474, 8
        %s476 = scalar_lea.vmem %s1, %s475
        %p477 = scmp.lt.s32.totalorder %s34, 1
        %s478 = scalar_select %p477, %s34, 1
        %s479 = smul.addr %s478, 8
        %s480 = scalar_lea.vmem %s2, %s479
        %p481 = scmp.eq.s32.totalorder %s35, 0
        // Predicated region
        $region65: #{tpu_custom_call.1} parent=63 // pred_check
          %p482 = pneg %p481
        $region66: #{tpu_custom_call.1} parent=63 // pred_check_branch
          %484 = sbr.rel (%p482) target = $region68
        $region67: #{tpu_custom_call.1} parent=63 // pred_region
          %v485 = vld [vmem:[%s476] sm:$0xff]
          %v486 = vld [vmem:[%s480] sm:$0xff]
          %v487 = vld [vmem:[%s5] sm:$0xff]
          %v488 = vld [vmem:[%s5 + $0x8] sm:$0xff]
          %v489 = vld [vmem:[%s5 + $0x10] sm:$0xff]
          %v490 = vld [vmem:[%s5 + $0x18] sm:$0xff]
          %v491 = vld [vmem:[%s6] sm:$0x1]
          %v493 = vperm.slane %v491, 0
          %vm495 = vcmask 261120
          %v497 = vsel %vm495, %v485, 0
          %499 = vmatpush.msra.mxu0 0.0
          %500 = vmatpush.msra.mxu0 0.0
          %501 = vmatpush.msra.mxu0 0.0
          %502 = vmatpush.msra.mxu0 0.0
          %503 = vmatpush.msra.mxu0 0.0
          %504 = vmatpush.msra.mxu0 0.0
          %505 = vmatpush.msra.mxu0 0.0
          %506 = vmatpush.msra.mxu0 0.0
          %507 = vmatpush.msra.mxu0 0.0
          %508 = vmatpush.msra.mxu0 0.0
          %509 = vmatpush.msra.mxu0 0.0
          %510 = vmatpush.msra.mxu0 0.0
          %511 = vmatpush.msra.mxu0 %v490
          %512 = vmatpush.msra.mxu0 %v489
          %513 = vmatpush.msra.mxu0 %v488
          %514 = vmatpush.msra.mxu0 %v487
          %515 = vmatmul.f32.gmra.mxu0 %v497
          %v516 = vpop.f32.mrf.mxu0
          %v517 = vadd.f32 %v493, %v516
          %518 = vdwg.mxu0
          %v519 = vld [vmem:[%s7] sm:$0xff]
          %v520 = vld [vmem:[%s7 + $0x8] sm:$0xff]
          %v521 = vld [vmem:[%s7 + $0x10] sm:$0xff]
          %v522 = vld [vmem:[%s7 + $0x18] sm:$0xff]
          %v523 = vld [vmem:[%s8] sm:$0x1]
          %v525 = vperm.slane %v523, 0
          %v528 = vsel %vm495, %v486, 0
          %530 = vmatpush.msra.mxu0 0.0
          %531 = vmatpush.msra.mxu0 0.0
          %532 = vmatpush.msra.mxu0 0.0
          %533 = vmatpush.msra.mxu0 0.0
          %534 = vmatpush.msra.mxu0 0.0
          %535 = vmatpush.msra.mxu0 0.0
          %536 = vmatpush.msra.mxu0 0.0
          %537 = vmatpush.msra.mxu0 0.0
          %538 = vmatpush.msra.mxu0 0.0
          %539 = vmatpush.msra.mxu0 0.0
          %540 = vmatpush.msra.mxu0 0.0
          %541 = vmatpush.msra.mxu0 0.0
          %542 = vmatpush.msra.mxu0 %v522
          %543 = vmatpush.msra.mxu0 %v521
          %544 = vmatpush.msra.mxu0 %v520
          %545 = vmatpush.msra.mxu0 %v519
          %546 = vmatmul.f32.gmra.mxu0 %v528
          %v547 = vpop.f32.mrf.mxu0
          %v548 = vadd.f32 %v525, %v547
          %549 = vdwg.mxu0
          %550 = vst [vmem:[#allocation2] sm:$0xff] %v517
          %551 = vst [vmem:[#allocation3] sm:$0xff] %v548
          %s552 = scalar_lea.vmem %s5, 32
          %v553 = vld [vmem:[%s552] sm:$0xff]
          %v554 = vld [vmem:[%s552 + $0x8] sm:$0xff]
          %v555 = vld [vmem:[%s552 + $0x10] sm:$0xff]
          %v556 = vld [vmem:[%s552 + $0x18] sm:$0xff]
          %s557 = scalar_lea.vmem %s6, 1
          %v558 = vld [vmem:[%s557] sm:$0x1]
          %v560 = vperm.slane %v558, 0
          %562 = vmatpush.msra.mxu0 0.0
          %563 = vmatpush.msra.mxu0 0.0
          %564 = vmatpush.msra.mxu0 0.0
          %565 = vmatpush.msra.mxu0 0.0
          %566 = vmatpush.msra.mxu0 0.0
          %567 = vmatpush.msra.mxu0 0.0
          %568 = vmatpush.msra.mxu0 0.0
          %569 = vmatpush.msra.mxu0 0.0
          %570 = vmatpush.msra.mxu0 0.0
          %571 = vmatpush.msra.mxu0 0.0
          %572 = vmatpush.msra.mxu0 0.0
          %573 = vmatpush.msra.mxu0 0.0
          %574 = vmatpush.msra.mxu0 %v556
          %575 = vmatpush.msra.mxu0 %v555
          %576 = vmatpush.msra.mxu0 %v554
          %577 = vmatpush.msra.mxu0 %v553
          %578 = vmatmul.f32.gmra.mxu0 %v497
          %v579 = vpop.f32.mrf.mxu0
          %v580 = vadd.f32 %v560, %v579
          %581 = vdwg.mxu0
          %s582 = scalar_lea.vmem %s7, 32
          %v583 = vld [vmem:[%s582] sm:$0xff]
          %v584 = vld [vmem:[%s582 + $0x8] sm:$0xff]
          %v585 = vld [vmem:[%s582 + $0x10] sm:$0xff]
          %v586 = vld [vmem:[%s582 + $0x18] sm:$0xff]
          %s587 = scalar_lea.vmem %s8, 1
          %v588 = vld [vmem:[%s587] sm:$0x1]
          %v590 = vperm.slane %v588, 0
          %592 = vmatpush.msra.mxu0 0.0
          %593 = vmatpush.msra.mxu0 0.0
          %594 = vmatpush.msra.mxu0 0.0
          %595 = vmatpush.msra.mxu0 0.0
          %596 = vmatpush.msra.mxu0 0.0
          %597 = vmatpush.msra.mxu0 0.0
          %598 = vmatpush.msra.mxu0 0.0
          %599 = vmatpush.msra.mxu0 0.0
          %600 = vmatpush.msra.mxu0 0.0
          %601 = vmatpush.msra.mxu0 0.0
          %602 = vmatpush.msra.mxu0 0.0
          %603 = vmatpush.msra.mxu0 0.0
          %604 = vmatpush.msra.mxu0 %v586
          %605 = vmatpush.msra.mxu0 %v585
          %606 = vmatpush.msra.mxu0 %v584
          %607 = vmatpush.msra.mxu0 %v583
          %608 = vmatmul.f32.gmra.mxu0 %v528
          %v609 = vpop.f32.mrf.mxu0
          %v610 = vadd.f32 %v590, %v609
          %611 = vdwg.mxu0
          %s612 = scalar_lea.vmem [#allocation2], 8
          %613 = vst [vmem:[%s612] sm:$0xff] %v580
          %s614 = scalar_lea.vmem [#allocation3], 8
          %615 = vst [vmem:[%s614] sm:$0xff] %v610
          %s616 = scalar_lea.vmem %s5, 64
          %v617 = vld [vmem:[%s616] sm:$0xff]
          %v618 = vld [vmem:[%s616 + $0x8] sm:$0xff]
          %v619 = vld [vmem:[%s616 + $0x10] sm:$0xff]
          %v620 = vld [vmem:[%s616 + $0x18] sm:$0xff]
          %s621 = scalar_lea.vmem %s6, 2
          %v622 = vld [vmem:[%s621] sm:$0x1]
          %v624 = vperm.slane %v622, 0
          %626 = vmatpush.msra.mxu0 0.0
          %627 = vmatpush.msra.mxu0 0.0
          %628 = vmatpush.msra.mxu0 0.0
          %629 = vmatpush.msra.mxu0 0.0
          %630 = vmatpush.msra.mxu0 0.0
          %631 = vmatpush.msra.mxu0 0.0
          %632 = vmatpush.msra.mxu0 0.0
          %633 = vmatpush.msra.mxu0 0.0
          %634 = vmatpush.msra.mxu0 0.0
          %635 = vmatpush.msra.mxu0 0.0
          %636 = vmatpush.msra.mxu0 0.0
          %637 = vmatpush.msra.mxu0 0.0
          %638 = vmatpush.msra.mxu0 %v620
          %639 = vmatpush.msra.mxu0 %v619
          %640 = vmatpush.msra.mxu0 %v618
          %641 = vmatpush.msra.mxu0 %v617
          %642 = vmatmul.f32.gmra.mxu0 %v497
          %v643 = vpop.f32.mrf.mxu0
          %v644 = vadd.f32 %v624, %v643
          %645 = vdwg.mxu0
          %s646 = scalar_lea.vmem %s7, 64
          %v647 = vld [vmem:[%s646] sm:$0xff]
          %v648 = vld [vmem:[%s646 + $0x8] sm:$0xff]
          %v649 = vld [vmem:[%s646 + $0x10] sm:$0xff]
          %v650 = vld [vmem:[%s646 + $0x18] sm:$0xff]
          %s651 = scalar_lea.vmem %s8, 2
          %v652 = vld [vmem:[%s651] sm:$0x1]
          %v654 = vperm.slane %v652, 0
          %656 = vmatpush.msra.mxu0 0.0
          %657 = vmatpush.msra.mxu0 0.0
          %658 = vmatpush.msra.mxu0 0.0
          %659 = vmatpush.msra.mxu0 0.0
          %660 = vmatpush.msra.mxu0 0.0
          %661 = vmatpush.msra.mxu0 0.0
          %662 = vmatpush.msra.mxu0 0.0
          %663 = vmatpush.msra.mxu0 0.0
          %664 = vmatpush.msra.mxu0 0.0
          %665 = vmatpush.msra.mxu0 0.0
          %666 = vmatpush.msra.mxu0 0.0
          %667 = vmatpush.msra.mxu0 0.0
          %668 = vmatpush.msra.mxu0 %v650
          %669 = vmatpush.msra.mxu0 %v649
          %670 = vmatpush.msra.mxu0 %v648
          %671 = vmatpush.msra.mxu0 %v647
          %672 = vmatmul.f32.gmra.mxu0 %v528
          %v673 = vpop.f32.mrf.mxu0
          %v674 = vadd.f32 %v654, %v673
          %675 = vdwg.mxu0
          %s676 = scalar_lea.vmem [#allocation2], 16
          %677 = vst [vmem:[%s676] sm:$0xff] %v644
          %s678 = scalar_lea.vmem [#allocation3], 16
          %679 = vst [vmem:[%s678] sm:$0xff] %v674
          %s680 = scalar_lea.vmem %s5, 96
          %v681 = vld [vmem:[%s680] sm:$0xff]
          %v682 = vld [vmem:[%s680 + $0x8] sm:$0xff]
          %v683 = vld [vmem:[%s680 + $0x10] sm:$0xff]
          %v684 = vld [vmem:[%s680 + $0x18] sm:$0xff]
          %s685 = scalar_lea.vmem %s6, 3
          %v686 = vld [vmem:[%s685] sm:$0x1]
          %v688 = vperm.slane %v686, 0
          %690 = vmatpush.msra.mxu0 0.0
          %691 = vmatpush.msra.mxu0 0.0
          %692 = vmatpush.msra.mxu0 0.0
          %693 = vmatpush.msra.mxu0 0.0
          %694 = vmatpush.msra.mxu0 0.0
          %695 = vmatpush.msra.mxu0 0.0
          %696 = vmatpush.msra.mxu0 0.0
          %697 = vmatpush.msra.mxu0 0.0
          %698 = vmatpush.msra.mxu0 0.0
          %699 = vmatpush.msra.mxu0 0.0
          %700 = vmatpush.msra.mxu0 0.0
          %701 = vmatpush.msra.mxu0 0.0
          %702 = vmatpush.msra.mxu0 %v684
          %703 = vmatpush.msra.mxu0 %v683
          %704 = vmatpush.msra.mxu0 %v682
          %705 = vmatpush.msra.mxu0 %v681
          %706 = vmatmul.f32.gmra.mxu0 %v497
          %v707 = vpop.f32.mrf.mxu0
          %v708 = vadd.f32 %v688, %v707
          %709 = vdwg.mxu0
          %s710 = scalar_lea.vmem %s7, 96
          %v711 = vld [vmem:[%s710] sm:$0xff]
          %v712 = vld [vmem:[%s710 + $0x8] sm:$0xff]
          %v713 = vld [vmem:[%s710 + $0x10] sm:$0xff]
          %v714 = vld [vmem:[%s710 + $0x18] sm:$0xff]
          %s715 = scalar_lea.vmem %s8, 3
          %v716 = vld [vmem:[%s715] sm:$0x1]
          %v718 = vperm.slane %v716, 0
          %720 = vmatpush.msra.mxu0 0.0
          %721 = vmatpush.msra.mxu0 0.0
          %722 = vmatpush.msra.mxu0 0.0
          %723 = vmatpush.msra.mxu0 0.0
          %724 = vmatpush.msra.mxu0 0.0
          %725 = vmatpush.msra.mxu0 0.0
          %726 = vmatpush.msra.mxu0 0.0
          %727 = vmatpush.msra.mxu0 0.0
          %728 = vmatpush.msra.mxu0 0.0
          %729 = vmatpush.msra.mxu0 0.0
          %730 = vmatpush.msra.mxu0 0.0
          %731 = vmatpush.msra.mxu0 0.0
          %732 = vmatpush.msra.mxu0 %v714
          %733 = vmatpush.msra.mxu0 %v713
          %734 = vmatpush.msra.mxu0 %v712
          %735 = vmatpush.msra.mxu0 %v711
          %736 = vmatmul.f32.gmra.mxu0 %v528
          %v737 = vpop.f32.mrf.mxu0
          %v738 = vadd.f32 %v718, %v737
          %739 = vdwg.mxu0
          %s740 = scalar_lea.vmem [#allocation2], 24
          %741 = vst [vmem:[%s740] sm:$0xff] %v708
          %s742 = scalar_lea.vmem [#allocation3], 24
          %743 = vst [vmem:[%s742] sm:$0xff] %v738
        $region68: #{tpu_custom_call.1} parent=63 // pred_fallthru
          _
        %v744 = vld [vmem:[%s472] sm:$0xff]
        %vm745 = vcmask 261120
        %746 = vst.msk [vmem:[#allocation4] sm:$0xff] %vm745, 0.0
        %v747 = vld [vmem:[%s3] sm:$0xff]
        %v748 = vld [vmem:[%s3 + $0x8] sm:$0xff]
        %v749 = vld [vmem:[%s3 + $0x10] sm:$0xff]
        %v750 = vld [vmem:[%s3 + $0x18] sm:$0xff]
        %v751 = vld [vmem:[%s4] sm:$0x1]
        %v753 = vperm.slane %v751, 0
        %v756 = vsel %vm745, %v744, 0
        %758 = vmatpush.msra.mxu0 0.0
        %759 = vmatpush.msra.mxu0 0.0
        %760 = vmatpush.msra.mxu0 0.0
        %761 = vmatpush.msra.mxu0 0.0
        %762 = vmatpush.msra.mxu0 0.0
        %763 = vmatpush.msra.mxu0 0.0
        %764 = vmatpush.msra.mxu0 0.0
        %765 = vmatpush.msra.mxu0 0.0
        %766 = vmatpush.msra.mxu0 0.0
        %767 = vmatpush.msra.mxu0 0.0
        %768 = vmatpush.msra.mxu0 0.0
        %769 = vmatpush.msra.mxu0 0.0
        %770 = vmatpush.msra.mxu0 %v750
        %771 = vmatpush.msra.mxu0 %v749
        %772 = vmatpush.msra.mxu0 %v748
        %773 = vmatpush.msra.mxu0 %v747
        %774 = vmatmul.f32.gmra.mxu0 %v756
        %v775 = vpop.f32.mrf.mxu0
        %v776 = vadd.f32 %v753, %v775
        %777 = vdwg.mxu0
        %v778 = vld [vmem:[#allocation2] sm:$0xff]
        %779 = vmatpush.xpose.msra.mxu0 0.0
        %780 = vmatpush.xpose.msra.mxu0 0.0
        %781 = vmatpush.xpose.msra.mxu0 0.0
        %782 = vmatpush.xpose.msra.mxu0 0.0
        %783 = vmatpush.xpose.msra.mxu0 0.0
        %784 = vmatpush.xpose.msra.mxu0 0.0
        %785 = vmatpush.xpose.msra.mxu0 0.0
        %786 = vmatpush.xpose.msra.mxu0 0.0
        %787 = vmatpush.xpose.msra.mxu0 0.0
        %788 = vmatpush.xpose.msra.mxu0 0.0
        %789 = vmatpush.xpose.msra.mxu0 0.0
        %790 = vmatpush.xpose.msra.mxu0 0.0
        %791 = vmatpush.xpose.msra.mxu0 0.0
        %792 = vmatpush.xpose.msra.mxu0 0.0
        %793 = vmatpush.xpose.msra.mxu0 0.0
        %794 = vmatpush.xpose.msra.mxu0 %v778
        %795 = vmatmul.f32.gmra.mxu0 %v776
        %v796 = vpop.f32.mrf.mxu0
        %v797 = vadd.f32 0.0, %v796
        %798 = vdwg.mxu0
        %vm799 = vcmask 64512
        %v800 = vsel %vm799, %v797, -inf
        %801 = vmax.xlane.f32.xlu0 %v800
        %v802 = vpop.xlane.xlu0 %801
        %v803 = vsub.f32 %v797, %v802
        %v804 = vmul.f32 %v803, 1.442695
        %v805 = vpow.pop %v804
        %v806 = vsel %vm799, %v805, 0.0
        %807 = vadd.xlane.f32.xlu0 %v806
        %v808 = vpop.xlane.xlu0 %807
        %v809 = vrcp.pop %v808
        %v810 = vmul.f32 %v808, %v809
        %v811 = vsub.f32 1.0, %v810
        %v812 = vmul.f32 %v809, %v811
        %v813 = vadd.f32 %v809, %v812
        %vm814 = vweird.f32 %v808
        %vm815 = vweird.f32 %v809
        %vm816 = vmor %vm814, %vm815
        %v817 = vsel %vm816, %v809, %v813
        %v818 = vand.u32 2147483647, %v808
        %vm819 = vcmp.eq.f32.partialorder %v818, 8.507059e+37
        %v820 = vand.u32 %v808, 2147483648
        %v821 = vor.u32 1.1754944e-38, %v820
        %v822 = vsel %vm819, %v821, %v817
        %v823 = vmul.f32 %v805, %v822
        %824 = vst.msk [vmem:[%s465] sm:$0xff] %vm799, %v823
        %v825 = vld [vmem:[#allocation3] sm:$0xff]
        %v827 = vsel %vm799, %v823, 0
        %829 = vmatpush.msra.mxu0 0.0
        %830 = vmatpush.msra.mxu0 0.0
        %831 = vmatpush.msra.mxu0 0.0
        %832 = vmatpush.msra.mxu0 0.0
        %833 = vmatpush.msra.mxu0 0.0
        %834 = vmatpush.msra.mxu0 0.0
        %835 = vmatpush.msra.mxu0 0.0
        %836 = vmatpush.msra.mxu0 0.0
        %837 = vmatpush.msra.mxu0 0.0
        %838 = vmatpush.msra.mxu0 0.0
        %839 = vmatpush.msra.mxu0 0.0
        %840 = vmatpush.msra.mxu0 0.0
        %841 = vmatpush.msra.mxu0 0.0
        %842 = vmatpush.msra.mxu0 0.0
        %843 = vmatpush.msra.mxu0 0.0
        %844 = vmatpush.msra.mxu0 %v825
        %845 = vmatmul.f32.gmra.mxu0 %v827
        %v846 = vpop.f32.mrf.mxu0
        %v847 = vadd.f32 0.0, %v846
        %848 = vdwg.mxu0
        %v849 = vld [vmem:[#allocation4] sm:$0xff]
        %v850 = vld [vmem:[%s9] sm:$0xff]
        %v851 = vld [vmem:[%s9 + $0x8] sm:$0xff]
        %v852 = vld [vmem:[%s9 + $0x10] sm:$0xff]
        %v853 = vld [vmem:[%s9 + $0x18] sm:$0xff]
        %v854 = vld [vmem:[%s9 + $0x20] sm:$0xff]
        %v855 = vld [vmem:[%s9 + $0x28] sm:$0xff]
        %v856 = vld [vmem:[%s9 + $0x30] sm:$0xff]
        %v857 = vld [vmem:[%s9 + $0x38] sm:$0xff]
        %v858 = vld [vmem:[%s9 + $0x40] sm:$0xff]
        %v859 = vld [vmem:[%s9 + $0x48] sm:$0xff]
        %v860 = vld [vmem:[%s9 + $0x50] sm:$0xff]
        %v861 = vld [vmem:[%s9 + $0x58] sm:$0xff]
        %v862 = vld [vmem:[%s9 + $0x60] sm:$0xff]
        %v863 = vld [vmem:[%s9 + $0x68] sm:$0xff]
        %v864 = vld [vmem:[%s9 + $0x70] sm:$0xff]
        %v865 = vld [vmem:[%s9 + $0x78] sm:$0xff]
        %866 = vmatpush.msra.mxu0 %v865
        %867 = vmatpush.msra.mxu0 %v864
        %868 = vmatpush.msra.mxu0 %v863
        %869 = vmatpush.msra.mxu0 %v862
        %870 = vmatpush.msra.mxu0 %v861
        %871 = vmatpush.msra.mxu0 %v860
        %872 = vmatpush.msra.mxu0 %v859
        %873 = vmatpush.msra.mxu0 %v858
        %874 = vmatpush.msra.mxu0 %v857
        %875 = vmatpush.msra.mxu0 %v856
        %876 = vmatpush.msra.mxu0 %v855
        %877 = vmatpush.msra.mxu0 %v854
        %878 = vmatpush.msra.mxu0 %v853
        %879 = vmatpush.msra.mxu0 %v852
        %880 = vmatpush.msra.mxu0 %v851
        %881 = vmatpush.msra.mxu0 %v850
        %882 = vmatmul.f32.gmra.mxu0 %v847
        %v883 = vpop.f32.mrf.mxu0
        %v884 = vadd.f32 0.0, %v883
        %885 = vdwg.mxu0
        %v886 = vadd.f32 %v849, %v884
        %887 = vst.msk [vmem:[#allocation4] sm:$0xff] %vm745, %v886
        %s888 = scalar_lea.vmem %s3, 32
        %v889 = vld [vmem:[%s888] sm:$0xff]
        %v890 = vld [vmem:[%s888 + $0x8] sm:$0xff]
        %v891 = vld [vmem:[%s888 + $0x10] sm:$0xff]
        %v892 = vld [vmem:[%s888 + $0x18] sm:$0xff]
        %s893 = scalar_lea.vmem %s4, 1
        %v894 = vld [vmem:[%s893] sm:$0x1]
        %v896 = vperm.slane %v894, 0
        %898 = vmatpush.msra.mxu0 0.0
        %899 = vmatpush.msra.mxu0 0.0
        %900 = vmatpush.msra.mxu0 0.0
        %901 = vmatpush.msra.mxu0 0.0
        %902 = vmatpush.msra.mxu0 0.0
        %903 = vmatpush.msra.mxu0 0.0
        %904 = vmatpush.msra.mxu0 0.0
        %905 = vmatpush.msra.mxu0 0.0
        %906 = vmatpush.msra.mxu0 0.0
        %907 = vmatpush.msra.mxu0 0.0
        %908 = vmatpush.msra.mxu0 0.0
        %909 = vmatpush.msra.mxu0 0.0
        %910 = vmatpush.msra.mxu0 %v892
        %911 = vmatpush.msra.mxu0 %v891
        %912 = vmatpush.msra.mxu0 %v890
        %913 = vmatpush.msra.mxu0 %v889
        %914 = vmatmul.f32.gmra.mxu0 %v756
        %v915 = vpop.f32.mrf.mxu0
        %v916 = vadd.f32 %v896, %v915
        %917 = vdwg.mxu0
        %s918 = scalar_lea.vmem [#allocation2], 8
        %v919 = vld [vmem:[%s918] sm:$0xff]
        %920 = vmatpush.xpose.msra.mxu0 0.0
        %921 = vmatpush.xpose.msra.mxu0 0.0
        %922 = vmatpush.xpose.msra.mxu0 0.0
        %923 = vmatpush.xpose.msra.mxu0 0.0
        %924 = vmatpush.xpose.msra.mxu0 0.0
        %925 = vmatpush.xpose.msra.mxu0 0.0
        %926 = vmatpush.xpose.msra.mxu0 0.0
        %927 = vmatpush.xpose.msra.mxu0 0.0
        %928 = vmatpush.xpose.msra.mxu0 0.0
        %929 = vmatpush.xpose.msra.mxu0 0.0
        %930 = vmatpush.xpose.msra.mxu0 0.0
        %931 = vmatpush.xpose.msra.mxu0 0.0
        %932 = vmatpush.xpose.msra.mxu0 0.0
        %933 = vmatpush.xpose.msra.mxu0 0.0
        %934 = vmatpush.xpose.msra.mxu0 0.0
        %935 = vmatpush.xpose.msra.mxu0 %v919
        %936 = vmatmul.f32.gmra.mxu0 %v916
        %v937 = vpop.f32.mrf.mxu0
        %v938 = vadd.f32 0.0, %v937
        %939 = vdwg.mxu0
        %v940 = vsel %vm799, %v938, -inf
        %941 = vmax.xlane.f32.xlu0 %v940
        %v942 = vpop.xlane.xlu0 %941
        %v943 = vsub.f32 %v938, %v942
        %v944 = vmul.f32 %v943, 1.442695
        %v945 = vpow.pop %v944
        %v946 = vsel %vm799, %v945, 0.0
        %947 = vadd.xlane.f32.xlu0 %v946
        %v948 = vpop.xlane.xlu0 %947
        %v949 = vrcp.pop %v948
        %v950 = vmul.f32 %v948, %v949
        %v951 = vsub.f32 1.0, %v950
        %v952 = vmul.f32 %v949, %v951
        %v953 = vadd.f32 %v949, %v952
        %vm954 = vweird.f32 %v948
        %vm955 = vweird.f32 %v949
        %vm956 = vmor %vm954, %vm955
        %v957 = vsel %vm956, %v949, %v953
        %v958 = vand.u32 2147483647, %v948
        %vm959 = vcmp.eq.f32.partialorder %v958, 8.507059e+37
        %v960 = vand.u32 %v948, 2147483648
        %v961 = vor.u32 1.1754944e-38, %v960
        %v962 = vsel %vm959, %v961, %v957
        %v963 = vmul.f32 %v945, %v962
        %s964 = scalar_lea.vmem %s465, 8 [#allocation7]
        %965 = vst.msk [vmem:[%s964] sm:$0xff] %vm799, %v963
        %s966 = scalar_lea.vmem [#allocation3], 8
        %v967 = vld [vmem:[%s966] sm:$0xff]
        %v969 = vsel %vm799, %v963, 0
        %971 = vmatpush.msra.mxu0 0.0
        %972 = vmatpush.msra.mxu0 0.0
        %973 = vmatpush.msra.mxu0 0.0
        %974 = vmatpush.msra.mxu0 0.0
        %975 = vmatpush.msra.mxu0 0.0
        %976 = vmatpush.msra.mxu0 0.0
        %977 = vmatpush.msra.mxu0 0.0
        %978 = vmatpush.msra.mxu0 0.0
        %979 = vmatpush.msra.mxu0 0.0
        %980 = vmatpush.msra.mxu0 0.0
        %981 = vmatpush.msra.mxu0 0.0
        %982 = vmatpush.msra.mxu0 0.0
        %983 = vmatpush.msra.mxu0 0.0
        %984 = vmatpush.msra.mxu0 0.0
        %985 = vmatpush.msra.mxu0 0.0
        %986 = vmatpush.msra.mxu0 %v967
        %987 = vmatmul.f32.gmra.mxu0 %v969
        %v988 = vpop.f32.mrf.mxu0
        %v989 = vadd.f32 0.0, %v988
        %990 = vdwg.mxu0
        %v991 = vld [vmem:[#allocation4] sm:$0xff]
        %s992 = scalar_lea.vmem %s9, 128
        %v993 = vld [vmem:[%s992] sm:$0xff]
        %v994 = vld [vmem:[%s992 + $0x8] sm:$0xff]
        %v995 = vld [vmem:[%s992 + $0x10] sm:$0xff]
        %v996 = vld [vmem:[%s992 + $0x18] sm:$0xff]
        %v997 = vld [vmem:[%s992 + $0x20] sm:$0xff]
        %v998 = vld [vmem:[%s992 + $0x28] sm:$0xff]
        %v999 = vld [vmem:[%s992 + $0x30] sm:$0xff]
        %v1000 = vld [vmem:[%s992 + $0x38] sm:$0xff]
        %v1001 = vld [vmem:[%s992 + $0x40] sm:$0xff]
        %v1002 = vld [vmem:[%s992 + $0x48] sm:$0xff]
        %v1003 = vld [vmem:[%s992 + $0x50] sm:$0xff]
        %v1004 = vld [vmem:[%s992 + $0x58] sm:$0xff]
        %v1005 = vld [vmem:[%s992 + $0x60] sm:$0xff]
        %v1006 = vld [vmem:[%s992 + $0x68] sm:$0xff]
        %v1007 = vld [vmem:[%s992 + $0x70] sm:$0xff]
        %v1008 = vld [vmem:[%s992 + $0x78] sm:$0xff]
        %1009 = vmatpush.msra.mxu0 %v1008
        %1010 = vmatpush.msra.mxu0 %v1007
        %1011 = vmatpush.msra.mxu0 %v1006
        %1012 = vmatpush.msra.mxu0 %v1005
        %1013 = vmatpush.msra.mxu0 %v1004
        %1014 = vmatpush.msra.mxu0 %v1003
        %1015 = vmatpush.msra.mxu0 %v1002
        %1016 = vmatpush.msra.mxu0 %v1001
        %1017 = vmatpush.msra.mxu0 %v1000
        %1018 = vmatpush.msra.mxu0 %v999
        %1019 = vmatpush.msra.mxu0 %v998
        %1020 = vmatpush.msra.mxu0 %v997
        %1021 = vmatpush.msra.mxu0 %v996
        %1022 = vmatpush.msra.mxu0 %v995
        %1023 = vmatpush.msra.mxu0 %v994
        %1024 = vmatpush.msra.mxu0 %v993
        %1025 = vmatmul.f32.gmra.mxu0 %v989
        %v1026 = vpop.f32.mrf.mxu0
        %v1027 = vadd.f32 0.0, %v1026
        %1028 = vdwg.mxu0
        %v1029 = vadd.f32 %v991, %v1027
        %1030 = vst.msk [vmem:[#allocation4] sm:$0xff] %vm745, %v1029
        %s1031 = scalar_lea.vmem %s3, 64
        %v1032 = vld [vmem:[%s1031] sm:$0xff]
        %v1033 = vld [vmem:[%s1031 + $0x8] sm:$0xff]
        %v1034 = vld [vmem:[%s1031 + $0x10] sm:$0xff]
        %v1035 = vld [vmem:[%s1031 + $0x18] sm:$0xff]
        %s1036 = scalar_lea.vmem %s4, 2
        %v1037 = vld [vmem:[%s1036] sm:$0x1]
        %v1039 = vperm.slane %v1037, 0
        %1041 = vmatpush.msra.mxu0 0.0
        %1042 = vmatpush.msra.mxu0 0.0
        %1043 = vmatpush.msra.mxu0 0.0
        %1044 = vmatpush.msra.mxu0 0.0
        %1045 = vmatpush.msra.mxu0 0.0
        %1046 = vmatpush.msra.mxu0 0.0
        %1047 = vmatpush.msra.mxu0 0.0
        %1048 = vmatpush.msra.mxu0 0.0
        %1049 = vmatpush.msra.mxu0 0.0
        %1050 = vmatpush.msra.mxu0 0.0
        %1051 = vmatpush.msra.mxu0 0.0
        %1052 = vmatpush.msra.mxu0 0.0
        %1053 = vmatpush.msra.mxu0 %v1035
        %1054 = vmatpush.msra.mxu0 %v1034
        %1055 = vmatpush.msra.mxu0 %v1033
        %1056 = vmatpush.msra.mxu0 %v1032
        %1057 = vmatmul.f32.gmra.mxu0 %v756
        %v1058 = vpop.f32.mrf.mxu0
        %v1059 = vadd.f32 %v1039, %v1058
        %1060 = vdwg.mxu0
        %s1061 = scalar_lea.vmem [#allocation2], 16
        %v1062 = vld [vmem:[%s1061] sm:$0xff]
        %1063 = vmatpush.xpose.msra.mxu0 0.0
        %1064 = vmatpush.xpose.msra.mxu0 0.0
        %1065 = vmatpush.xpose.msra.mxu0 0.0
        %1066 = vmatpush.xpose.msra.mxu0 0.0
        %1067 = vmatpush.xpose.msra.mxu0 0.0
        %1068 = vmatpush.xpose.msra.mxu0 0.0
        %1069 = vmatpush.xpose.msra.mxu0 0.0
        %1070 = vmatpush.xpose.msra.mxu0 0.0
        %1071 = vmatpush.xpose.msra.mxu0 0.0
        %1072 = vmatpush.xpose.msra.mxu0 0.0
        %1073 = vmatpush.xpose.msra.mxu0 0.0
        %1074 = vmatpush.xpose.msra.mxu0 0.0
        %1075 = vmatpush.xpose.msra.mxu0 0.0
        %1076 = vmatpush.xpose.msra.mxu0 0.0
        %1077 = vmatpush.xpose.msra.mxu0 0.0
        %1078 = vmatpush.xpose.msra.mxu0 %v1062
        %1079 = vmatmul.f32.gmra.mxu0 %v1059
        %v1080 = vpop.f32.mrf.mxu0
        %v1081 = vadd.f32 0.0, %v1080
        %1082 = vdwg.mxu0
        %v1083 = vsel %vm799, %v1081, -inf
        %1084 = vmax.xlane.f32.xlu0 %v1083
        %v1085 = vpop.xlane.xlu0 %1084
        %v1086 = vsub.f32 %v1081, %v1085
        %v1087 = vmul.f32 %v1086, 1.442695
        %v1088 = vpow.pop %v1087
        %v1089 = vsel %vm799, %v1088, 0.0
        %1090 = vadd.xlane.f32.xlu0 %v1089
        %v1091 = vpop.xlane.xlu0 %1090
        %v1092 = vrcp.pop %v1091
        %v1093 = vmul.f32 %v1091, %v1092
        %v1094 = vsub.f32 1.0, %v1093
        %v1095 = vmul.f32 %v1092, %v1094
        %v1096 = vadd.f32 %v1092, %v1095
        %vm1097 = vweird.f32 %v1091
        %vm1098 = vweird.f32 %v1092
        %vm1099 = vmor %vm1097, %vm1098
        %v1100 = vsel %vm1099, %v1092, %v1096
        %v1101 = vand.u32 2147483647, %v1091
        %vm1102 = vcmp.eq.f32.partialorder %v1101, 8.507059e+37
        %v1103 = vand.u32 %v1091, 2147483648
        %v1104 = vor.u32 1.1754944e-38, %v1103
        %v1105 = vsel %vm1102, %v1104, %v1100
        %v1106 = vmul.f32 %v1088, %v1105
        %s1107 = scalar_lea.vmem %s465, 16 [#allocation7]
        %1108 = vst.msk [vmem:[%s1107] sm:$0xff] %vm799, %v1106
        %s1109 = scalar_lea.vmem [#allocation3], 16
        %v1110 = vld [vmem:[%s1109] sm:$0xff]
        %v1112 = vsel %vm799, %v1106, 0
        %1114 = vmatpush.msra.mxu0 0.0
        %1115 = vmatpush.msra.mxu0 0.0
        %1116 = vmatpush.msra.mxu0 0.0
        %1117 = vmatpush.msra.mxu0 0.0
        %1118 = vmatpush.msra.mxu0 0.0
        %1119 = vmatpush.msra.mxu0 0.0
        %1120 = vmatpush.msra.mxu0 0.0
        %1121 = vmatpush.msra.mxu0 0.0
        %1122 = vmatpush.msra.mxu0 0.0
        %1123 = vmatpush.msra.mxu0 0.0
        %1124 = vmatpush.msra.mxu0 0.0
        %1125 = vmatpush.msra.mxu0 0.0
        %1126 = vmatpush.msra.mxu0 0.0
        %1127 = vmatpush.msra.mxu0 0.0
        %1128 = vmatpush.msra.mxu0 0.0
        %1129 = vmatpush.msra.mxu0 %v1110
        %1130 = vmatmul.f32.gmra.mxu0 %v1112
        %v1131 = vpop.f32.mrf.mxu0
        %v1132 = vadd.f32 0.0, %v1131
        %1133 = vdwg.mxu0
        %v1134 = vld [vmem:[#allocation4] sm:$0xff]
        %s1135 = scalar_lea.vmem %s9, 256
        %v1136 = vld [vmem:[%s1135] sm:$0xff]
        %v1137 = vld [vmem:[%s1135 + $0x8] sm:$0xff]
        %v1138 = vld [vmem:[%s1135 + $0x10] sm:$0xff]
        %v1139 = vld [vmem:[%s1135 + $0x18] sm:$0xff]
        %v1140 = vld [vmem:[%s1135 + $0x20] sm:$0xff]
        %v1141 = vld [vmem:[%s1135 + $0x28] sm:$0xff]
        %v1142 = vld [vmem:[%s1135 + $0x30] sm:$0xff]
        %v1143 = vld [vmem:[%s1135 + $0x38] sm:$0xff]
        %v1144 = vld [vmem:[%s1135 + $0x40] sm:$0xff]
        %v1145 = vld [vmem:[%s1135 + $0x48] sm:$0xff]
        %v1146 = vld [vmem:[%s1135 + $0x50] sm:$0xff]
        %v1147 = vld [vmem:[%s1135 + $0x58] sm:$0xff]
        %v1148 = vld [vmem:[%s1135 + $0x60] sm:$0xff]
        %v1149 = vld [vmem:[%s1135 + $0x68] sm:$0xff]
        %v1150 = vld [vmem:[%s1135 + $0x70] sm:$0xff]
        %v1151 = vld [vmem:[%s1135 + $0x78] sm:$0xff]
        %1152 = vmatpush.msra.mxu0 %v1151
        %1153 = vmatpush.msra.mxu0 %v1150
        %1154 = vmatpush.msra.mxu0 %v1149
        %1155 = vmatpush.msra.mxu0 %v1148
        %1156 = vmatpush.msra.mxu0 %v1147
        %1157 = vmatpush.msra.mxu0 %v1146
        %1158 = vmatpush.msra.mxu0 %v1145
        %1159 = vmatpush.msra.mxu0 %v1144
        %1160 = vmatpush.msra.mxu0 %v1143
        %1161 = vmatpush.msra.mxu0 %v1142
        %1162 = vmatpush.msra.mxu0 %v1141
        %1163 = vmatpush.msra.mxu0 %v1140
        %1164 = vmatpush.msra.mxu0 %v1139
        %1165 = vmatpush.msra.mxu0 %v1138
        %1166 = vmatpush.msra.mxu0 %v1137
        %1167 = vmatpush.msra.mxu0 %v1136
        %1168 = vmatmul.f32.gmra.mxu0 %v1132
        %v1169 = vpop.f32.mrf.mxu0
        %v1170 = vadd.f32 0.0, %v1169
        %1171 = vdwg.mxu0
        %v1172 = vadd.f32 %v1134, %v1170
        %1173 = vst.msk [vmem:[#allocation4] sm:$0xff] %vm745, %v1172
        %s1174 = scalar_lea.vmem %s3, 96
        %v1175 = vld [vmem:[%s1174] sm:$0xff]
        %v1176 = vld [vmem:[%s1174 + $0x8] sm:$0xff]
        %v1177 = vld [vmem:[%s1174 + $0x10] sm:$0xff]
        %v1178 = vld [vmem:[%s1174 + $0x18] sm:$0xff]
        %s1179 = scalar_lea.vmem %s4, 3
        %v1180 = vld [vmem:[%s1179] sm:$0x1]
        %v1182 = vperm.slane %v1180, 0
        %1184 = vmatpush.msra.mxu0 0.0
        %1185 = vmatpush.msra.mxu0 0.0
        %1186 = vmatpush.msra.mxu0 0.0
        %1187 = vmatpush.msra.mxu0 0.0
        %1188 = vmatpush.msra.mxu0 0.0
        %1189 = vmatpush.msra.mxu0 0.0
        %1190 = vmatpush.msra.mxu0 0.0
        %1191 = vmatpush.msra.mxu0 0.0
        %1192 = vmatpush.msra.mxu0 0.0
        %1193 = vmatpush.msra.mxu0 0.0
        %1194 = vmatpush.msra.mxu0 0.0
        %1195 = vmatpush.msra.mxu0 0.0
        %1196 = vmatpush.msra.mxu0 %v1178
        %1197 = vmatpush.msra.mxu0 %v1177
        %1198 = vmatpush.msra.mxu0 %v1176
        %1199 = vmatpush.msra.mxu0 %v1175
        %1200 = vmatmul.f32.gmra.mxu0 %v756
        %v1201 = vpop.f32.mrf.mxu0
        %v1202 = vadd.f32 %v1182, %v1201
        %1203 = vdwg.mxu0
        %s1204 = scalar_lea.vmem [#allocation2], 24
        %v1205 = vld [vmem:[%s1204] sm:$0xff]
        %1206 = vmatpush.xpose.msra.mxu0 0.0
        %1207 = vmatpush.xpose.msra.mxu0 0.0
        %1208 = vmatpush.xpose.msra.mxu0 0.0
        %1209 = vmatpush.xpose.msra.mxu0 0.0
        %1210 = vmatpush.xpose.msra.mxu0 0.0
        %1211 = vmatpush.xpose.msra.mxu0 0.0
        %1212 = vmatpush.xpose.msra.mxu0 0.0
        %1213 = vmatpush.xpose.msra.mxu0 0.0
        %1214 = vmatpush.xpose.msra.mxu0 0.0
        %1215 = vmatpush.xpose.msra.mxu0 0.0
        %1216 = vmatpush.xpose.msra.mxu0 0.0
        %1217 = vmatpush.xpose.msra.mxu0 0.0
        %1218 = vmatpush.xpose.msra.mxu0 0.0
        %1219 = vmatpush.xpose.msra.mxu0 0.0
        %1220 = vmatpush.xpose.msra.mxu0 0.0
        %1221 = vmatpush.xpose.msra.mxu0 %v1205
        %1222 = vmatmul.f32.gmra.mxu0 %v1202
        %v1223 = vpop.f32.mrf.mxu0
        %v1224 = vadd.f32 0.0, %v1223
        %1225 = vdwg.mxu0
        %v1226 = vsel %vm799, %v1224, -inf
        %1227 = vmax.xlane.f32.xlu0 %v1226
        %v1228 = vpop.xlane.xlu0 %1227
        %v1229 = vsub.f32 %v1224, %v1228
        %v1230 = vmul.f32 %v1229, 1.442695
        %v1231 = vpow.pop %v1230
        %v1232 = vsel %vm799, %v1231, 0.0
        %1233 = vadd.xlane.f32.xlu0 %v1232
        %v1234 = vpop.xlane.xlu0 %1233
        %v1235 = vrcp.pop %v1234
        %v1236 = vmul.f32 %v1234, %v1235
        %v1237 = vsub.f32 1.0, %v1236
        %v1238 = vmul.f32 %v1235, %v1237
        %v1239 = vadd.f32 %v1235, %v1238
        %vm1240 = vweird.f32 %v1234
        %vm1241 = vweird.f32 %v1235
        %vm1242 = vmor %vm1240, %vm1241
        %v1243 = vsel %vm1242, %v1235, %v1239
        %v1244 = vand.u32 2147483647, %v1234
        %vm1245 = vcmp.eq.f32.partialorder %v1244, 8.507059e+37
        %v1246 = vand.u32 %v1234, 2147483648
        %v1247 = vor.u32 1.1754944e-38, %v1246
        %v1248 = vsel %vm1245, %v1247, %v1243
        %v1249 = vmul.f32 %v1231, %v1248
        %s1250 = scalar_lea.vmem %s465, 24 [#allocation7]
        %1251 = vst.msk [vmem:[%s1250] sm:$0xff] %vm799, %v1249
        %s1252 = scalar_lea.vmem [#allocation3], 24
        %v1253 = vld [vmem:[%s1252] sm:$0xff]
        %v1255 = vsel %vm799, %v1249, 0
        %1257 = vmatpush.msra.mxu0 0.0
        %1258 = vmatpush.msra.mxu0 0.0
        %1259 = vmatpush.msra.mxu0 0.0
        %1260 = vmatpush.msra.mxu0 0.0
        %1261 = vmatpush.msra.mxu0 0.0
        %1262 = vmatpush.msra.mxu0 0.0
        %1263 = vmatpush.msra.mxu0 0.0
        %1264 = vmatpush.msra.mxu0 0.0
        %1265 = vmatpush.msra.mxu0 0.0
        %1266 = vmatpush.msra.mxu0 0.0
        %1267 = vmatpush.msra.mxu0 0.0
        %1268 = vmatpush.msra.mxu0 0.0
        %1269 = vmatpush.msra.mxu0 0.0
        %1270 = vmatpush.msra.mxu0 0.0
        %1271 = vmatpush.msra.mxu0 0.0
        %1272 = vmatpush.msra.mxu0 %v1253
        %1273 = vmatmul.f32.gmra.mxu0 %v1255
        %v1274 = vpop.f32.mrf.mxu0
        %v1275 = vadd.f32 0.0, %v1274
        %1276 = vdwg.mxu0
        %v1277 = vld [vmem:[#allocation4] sm:$0xff]
        %s1278 = scalar_lea.vmem %s9, 384
        %v1279 = vld [vmem:[%s1278] sm:$0xff]
        %v1280 = vld [vmem:[%s1278 + $0x8] sm:$0xff]
        %v1281 = vld [vmem:[%s1278 + $0x10] sm:$0xff]
        %v1282 = vld [vmem:[%s1278 + $0x18] sm:$0xff]
        %v1283 = vld [vmem:[%s1278 + $0x20] sm:$0xff]
        %v1284 = vld [vmem:[%s1278 + $0x28] sm:$0xff]
        %v1285 = vld [vmem:[%s1278 + $0x30] sm:$0xff]
        %v1286 = vld [vmem:[%s1278 + $0x38] sm:$0xff]
        %v1287 = vld [vmem:[%s1278 + $0x40] sm:$0xff]
        %v1288 = vld [vmem:[%s1278 + $0x48] sm:$0xff]
        %v1289 = vld [vmem:[%s1278 + $0x50] sm:$0xff]
        %v1290 = vld [vmem:[%s1278 + $0x58] sm:$0xff]
        %v1291 = vld [vmem:[%s1278 + $0x60] sm:$0xff]
        %v1292 = vld [vmem:[%s1278 + $0x68] sm:$0xff]
        %v1293 = vld [vmem:[%s1278 + $0x70] sm:$0xff]
        %v1294 = vld [vmem:[%s1278 + $0x78] sm:$0xff]
        %1295 = vmatpush.msra.mxu0 %v1294
        %1296 = vmatpush.msra.mxu0 %v1293
        %1297 = vmatpush.msra.mxu0 %v1292
        %1298 = vmatpush.msra.mxu0 %v1291
        %1299 = vmatpush.msra.mxu0 %v1290
        %1300 = vmatpush.msra.mxu0 %v1289
        %1301 = vmatpush.msra.mxu0 %v1288
        %1302 = vmatpush.msra.mxu0 %v1287
        %1303 = vmatpush.msra.mxu0 %v1286
        %1304 = vmatpush.msra.mxu0 %v1285
        %1305 = vmatpush.msra.mxu0 %v1284
        %1306 = vmatpush.msra.mxu0 %v1283
        %1307 = vmatpush.msra.mxu0 %v1282
        %1308 = vmatpush.msra.mxu0 %v1281
        %1309 = vmatpush.msra.mxu0 %v1280
        %1310 = vmatpush.msra.mxu0 %v1279
        %1311 = vmatmul.f32.gmra.mxu0 %v1275
        %v1312 = vpop.f32.mrf.mxu0
        %v1313 = vadd.f32 0.0, %v1312
        %1314 = vdwg.mxu0
        %v1315 = vadd.f32 %v1277, %v1313
        %1316 = vst.msk [vmem:[#allocation4] sm:$0xff] %vm745, %v1315
        %v1317 = vld [vmem:[#allocation4] sm:$0xff]
        %v1318 = vld [vmem:[%s10] sm:$0x1]
        %v1320 = vperm.slane %v1318, 0
        %v1322 = vadd.f32 %v1317, %v1320
        %1323 = vst.msk [vmem:[%s458] sm:$0xff] %vm745, %v1322
        %s1324 = sand.u32 %s300, 1
        %s1325 = scalar_lea.sflag [#allocation6], %s1324
        %s1326 = sand.u32 %s300, 1
        %s1327 = smul.addr %s1326, 8
        %s1328 = scalar_lea.vmem [#allocation5], %s1327
        %s1329 = sand.u32 %s328, 1
        %s1330 = scalar_lea.sflag [#allocation8], %s1329
        %s1331 = sand.u32 %s328, 1
        %s1332 = smul.addr %s1331, 32
        %s1333 = scalar_lea.vmem [#allocation7], %s1332
        // Predicated region
        $region69: #{tpu_custom_call.1} parent=63 // pred_check
          %p1334 = pneg %p310
        $region70: #{tpu_custom_call.1} parent=63 // pred_check_branch
          %1336 = sbr.rel (%p1334) target = $region72
        $region71: #{tpu_custom_call.1} parent=63 // pred_region
          %1338 = vsyncadd %s1325, 0
          %s1339 = sadd.s32 %s35, %s34
          %s1340 = smul.addr %s1339, 8
          %s1341 = scalar_lea.hbm %s11, %s1340
          %s1343 = sshll.u32 %s1328, 4
          %s1344 = int_to_ptr.vmem [resolvable:$true] %s1343
          %s1345 = sshll.u32 %s1341, 4
          %s1346 = int_to_ptr.hbm [resolvable:$true] %s1345
          %1348 = dma.vmem_to_hbm [thread:$0]  %s1344, 128, %s1346, %s1325
        $region72: #{tpu_custom_call.1} parent=63 // pred_fallthru
          _
        // Predicated region
        $region73: #{tpu_custom_call.1} parent=63 // pred_check
          %p1349 = pneg %p338
        $region74: #{tpu_custom_call.1} parent=63 // pred_check_branch
          %1351 = sbr.rel (%p1349) target = $region76
        $region75: #{tpu_custom_call.1} parent=63 // pred_region
          %1353 = vsyncadd %s1330, 0
          %s1354 = smul.addr %s34, 4
          %s1355 = sadd.s32 %s35, %s1354
          %s1356 = smul.addr %s1355, 8
          %s1357 = scalar_lea.hbm %s12, %s1356
          %s1358 = sshll.u32 %s1333, 4
          %s1359 = int_to_ptr.vmem [resolvable:$true] %s1358
          %s1360 = sshll.u32 %s1357, 4
          %s1361 = int_to_ptr.hbm [resolvable:$true] %s1360
          %1366 = dma.vmem_to_hbm [thread:$0]  %s1359, 512, %s1361, %s1330, 128, 128, 8
        $region76: #{tpu_custom_call.1} parent=63 // pred_fallthru
          _
      $region64: #{tpu_custom_call.1} parent=5 // pred_fallthru
        _
      %p1367 = scmp.le.s32.totalorder 2, %s25
      // Predicated region
      $region77: #{tpu_custom_call.1} parent=5 // pred_check
        %p1368 = pneg %p1367
      $region78: #{tpu_custom_call.1} parent=5 // pred_check_branch
        %1370 = sbr.rel (%p1368) target = $region80
      $region79: #{tpu_custom_call.1} parent=5 // pred_region
        %s1371 = ssub.s32 %s25, 2
        // Predicated region
        $region81: #{tpu_custom_call.1} parent=79 // pred_check
          %p1372 = pneg %p316
        $region82: #{tpu_custom_call.1} parent=79 // pred_check_branch
          %1374 = sbr.rel (%p1372) target = $region84
        $region83: #{tpu_custom_call.1} parent=79 // pred_region
          %s1375 = sand.u32 %s301, 1
          %s1376 = scalar_lea.sflag [#allocation6], %s1375
          %s1377 = sand.u32 %s301, 1
          %s1378 = smul.addr %s1377, 8
          %s1379 = scalar_lea.vmem [#allocation5], %s1378
          %1381 = dma.done %s1376, 128
        $region84: #{tpu_custom_call.1} parent=79 // pred_fallthru
          _
        // Predicated region
        $region85: #{tpu_custom_call.1} parent=79 // pred_check
          %p1382 = pneg %p344
        $region86: #{tpu_custom_call.1} parent=79 // pred_check_branch
          %1384 = sbr.rel (%p1382) target = $region88
        $region87: #{tpu_custom_call.1} parent=79 // pred_region
          %s1385 = sand.u32 %s329, 1
          %s1386 = scalar_lea.sflag [#allocation8], %s1385
          %s1387 = sand.u32 %s329, 1
          %s1388 = smul.addr %s1387, 32
          %s1389 = scalar_lea.vmem [#allocation7], %s1388
          %1391 = dma.done %s1386, 512
        $region88: #{tpu_custom_call.1} parent=79 // pred_fallthru
          _
      $region80: #{tpu_custom_call.1} parent=5 // pred_fallthru
        _
    $region6: #{tpu_custom_call.1} parent=1 // loop_footer
      %s29 = sadd.s32 1, %s25
    $region7: #{tpu_custom_call.1} parent=1 // loop_footer_branch
      %24 = sbr.rel target = $region3
    $region8: #{tpu_custom_call.1} parent=1 // loop_exit
      _
    %1392 = vsyncpa [#allocation6], 1
    %s1393 = scalar_lea.sflag [#allocation6], 1
    %1394 = vsyncpa %s1393, 1
    %1395 = vsyncpa [#allocation8], 1
    %s1396 = scalar_lea.sflag [#allocation8], 1
    %1397 = vsyncpa %s1396, 1

</llo_original>
